<compile_context>
chip_gen: v6e
topology: v6e:2x2x1
jax: 0.10.0
libtpu: 0.0.40
codegen_flags: <defaults>
</compile_context>

<pallas_src>
import math
import functools

import jax
import jax.numpy as jnp
from jax.experimental import pallas as pl
from jax.experimental.pallas import tpu as pltpu


def _layer_norm(x, w, b, eps=1e-5):
    mu = jnp.mean(x, axis=-1, keepdims=True)
    xc = x - mu
    var = jnp.mean(xc * xc, axis=-1, keepdims=True)
    return xc * jax.lax.rsqrt(var + eps) * w + b


# ----------------------------------------------------------------------------
# Fused TextEncoder kernel. One grid step == one transformer layer.
# The residual stream [B*S, D] lives in VMEM scratch across grid steps.
# ----------------------------------------------------------------------------
def _text_encoder_kernel(
    x0_ref, pos_ref, sel_ref,
    ln1_w_ref, ln1_b_ref, wqkv_ref, bqkv_ref, wout_ref, bout_ref,
    ln2_w_ref, ln2_b_ref, wfc_ref, bfc_ref, wproj_ref, bproj_ref,
    lnf_w_ref, lnf_b_ref, wtp_ref,
    o_ref,
    x_scr,
    *, num_heads, head_size, batch, seq,
):
    layer = pl.program_id(0)
    d_model = num_heads * head_size
    scale = 1.0 / math.sqrt(head_size)

    # Fused "prompts + positional_embedding" at layer 0 (stays in VMEM).
    @pl.when(layer == 0)
    def _():
        x_scr[...] = x0_ref[...].astype(jnp.float32) + pos_ref[...].astype(jnp.float32)

    x = x_scr[...]                                            # [M, D], M = B*S

    # ---- attention sub-block:  x = x + out_proj(MHA(ln_1(x))) -------------
    h = _layer_norm(x, ln1_w_ref[0], ln1_b_ref[0])
    qkv = jnp.dot(h, wqkv_ref[0], preferred_element_type=jnp.float32) + bqkv_ref[0]

    # Fold 1/sqrt(Dh) into q: touches M*D elements instead of S*S per head.
    q_all = qkv[:, 0:d_model] * scale
    k_all = qkv[:, d_model:2 * d_model]
    v_all = qkv[:, 2 * d_model:3 * d_model]

    # Causal mask (CLIP text transformer).
    row = jax.lax.broadcasted_iota(jnp.int32, (seq, seq), 0)
    col = jax.lax.broadcasted_iota(jnp.int32, (seq, seq), 1)
    neg = jnp.where(col > row, jnp.float32(-1e30), jnp.float32(0.0))

    # All (batch, head) pairs handled inside this single grid step (statically
    # unrolled — no per-(b,h) grid/launch overhead, no DMA per head).
    ctx_rows = []
    for b in range(batch):
        r0, r1 = b * seq, (b + 1) * seq
        head_ctx = []
        for hh in range(num_heads):
            c0, c1 = hh * head_size, (hh + 1) * head_size
            q = q_all[r0:r1, c0:c1]
            k = k_all[r0:r1, c0:c1]
            v = v_all[r0:r1, c0:c1]
            # q @ k^T without materializing a transposed copy of k.
            s = jax.lax.dot_general(q, k, (((1,), (1,)), ((), ())),
                                    preferred_element_type=jnp.float32) + neg
            m = jnp.max(s, axis=-1, keepdims=True)
            e = jnp.exp(s - m)
            p = e * pl.reciprocal(jnp.sum(e, axis=-1, keepdims=True), approx=True)
            head_ctx.append(jnp.dot(p, v, preferred_element_type=jnp.float32))
        ctx_rows.append(jnp.concatenate(head_ctx, axis=-1))
    ctx = jnp.concatenate(ctx_rows, axis=0)                   # [M, D]

    x = x + jnp.dot(ctx, wout_ref[0], preferred_element_type=jnp.float32) + bout_ref[0]

    # ---- MLP sub-block:  x = x + proj(quick_gelu(fc(ln_2(x)))) ------------
    h2 = _layer_norm(x, ln2_w_ref[0], ln2_b_ref[0])
    ff = jnp.dot(h2, wfc_ref[0], preferred_element_type=jnp.float32) + bfc_ref[0]
    ff = ff * jax.nn.sigmoid(1.702 * ff)                      # CLIP QuickGELU
    x = x + jnp.dot(ff, wproj_ref[0], preferred_element_type=jnp.float32) + bproj_ref[0]

    x_scr[...] = x

    # ---- finalize: ln_final, EOT pooling, text projection ------------------
    @pl.when(layer == pl.num_programs(0) - 1)
    def _():
        xf = _layer_norm(x, lnf_w_ref[...], lnf_b_ref[...])               # [M, D]
        pooled = jnp.dot(sel_ref[...], xf, preferred_element_type=jnp.float32)  # [B, D]
        o_ref[...] = jnp.dot(pooled, wtp_ref[...],
                             preferred_element_type=jnp.float32).astype(o_ref.dtype)


# ----------------------------------------------------------------------------
# Wrapper: one pallas_call for the whole TextEncoder forward.
# ----------------------------------------------------------------------------
def text_encoder_forward(params, prompts, tokenized_prompts, *, num_heads):
    B, S, D = prompts.shape
    H = num_heads
    Dh = D // H
    L = params["w_qkv"].shape[0]
    Dm = params["w_fc"].shape[2]
    P = params["w_tproj"].shape[1]
    M = B * S

    x0 = prompts.reshape(M, D)
    posb = jnp.broadcast_to(params["pos"][None], (B, S, D)).reshape(M, D)

    # EOT pooling (x[arange(B), argmax]) as a [B, M] one-hot selection matrix,
    # contracted on the MXU inside the kernel.
    eot = jnp.argmax(tokenized_prompts, axis=-1)                          # [B]
    sel = jax.nn.one_hot(jnp.arange(B) * S + eot, M, dtype=jnp.float32)   # [B, M]

    kernel = functools.partial(
        _text_encoder_kernel, num_heads=H, head_size=Dh, batch=B, seq=S)

    flops = (L * (2 * M * D * 3 * D            # fused QKV projection
                  + B * H * 4 * S * S * Dh     # QK^T and PV
                  + 2 * M * D * D              # attention out projection
                  + 2 * 2 * M * D * Dm)        # MLP fc + proj
             + 2 * B * M * D + 2 * B * D * P)  # EOT pooling + text projection
    transcendentals = L * (B * H * S * S + M * Dm + B * H * S + 2 * M) + M
    bytes_accessed = 4 * (x0.size + posb.size + sel.size + B * P
                          + sum(int(params[k].size) for k in (
                              "ln1_w", "ln1_b", "w_qkv", "b_qkv", "w_out", "b_out",
                              "ln2_w", "ln2_b", "w_fc", "b_fc", "w_proj", "b_proj",
                              "lnf_w", "lnf_b", "w_tproj")))

    per_layer = lambda l: (l, 0, 0)
    const2d = lambda l: (0, 0)

    return pl.pallas_call(
        kernel,
        out_shape=jax.ShapeDtypeStruct((B, P), jnp.float32),
        grid=(L,),
        in_specs=[
            pl.BlockSpec((M, D), const2d),             # prompts (flattened)
            pl.BlockSpec((M, D), const2d),             # positional embedding (broadcast)
            pl.BlockSpec((B, M), const2d),             # EOT one-hot selection
            pl.BlockSpec((1, 1, D), per_layer),        # ln_1 weight
            pl.BlockSpec((1, 1, D), per_layer),        # ln_1 bias
            pl.BlockSpec((1, D, 3 * D), per_layer),    # fused QKV weight
            pl.BlockSpec((1, 1, 3 * D), per_layer),    # fused QKV bias
            pl.BlockSpec((1, D, D), per_layer),        # attn out weight
            pl.BlockSpec((1, 1, D), per_layer),        # attn out bias
            pl.BlockSpec((1, 1, D), per_layer),        # ln_2 weight
            pl.BlockSpec((1, 1, D), per_layer),        # ln_2 bias
            pl.BlockSpec((1, D, Dm), per_layer),       # mlp fc weight
            pl.BlockSpec((1, 1, Dm), per_layer),       # mlp fc bias
            pl.BlockSpec((1, Dm, D), per_layer),       # mlp proj weight
            pl.BlockSpec((1, 1, D), per_layer),        # mlp proj bias
            pl.BlockSpec((1, D), const2d),             # ln_final weight
            pl.BlockSpec((1, D), const2d),             # ln_final bias
            pl.BlockSpec((D, P), const2d),             # text_projection
        ],
        out_specs=pl.BlockSpec((B, P), const2d),
        scratch_shapes=[pltpu.VMEM((M, D), jnp.float32)],   # resident residual stream
        compiler_params=pltpu.CompilerParams(
            dimension_semantics=("arbitrary",)),             # layers are sequential
        cost_estimate=pl.CostEstimate(
            flops=int(flops), transcendentals=int(transcendentals),
            bytes_accessed=int(bytes_accessed)),
    )(x0, posb, sel,
      params["ln1_w"], params["ln1_b"], params["w_qkv"], params["b_qkv"],
      params["w_out"], params["b_out"], params["ln2_w"], params["ln2_b"],
      params["w_fc"], params["b_fc"], params["w_proj"], params["b_proj"],
      params["lnf_w"], params["lnf_b"], params["w_tproj"])


# ----------------------------------------------------------------------------
# Parameter init (small CLIP-like text transformer, weights stored feature-last)
# ----------------------------------------------------------------------------
def init_params(key, *, depth, d_model, d_mlp, embed_dim, ctx_len):
    L, D, Dm, P, S = depth, d_model, d_mlp, embed_dim, ctx_len
    keys = jax.random.split(key, 16)

    def u(k, shape, fan_in):
        bound = 1.0 / math.sqrt(fan_in)
        return jax.random.uniform(k, shape, jnp.float32, -bound, bound)

    return dict(
        pos=0.01 * jax.random.normal(keys[0], (S, D), jnp.float32),
        ln1_w=1.0 + 0.02 * jax.random.normal(keys[1], (L, 1, D), jnp.float32),
        ln1_b=0.02 * jax.random.normal(keys[2], (L, 1, D), jnp.float32),
        w_qkv=u(keys[3], (L, D, 3 * D), D),
        b_qkv=u(keys[4], (L, 1, 3 * D), D),
        w_out=u(keys[5], (L, D, D), D),
        b_out=u(keys[6], (L, 1, D), D),
        ln2_w=1.0 + 0.02 * jax.random.normal(keys[7], (L, 1, D), jnp.float32),
        ln2_b=0.02 * jax.random.normal(keys[8], (L, 1, D), jnp.float32),
        w_fc=u(keys[9], (L, D, Dm), D),
        b_fc=u(keys[10], (L, 1, Dm), D),
        w_proj=u(keys[11], (L, Dm, D), Dm),
        b_proj=u(keys[12], (L, 1, D), Dm),
        lnf_w=1.0 + 0.02 * jax.random.normal(keys[13], (1, D), jnp.float32),
        lnf_b=0.02 * jax.random.normal(keys[14], (1, D), jnp.float32),
        w_tproj=(D ** -0.5) * jax.random.normal(keys[15], (D, P), jnp.float32),
    )


# ----------------------------------------------------------------------------
# Pure-JAX reference (same math, unfused) for correctness checking.
# ----------------------------------------------------------------------------
def reference_forward(params, prompts, tokenized_prompts, *, num_heads):
    B, S, D = prompts.shape
    H = num_heads
    Dh = D // H
    L = params["w_qkv"].shape[0]
    x = prompts + params["pos"][None]
    mask = jnp.where(jnp.triu(jnp.ones((S, S), bool), k=1), -1e30, 0.0).astype(jnp.float32)
    for l in range(L):
        h = _layer_norm(x, params["ln1_w"][l, 0], params["ln1_b"][l, 0])
        qkv = h @ params["w_qkv"][l] + params["b_qkv"][l, 0]
        q, k, v = jnp.split(qkv, 3, axis=-1)

        def split_heads(t):
            return t.reshape(B, S, H, Dh).transpose(0, 2, 1, 3)

        q, k, v = split_heads(q), split_heads(k), split_heads(v)
        s = jnp.einsum("bhqd,bhkd->bhqk", q, k) / math.sqrt(Dh) + mask
        p = jax.nn.softmax(s, axis=-1)
        ctx = jnp.einsum("bhqk,bhkd->bhqd", p, v).transpose(0, 2, 1, 3).reshape(B, S, D)
        x = x + ctx @ params["w_out"][l] + params["b_out"][l, 0]
        h2 = _layer_norm(x, params["ln2_w"][l, 0], params["ln2_b"][l, 0])
        ff = h2 @ params["w_fc"][l] + params["b_fc"][l, 0]
        ff = ff * jax.nn.sigmoid(1.702 * ff)
        x = x + ff @ params["w_proj"][l] + params["b_proj"][l, 0]
    x = _layer_norm(x, params["lnf_w"][0], params["lnf_b"][0])
    eot = jnp.argmax(tokenized_prompts, axis=-1)
    pooled = x[jnp.arange(B), eot]
    return pooled @ params["w_tproj"]


if __name__ == "__main__":
    # Small CLIP-like text-encoder config.
    depth = 2            # transformer layers
    d_model = 32         # transformer width
    num_heads = 4
    d_mlp = 4 * d_model  # 128 -> lane-dense MLP hidden
    embed_dim = 32       # text_projection output dim
    batch = 2
    ctx_len = 8          # sequence length

    key = jax.random.PRNGKey(0)
    kp, kx, kt = jax.random.split(key, 3)
    params = init_params(kp, depth=depth, d_model=d_model, d_mlp=d_mlp,
                         embed_dim=embed_dim, ctx_len=ctx_len)

    prompts = jax.random.normal(kx, (batch, ctx_len, d_model), jnp.float32)
    # Token ids with the EOT (largest id) at fixed positions -> argmax pooling.
    tokenized_prompts = jax.random.randint(kt, (batch, ctx_len), 1, 100)
    tokenized_prompts = tokenized_prompts.at[jnp.arange(batch),
                                             jnp.array([5, 7])].set(49407)

    out = text_encoder_forward(params, prompts, tokenized_prompts,
                               num_heads=num_heads)
    out = jax.block_until_ready(out)
    assert out.shape == (batch, embed_dim), out.shape

    expected = reference_forward(params, prompts, tokenized_prompts,
                                 num_heads=num_heads)
    # Tolerance widened slightly for the approx (EUP) reciprocal in softmax.
    assert jnp.allclose(out, expected, atol=1e-2, rtol=1e-2), (
        float(jnp.max(jnp.abs(out - expected))))

    print("KERNEL_OK")
</pallas_src>

<mosaic_0001>
module attributes {stable_mosaic.version = 11 : i64} {
  func.func @_text_encoder_kernel(%arg0: i32, %arg1: memref<16x32xf32, #tpu.memory_space<vmem>>, %arg2: memref<16x32xf32, #tpu.memory_space<vmem>>, %arg3: memref<2x16xf32, #tpu.memory_space<vmem>>, %arg4: memref<1x1x32xf32, #tpu.memory_space<vmem>>, %arg5: memref<1x1x32xf32, #tpu.memory_space<vmem>>, %arg6: memref<1x32x96xf32, #tpu.memory_space<vmem>>, %arg7: memref<1x1x96xf32, #tpu.memory_space<vmem>>, %arg8: memref<1x32x32xf32, #tpu.memory_space<vmem>>, %arg9: memref<1x1x32xf32, #tpu.memory_space<vmem>>, %arg10: memref<1x1x32xf32, #tpu.memory_space<vmem>>, %arg11: memref<1x1x32xf32, #tpu.memory_space<vmem>>, %arg12: memref<1x32x128xf32, #tpu.memory_space<vmem>>, %arg13: memref<1x1x128xf32, #tpu.memory_space<vmem>>, %arg14: memref<1x128x32xf32, #tpu.memory_space<vmem>>, %arg15: memref<1x1x32xf32, #tpu.memory_space<vmem>>, %arg16: memref<1x32xf32, #tpu.memory_space<vmem>>, %arg17: memref<1x32xf32, #tpu.memory_space<vmem>>, %arg18: memref<32x32xf32, #tpu.memory_space<vmem>>, %arg19: memref<2x32xf32, #tpu.memory_space<vmem>>, %arg20: memref<16x32xf32, #tpu.memory_space<vmem>>) attributes {dimension_semantics = [#tpu.dimension_semantics<arbitrary>], iteration_bounds = array<i64: 2>, scalar_prefetch = 0 : i64, scratch_operands = 1 : i64, tpu.core_type = #tpu.core_type<tc>, window_params = [{pipeline_mode = #tpu.pipeline_mode<synchronous>, transform_indices = @transform_0, window_bounds = array<i64: 16, 32>}, {pipeline_mode = #tpu.pipeline_mode<synchronous>, transform_indices = @transform_1, window_bounds = array<i64: 16, 32>}, {pipeline_mode = #tpu.pipeline_mode<synchronous>, transform_indices = @transform_2, window_bounds = array<i64: 2, 16>}, {transform_indices = @transform_3, window_bounds = array<i64: 1, 1, 32>}, {transform_indices = @transform_4, window_bounds = array<i64: 1, 1, 32>}, {transform_indices = @transform_5, window_bounds = array<i64: 1, 32, 96>}, {transform_indices = @transform_6, window_bounds = array<i64: 1, 1, 96>}, {transform_indices = @transform_7, window_bounds = array<i64: 1, 32, 32>}, {transform_indices = @transform_8, window_bounds = array<i64: 1, 1, 32>}, {transform_indices = @transform_9, window_bounds = array<i64: 1, 1, 32>}, {transform_indices = @transform_10, window_bounds = array<i64: 1, 1, 32>}, {transform_indices = @transform_11, window_bounds = array<i64: 1, 32, 128>}, {transform_indices = @transform_12, window_bounds = array<i64: 1, 1, 128>}, {transform_indices = @transform_13, window_bounds = array<i64: 1, 128, 32>}, {transform_indices = @transform_14, window_bounds = array<i64: 1, 1, 32>}, {pipeline_mode = #tpu.pipeline_mode<synchronous>, transform_indices = @transform_15, window_bounds = array<i64: 1, 32>}, {pipeline_mode = #tpu.pipeline_mode<synchronous>, transform_indices = @transform_16, window_bounds = array<i64: 1, 32>}, {pipeline_mode = #tpu.pipeline_mode<synchronous>, transform_indices = @transform_17, window_bounds = array<i64: 32, 32>}, {pipeline_mode = #tpu.pipeline_mode<synchronous>, transform_indices = @transform_18, window_bounds = array<i64: 2, 32>}]} {
    %c0_i32 = arith.constant 0 : i32
    %0 = arith.cmpi eq, %arg0, %c0_i32 : i32
    %1 = arith.extui %0 : i1 to i32
    %c0_i32_0 = arith.constant 0 : i32
    %2 = arith.cmpi ne, %1, %c0_i32_0 : i32
    scf.if %2 {
      %c0_91 = arith.constant 0 : index
      %c0_92 = arith.constant 0 : index
      %236 = vector.load %arg1[%c0_91, %c0_92] : memref<16x32xf32, #tpu.memory_space<vmem>>, vector<16x32xf32>
      %c0_93 = arith.constant 0 : index
      %c0_94 = arith.constant 0 : index
      %237 = vector.load %arg2[%c0_93, %c0_94] : memref<16x32xf32, #tpu.memory_space<vmem>>, vector<16x32xf32>
      %238 = arith.addf %236, %237 : vector<16x32xf32>
      %c0_95 = arith.constant 0 : index
      %c0_96 = arith.constant 0 : index
      %239 = vector.load %arg20[%c0_95, %c0_96] : memref<16x32xf32, #tpu.memory_space<vmem>>, vector<16x32xf32>
      tpu.vector_store %arg20[%c0_95, %c0_96], %238 {strides = array<i32>} : memref<16x32xf32, #tpu.memory_space<vmem>>, vector<16x32xf32>,
    } else {
    }
    %c0 = arith.constant 0 : index
    %c0_1 = arith.constant 0 : index
    %3 = vector.load %arg20[%c0, %c0_1] : memref<16x32xf32, #tpu.memory_space<vmem>>, vector<16x32xf32>
    %c0_2 = arith.constant 0 : index
    %c0_3 = arith.constant 0 : index
    %c0_4 = arith.constant 0 : index
    %4 = vector.load %arg4[%c0_2, %c0_3, %c0_4] : memref<1x1x32xf32, #tpu.memory_space<vmem>>, vector<1x1x32xf32>
    %5 = vector.shape_cast %4 : vector<1x1x32xf32> to vector<1x32xf32>
    %c0_5 = arith.constant 0 : index
    %c0_6 = arith.constant 0 : index
    %c0_7 = arith.constant 0 : index
    %6 = vector.load %arg5[%c0_5, %c0_6, %c0_7] : memref<1x1x32xf32, #tpu.memory_space<vmem>>, vector<1x1x32xf32>
    %7 = vector.shape_cast %6 : vector<1x1x32xf32> to vector<1x32xf32>
    %cst = arith.constant dense<0.000000e+00> : vector<16xf32>
    %8 = vector.multi_reduction <add>, %3, %cst [1] : vector<16x32xf32> to vector<16xf32>
    %9 = vector.shape_cast %8 : vector<16xf32> to vector<16x1xf32>
    %cst_8 = arith.constant 3.200000e+01 : f32
    %10 = vector.broadcast %cst_8 : f32 to vector<16x1xf32>
    %11 = arith.divf %9, %10 : vector<16x1xf32>
    %12 = vector.broadcast %11 : vector<16x1xf32> to vector<16x32xf32>
    %13 = arith.subf %3, %12 : vector<16x32xf32>
    %14 = arith.mulf %13, %13 : vector<16x32xf32>
    %cst_9 = arith.constant dense<0.000000e+00> : vector<16xf32>
    %15 = vector.multi_reduction <add>, %14, %cst_9 [1] : vector<16x32xf32> to vector<16xf32>
    %16 = vector.shape_cast %15 : vector<16xf32> to vector<16x1xf32>
    %cst_10 = arith.constant 3.200000e+01 : f32
    %17 = vector.broadcast %cst_10 : f32 to vector<16x1xf32>
    %18 = arith.divf %16, %17 : vector<16x1xf32>
    %cst_11 = arith.constant 9.99999974E-6 : f32
    %19 = vector.broadcast %cst_11 : f32 to vector<16x1xf32>
    %20 = arith.addf %18, %19 : vector<16x1xf32>
    %21 = math.rsqrt %20 : vector<16x1xf32>
    %22 = vector.broadcast %21 : vector<16x1xf32> to vector<16x32xf32>
    %23 = arith.mulf %13, %22 : vector<16x32xf32>
    %24 = vector.broadcast %5 : vector<1x32xf32> to vector<16x32xf32>
    %25 = arith.mulf %23, %24 : vector<16x32xf32>
    %26 = vector.broadcast %7 : vector<1x32xf32> to vector<16x32xf32>
    %27 = arith.addf %25, %26 : vector<16x32xf32>
    %c0_12 = arith.constant 0 : index
    %c0_13 = arith.constant 0 : index
    %c0_14 = arith.constant 0 : index
    %28 = vector.load %arg6[%c0_12, %c0_13, %c0_14] : memref<1x32x96xf32, #tpu.memory_space<vmem>>, vector<1x32x96xf32>
    %29 = vector.shape_cast %28 : vector<1x32x96xf32> to vector<32x96xf32>
    %cst_15 = arith.constant dense<0.000000e+00> : vector<16x96xf32>
    %30 = tpu.matmul %27, %29, %cst_15 {dimension_numbers = #tpu.dot_dimension_numbers<[1], [0], [0], [1], [0, 0, 1, 1], [], []>} : vector<16x32xf32>, vector<32x96xf32>, vector<16x96xf32> -> vector<16x96xf32>
    %c0_16 = arith.constant 0 : index
    %c0_17 = arith.constant 0 : index
    %c0_18 = arith.constant 0 : index
    %31 = vector.load %arg7[%c0_16, %c0_17, %c0_18] : memref<1x1x96xf32, #tpu.memory_space<vmem>>, vector<1x1x96xf32>
    %32 = vector.shape_cast %31 : vector<1x1x96xf32> to vector<1x96xf32>
    %33 = vector.broadcast %32 : vector<1x96xf32> to vector<16x96xf32>
    %34 = arith.addf %30, %33 : vector<16x96xf32>
    %35 = vector.extract_strided_slice %34 {offsets = [0, 0], sizes = [16, 32], strides = [1, 1]} : vector<16x96xf32> to vector<16x32xf32>
    %cst_19 = arith.constant 0.353553385 : f32
    %36 = vector.broadcast %cst_19 : f32 to vector<16x32xf32>
    %37 = arith.mulf %35, %36 : vector<16x32xf32>
    %38 = vector.extract_strided_slice %34 {offsets = [0, 32], sizes = [16, 32], strides = [1, 1]} : vector<16x96xf32> to vector<16x32xf32>
    %39 = vector.extract_strided_slice %34 {offsets = [0, 64], sizes = [16, 32], strides = [1, 1]} : vector<16x96xf32> to vector<16x32xf32>
    %40 = tpu.iota {dimensions = array<i32: 0>} : vector<8x8xi32>
    %41 = tpu.iota {dimensions = array<i32: 1>} : vector<8x8xi32>
    %42 = arith.cmpi sgt, %41, %40 : vector<8x8xi32>
    %cst_20 = arith.constant -1.000000e+30 : f32
    %cst_21 = arith.constant 0.000000e+00 : f32
    %43 = vector.broadcast %cst_20 : f32 to vector<8x8xf32>
    %44 = vector.broadcast %cst_21 : f32 to vector<8x8xf32>
    %45 = arith.select %42, %43, %44 : vector<8x8xi1>, vector<8x8xf32>
    %46 = vector.extract_strided_slice %37 {offsets = [0, 0], sizes = [8, 8], strides = [1, 1]} : vector<16x32xf32> to vector<8x8xf32>
    %47 = vector.extract_strided_slice %38 {offsets = [0, 0], sizes = [8, 8], strides = [1, 1]} : vector<16x32xf32> to vector<8x8xf32>
    %48 = vector.extract_strided_slice %39 {offsets = [0, 0], sizes = [8, 8], strides = [1, 1]} : vector<16x32xf32> to vector<8x8xf32>
    %cst_22 = arith.constant dense<0.000000e+00> : vector<8x8xf32>
    %49 = tpu.matmul %46, %47, %cst_22 {dimension_numbers = #tpu.dot_dimension_numbers<[1], [1], [0], [0], [0, 0, 1, 0], [], []>} : vector<8x8xf32>, vector<8x8xf32>, vector<8x8xf32> -> vector<8x8xf32>
    %50 = arith.addf %49, %45 : vector<8x8xf32>
    %cst_23 = arith.constant dense<0xFF800000> : vector<8xf32>
    %51 = vector.multi_reduction <maximumf>, %50, %cst_23 [1] : vector<8x8xf32> to vector<8xf32>
    %52 = vector.shape_cast %51 : vector<8xf32> to vector<8x1xf32>
    %53 = vector.broadcast %52 : vector<8x1xf32> to vector<8x8xf32>
    %54 = arith.subf %50, %53 : vector<8x8xf32>
    %55 = math.exp %54 : vector<8x8xf32>
    %cst_24 = arith.constant dense<0.000000e+00> : vector<8xf32>
    %56 = vector.multi_reduction <add>, %55, %cst_24 [1] : vector<8x8xf32> to vector<8xf32>
    %57 = vector.shape_cast %56 : vector<8xf32> to vector<8x1xf32>
    %58 = tpu.reciprocal %57 {approx = true} : vector<8x1xf32> -> vector<8x1xf32>
    %59 = vector.broadcast %58 : vector<8x1xf32> to vector<8x8xf32>
    %60 = arith.mulf %55, %59 : vector<8x8xf32>
    %cst_25 = arith.constant dense<0.000000e+00> : vector<8x8xf32>
    %61 = tpu.matmul %60, %48, %cst_25 {dimension_numbers = #tpu.dot_dimension_numbers<[1], [0], [0], [1], [0, 0, 1, 1], [], []>} : vector<8x8xf32>, vector<8x8xf32>, vector<8x8xf32> -> vector<8x8xf32>
    %62 = vector.extract_strided_slice %37 {offsets = [0, 8], sizes = [8, 8], strides = [1, 1]} : vector<16x32xf32> to vector<8x8xf32>
    %63 = vector.extract_strided_slice %38 {offsets = [0, 8], sizes = [8, 8], strides = [1, 1]} : vector<16x32xf32> to vector<8x8xf32>
    %64 = vector.extract_strided_slice %39 {offsets = [0, 8], sizes = [8, 8], strides = [1, 1]} : vector<16x32xf32> to vector<8x8xf32>
    %cst_26 = arith.constant dense<0.000000e+00> : vector<8x8xf32>
    %65 = tpu.matmul %62, %63, %cst_26 {dimension_numbers = #tpu.dot_dimension_numbers<[1], [1], [0], [0], [0, 0, 1, 0], [], []>} : vector<8x8xf32>, vector<8x8xf32>, vector<8x8xf32> -> vector<8x8xf32>
    %66 = arith.addf %65, %45 : vector<8x8xf32>
    %cst_27 = arith.constant dense<0xFF800000> : vector<8xf32>
    %67 = vector.multi_reduction <maximumf>, %66, %cst_27 [1] : vector<8x8xf32> to vector<8xf32>
    %68 = vector.shape_cast %67 : vector<8xf32> to vector<8x1xf32>
    %69 = vector.broadcast %68 : vector<8x1xf32> to vector<8x8xf32>
    %70 = arith.subf %66, %69 : vector<8x8xf32>
    %71 = math.exp %70 : vector<8x8xf32>
    %cst_28 = arith.constant dense<0.000000e+00> : vector<8xf32>
    %72 = vector.multi_reduction <add>, %71, %cst_28 [1] : vector<8x8xf32> to vector<8xf32>
    %73 = vector.shape_cast %72 : vector<8xf32> to vector<8x1xf32>
    %74 = tpu.reciprocal %73 {approx = true} : vector<8x1xf32> -> vector<8x1xf32>
    %75 = vector.broadcast %74 : vector<8x1xf32> to vector<8x8xf32>
    %76 = arith.mulf %71, %75 : vector<8x8xf32>
    %cst_29 = arith.constant dense<0.000000e+00> : vector<8x8xf32>
    %77 = tpu.matmul %76, %64, %cst_29 {dimension_numbers = #tpu.dot_dimension_numbers<[1], [0], [0], [1], [0, 0, 1, 1], [], []>} : vector<8x8xf32>, vector<8x8xf32>, vector<8x8xf32> -> vector<8x8xf32>
    %78 = vector.extract_strided_slice %37 {offsets = [0, 16], sizes = [8, 8], strides = [1, 1]} : vector<16x32xf32> to vector<8x8xf32>
    %79 = vector.extract_strided_slice %38 {offsets = [0, 16], sizes = [8, 8], strides = [1, 1]} : vector<16x32xf32> to vector<8x8xf32>
    %80 = vector.extract_strided_slice %39 {offsets = [0, 16], sizes = [8, 8], strides = [1, 1]} : vector<16x32xf32> to vector<8x8xf32>
    %cst_30 = arith.constant dense<0.000000e+00> : vector<8x8xf32>
    %81 = tpu.matmul %78, %79, %cst_30 {dimension_numbers = #tpu.dot_dimension_numbers<[1], [1], [0], [0], [0, 0, 1, 0], [], []>} : vector<8x8xf32>, vector<8x8xf32>, vector<8x8xf32> -> vector<8x8xf32>
    %82 = arith.addf %81, %45 : vector<8x8xf32>
    %cst_31 = arith.constant dense<0xFF800000> : vector<8xf32>
    %83 = vector.multi_reduction <maximumf>, %82, %cst_31 [1] : vector<8x8xf32> to vector<8xf32>
    %84 = vector.shape_cast %83 : vector<8xf32> to vector<8x1xf32>
    %85 = vector.broadcast %84 : vector<8x1xf32> to vector<8x8xf32>
    %86 = arith.subf %82, %85 : vector<8x8xf32>
    %87 = math.exp %86 : vector<8x8xf32>
    %cst_32 = arith.constant dense<0.000000e+00> : vector<8xf32>
    %88 = vector.multi_reduction <add>, %87, %cst_32 [1] : vector<8x8xf32> to vector<8xf32>
    %89 = vector.shape_cast %88 : vector<8xf32> to vector<8x1xf32>
    %90 = tpu.reciprocal %89 {approx = true} : vector<8x1xf32> -> vector<8x1xf32>
    %91 = vector.broadcast %90 : vector<8x1xf32> to vector<8x8xf32>
    %92 = arith.mulf %87, %91 : vector<8x8xf32>
    %cst_33 = arith.constant dense<0.000000e+00> : vector<8x8xf32>
    %93 = tpu.matmul %92, %80, %cst_33 {dimension_numbers = #tpu.dot_dimension_numbers<[1], [0], [0], [1], [0, 0, 1, 1], [], []>} : vector<8x8xf32>, vector<8x8xf32>, vector<8x8xf32> -> vector<8x8xf32>
    %94 = vector.extract_strided_slice %37 {offsets = [0, 24], sizes = [8, 8], strides = [1, 1]} : vector<16x32xf32> to vector<8x8xf32>
    %95 = vector.extract_strided_slice %38 {offsets = [0, 24], sizes = [8, 8], strides = [1, 1]} : vector<16x32xf32> to vector<8x8xf32>
    %96 = vector.extract_strided_slice %39 {offsets = [0, 24], sizes = [8, 8], strides = [1, 1]} : vector<16x32xf32> to vector<8x8xf32>
    %cst_34 = arith.constant dense<0.000000e+00> : vector<8x8xf32>
    %97 = tpu.matmul %94, %95, %cst_34 {dimension_numbers = #tpu.dot_dimension_numbers<[1], [1], [0], [0], [0, 0, 1, 0], [], []>} : vector<8x8xf32>, vector<8x8xf32>, vector<8x8xf32> -> vector<8x8xf32>
    %98 = arith.addf %97, %45 : vector<8x8xf32>
    %cst_35 = arith.constant dense<0xFF800000> : vector<8xf32>
    %99 = vector.multi_reduction <maximumf>, %98, %cst_35 [1] : vector<8x8xf32> to vector<8xf32>
    %100 = vector.shape_cast %99 : vector<8xf32> to vector<8x1xf32>
    %101 = vector.broadcast %100 : vector<8x1xf32> to vector<8x8xf32>
    %102 = arith.subf %98, %101 : vector<8x8xf32>
    %103 = math.exp %102 : vector<8x8xf32>
    %cst_36 = arith.constant dense<0.000000e+00> : vector<8xf32>
    %104 = vector.multi_reduction <add>, %103, %cst_36 [1] : vector<8x8xf32> to vector<8xf32>
    %105 = vector.shape_cast %104 : vector<8xf32> to vector<8x1xf32>
    %106 = tpu.reciprocal %105 {approx = true} : vector<8x1xf32> -> vector<8x1xf32>
    %107 = vector.broadcast %106 : vector<8x1xf32> to vector<8x8xf32>
    %108 = arith.mulf %103, %107 : vector<8x8xf32>
    %cst_37 = arith.constant dense<0.000000e+00> : vector<8x8xf32>
    %109 = tpu.matmul %108, %96, %cst_37 {dimension_numbers = #tpu.dot_dimension_numbers<[1], [0], [0], [1], [0, 0, 1, 1], [], []>} : vector<8x8xf32>, vector<8x8xf32>, vector<8x8xf32> -> vector<8x8xf32>
    %110 = tpu.concatenate %61, %77, %93, %109 in 1 : vector<8x8xf32>, vector<8x8xf32>, vector<8x8xf32>, vector<8x8xf32> -> vector<8x32xf32>
    %111 = vector.extract_strided_slice %37 {offsets = [8, 0], sizes = [8, 8], strides = [1, 1]} : vector<16x32xf32> to vector<8x8xf32>
    %112 = vector.extract_strided_slice %38 {offsets = [8, 0], sizes = [8, 8], strides = [1, 1]} : vector<16x32xf32> to vector<8x8xf32>
    %113 = vector.extract_strided_slice %39 {offsets = [8, 0], sizes = [8, 8], strides = [1, 1]} : vector<16x32xf32> to vector<8x8xf32>
    %cst_38 = arith.constant dense<0.000000e+00> : vector<8x8xf32>
    %114 = tpu.matmul %111, %112, %cst_38 {dimension_numbers = #tpu.dot_dimension_numbers<[1], [1], [0], [0], [0, 0, 1, 0], [], []>} : vector<8x8xf32>, vector<8x8xf32>, vector<8x8xf32> -> vector<8x8xf32>
    %115 = arith.addf %114, %45 : vector<8x8xf32>
    %cst_39 = arith.constant dense<0xFF800000> : vector<8xf32>
    %116 = vector.multi_reduction <maximumf>, %115, %cst_39 [1] : vector<8x8xf32> to vector<8xf32>
    %117 = vector.shape_cast %116 : vector<8xf32> to vector<8x1xf32>
    %118 = vector.broadcast %117 : vector<8x1xf32> to vector<8x8xf32>
    %119 = arith.subf %115, %118 : vector<8x8xf32>
    %120 = math.exp %119 : vector<8x8xf32>
    %cst_40 = arith.constant dense<0.000000e+00> : vector<8xf32>
    %121 = vector.multi_reduction <add>, %120, %cst_40 [1] : vector<8x8xf32> to vector<8xf32>
    %122 = vector.shape_cast %121 : vector<8xf32> to vector<8x1xf32>
    %123 = tpu.reciprocal %122 {approx = true} : vector<8x1xf32> -> vector<8x1xf32>
    %124 = vector.broadcast %123 : vector<8x1xf32> to vector<8x8xf32>
    %125 = arith.mulf %120, %124 : vector<8x8xf32>
    %cst_41 = arith.constant dense<0.000000e+00> : vector<8x8xf32>
    %126 = tpu.matmul %125, %113, %cst_41 {dimension_numbers = #tpu.dot_dimension_numbers<[1], [0], [0], [1], [0, 0, 1, 1], [], []>} : vector<8x8xf32>, vector<8x8xf32>, vector<8x8xf32> -> vector<8x8xf32>
    %127 = vector.extract_strided_slice %37 {offsets = [8, 8], sizes = [8, 8], strides = [1, 1]} : vector<16x32xf32> to vector<8x8xf32>
    %128 = vector.extract_strided_slice %38 {offsets = [8, 8], sizes = [8, 8], strides = [1, 1]} : vector<16x32xf32> to vector<8x8xf32>
    %129 = vector.extract_strided_slice %39 {offsets = [8, 8], sizes = [8, 8], strides = [1, 1]} : vector<16x32xf32> to vector<8x8xf32>
    %cst_42 = arith.constant dense<0.000000e+00> : vector<8x8xf32>
    %130 = tpu.matmul %127, %128, %cst_42 {dimension_numbers = #tpu.dot_dimension_numbers<[1], [1], [0], [0], [0, 0, 1, 0], [], []>} : vector<8x8xf32>, vector<8x8xf32>, vector<8x8xf32> -> vector<8x8xf32>
    %131 = arith.addf %130, %45 : vector<8x8xf32>
    %cst_43 = arith.constant dense<0xFF800000> : vector<8xf32>
    %132 = vector.multi_reduction <maximumf>, %131, %cst_43 [1] : vector<8x8xf32> to vector<8xf32>
    %133 = vector.shape_cast %132 : vector<8xf32> to vector<8x1xf32>
    %134 = vector.broadcast %133 : vector<8x1xf32> to vector<8x8xf32>
    %135 = arith.subf %131, %134 : vector<8x8xf32>
    %136 = math.exp %135 : vector<8x8xf32>
    %cst_44 = arith.constant dense<0.000000e+00> : vector<8xf32>
    %137 = vector.multi_reduction <add>, %136, %cst_44 [1] : vector<8x8xf32> to vector<8xf32>
    %138 = vector.shape_cast %137 : vector<8xf32> to vector<8x1xf32>
    %139 = tpu.reciprocal %138 {approx = true} : vector<8x1xf32> -> vector<8x1xf32>
    %140 = vector.broadcast %139 : vector<8x1xf32> to vector<8x8xf32>
    %141 = arith.mulf %136, %140 : vector<8x8xf32>
    %cst_45 = arith.constant dense<0.000000e+00> : vector<8x8xf32>
    %142 = tpu.matmul %141, %129, %cst_45 {dimension_numbers = #tpu.dot_dimension_numbers<[1], [0], [0], [1], [0, 0, 1, 1], [], []>} : vector<8x8xf32>, vector<8x8xf32>, vector<8x8xf32> -> vector<8x8xf32>
    %143 = vector.extract_strided_slice %37 {offsets = [8, 16], sizes = [8, 8], strides = [1, 1]} : vector<16x32xf32> to vector<8x8xf32>
    %144 = vector.extract_strided_slice %38 {offsets = [8, 16], sizes = [8, 8], strides = [1, 1]} : vector<16x32xf32> to vector<8x8xf32>
    %145 = vector.extract_strided_slice %39 {offsets = [8, 16], sizes = [8, 8], strides = [1, 1]} : vector<16x32xf32> to vector<8x8xf32>
    %cst_46 = arith.constant dense<0.000000e+00> : vector<8x8xf32>
    %146 = tpu.matmul %143, %144, %cst_46 {dimension_numbers = #tpu.dot_dimension_numbers<[1], [1], [0], [0], [0, 0, 1, 0], [], []>} : vector<8x8xf32>, vector<8x8xf32>, vector<8x8xf32> -> vector<8x8xf32>
    %147 = arith.addf %146, %45 : vector<8x8xf32>
    %cst_47 = arith.constant dense<0xFF800000> : vector<8xf32>
    %148 = vector.multi_reduction <maximumf>, %147, %cst_47 [1] : vector<8x8xf32> to vector<8xf32>
    %149 = vector.shape_cast %148 : vector<8xf32> to vector<8x1xf32>
    %150 = vector.broadcast %149 : vector<8x1xf32> to vector<8x8xf32>
    %151 = arith.subf %147, %150 : vector<8x8xf32>
    %152 = math.exp %151 : vector<8x8xf32>
    %cst_48 = arith.constant dense<0.000000e+00> : vector<8xf32>
    %153 = vector.multi_reduction <add>, %152, %cst_48 [1] : vector<8x8xf32> to vector<8xf32>
    %154 = vector.shape_cast %153 : vector<8xf32> to vector<8x1xf32>
    %155 = tpu.reciprocal %154 {approx = true} : vector<8x1xf32> -> vector<8x1xf32>
    %156 = vector.broadcast %155 : vector<8x1xf32> to vector<8x8xf32>
    %157 = arith.mulf %152, %156 : vector<8x8xf32>
    %cst_49 = arith.constant dense<0.000000e+00> : vector<8x8xf32>
    %158 = tpu.matmul %157, %145, %cst_49 {dimension_numbers = #tpu.dot_dimension_numbers<[1], [0], [0], [1], [0, 0, 1, 1], [], []>} : vector<8x8xf32>, vector<8x8xf32>, vector<8x8xf32> -> vector<8x8xf32>
    %159 = vector.extract_strided_slice %37 {offsets = [8, 24], sizes = [8, 8], strides = [1, 1]} : vector<16x32xf32> to vector<8x8xf32>
    %160 = vector.extract_strided_slice %38 {offsets = [8, 24], sizes = [8, 8], strides = [1, 1]} : vector<16x32xf32> to vector<8x8xf32>
    %161 = vector.extract_strided_slice %39 {offsets = [8, 24], sizes = [8, 8], strides = [1, 1]} : vector<16x32xf32> to vector<8x8xf32>
    %cst_50 = arith.constant dense<0.000000e+00> : vector<8x8xf32>
    %162 = tpu.matmul %159, %160, %cst_50 {dimension_numbers = #tpu.dot_dimension_numbers<[1], [1], [0], [0], [0, 0, 1, 0], [], []>} : vector<8x8xf32>, vector<8x8xf32>, vector<8x8xf32> -> vector<8x8xf32>
    %163 = arith.addf %162, %45 : vector<8x8xf32>
    %cst_51 = arith.constant dense<0xFF800000> : vector<8xf32>
    %164 = vector.multi_reduction <maximumf>, %163, %cst_51 [1] : vector<8x8xf32> to vector<8xf32>
    %165 = vector.shape_cast %164 : vector<8xf32> to vector<8x1xf32>
    %166 = vector.broadcast %165 : vector<8x1xf32> to vector<8x8xf32>
    %167 = arith.subf %163, %166 : vector<8x8xf32>
    %168 = math.exp %167 : vector<8x8xf32>
    %cst_52 = arith.constant dense<0.000000e+00> : vector<8xf32>
    %169 = vector.multi_reduction <add>, %168, %cst_52 [1] : vector<8x8xf32> to vector<8xf32>
    %170 = vector.shape_cast %169 : vector<8xf32> to vector<8x1xf32>
    %171 = tpu.reciprocal %170 {approx = true} : vector<8x1xf32> -> vector<8x1xf32>
    %172 = vector.broadcast %171 : vector<8x1xf32> to vector<8x8xf32>
    %173 = arith.mulf %168, %172 : vector<8x8xf32>
    %cst_53 = arith.constant dense<0.000000e+00> : vector<8x8xf32>
    %174 = tpu.matmul %173, %161, %cst_53 {dimension_numbers = #tpu.dot_dimension_numbers<[1], [0], [0], [1], [0, 0, 1, 1], [], []>} : vector<8x8xf32>, vector<8x8xf32>, vector<8x8xf32> -> vector<8x8xf32>
    %175 = tpu.concatenate %126, %142, %158, %174 in 1 : vector<8x8xf32>, vector<8x8xf32>, vector<8x8xf32>, vector<8x8xf32> -> vector<8x32xf32>
    %176 = tpu.concatenate %110, %175 in 0 : vector<8x32xf32>, vector<8x32xf32> -> vector<16x32xf32>
    %c0_54 = arith.constant 0 : index
    %c0_55 = arith.constant 0 : index
    %c0_56 = arith.constant 0 : index
    %177 = vector.load %arg8[%c0_54, %c0_55, %c0_56] : memref<1x32x32xf32, #tpu.memory_space<vmem>>, vector<1x32x32xf32>
    %178 = vector.shape_cast %177 : vector<1x32x32xf32> to vector<32x32xf32>
    %cst_57 = arith.constant dense<0.000000e+00> : vector<16x32xf32>
    %179 = tpu.matmul %176, %178, %cst_57 {dimension_numbers = #tpu.dot_dimension_numbers<[1], [0], [0], [1], [0, 0, 1, 1], [], []>} : vector<16x32xf32>, vector<32x32xf32>, vector<16x32xf32> -> vector<16x32xf32>
    %180 = arith.addf %3, %179 : vector<16x32xf32>
    %c0_58 = arith.constant 0 : index
    %c0_59 = arith.constant 0 : index
    %c0_60 = arith.constant 0 : index
    %181 = vector.load %arg9[%c0_58, %c0_59, %c0_60] : memref<1x1x32xf32, #tpu.memory_space<vmem>>, vector<1x1x32xf32>
    %182 = vector.shape_cast %181 : vector<1x1x32xf32> to vector<1x32xf32>
    %183 = vector.broadcast %182 : vector<1x32xf32> to vector<16x32xf32>
    %184 = arith.addf %180, %183 : vector<16x32xf32>
    %c0_61 = arith.constant 0 : index
    %c0_62 = arith.constant 0 : index
    %c0_63 = arith.constant 0 : index
    %185 = vector.load %arg10[%c0_61, %c0_62, %c0_63] : memref<1x1x32xf32, #tpu.memory_space<vmem>>, vector<1x1x32xf32>
    %186 = vector.shape_cast %185 : vector<1x1x32xf32> to vector<1x32xf32>
    %c0_64 = arith.constant 0 : index
    %c0_65 = arith.constant 0 : index
    %c0_66 = arith.constant 0 : index
    %187 = vector.load %arg11[%c0_64, %c0_65, %c0_66] : memref<1x1x32xf32, #tpu.memory_space<vmem>>, vector<1x1x32xf32>
    %188 = vector.shape_cast %187 : vector<1x1x32xf32> to vector<1x32xf32>
    %cst_67 = arith.constant dense<0.000000e+00> : vector<16xf32>
    %189 = vector.multi_reduction <add>, %184, %cst_67 [1] : vector<16x32xf32> to vector<16xf32>
    %190 = vector.shape_cast %189 : vector<16xf32> to vector<16x1xf32>
    %cst_68 = arith.constant 3.200000e+01 : f32
    %191 = vector.broadcast %cst_68 : f32 to vector<16x1xf32>
    %192 = arith.divf %190, %191 : vector<16x1xf32>
    %193 = vector.broadcast %192 : vector<16x1xf32> to vector<16x32xf32>
    %194 = arith.subf %184, %193 : vector<16x32xf32>
    %195 = arith.mulf %194, %194 : vector<16x32xf32>
    %cst_69 = arith.constant dense<0.000000e+00> : vector<16xf32>
    %196 = vector.multi_reduction <add>, %195, %cst_69 [1] : vector<16x32xf32> to vector<16xf32>
    %197 = vector.shape_cast %196 : vector<16xf32> to vector<16x1xf32>
    %cst_70 = arith.constant 3.200000e+01 : f32
    %198 = vector.broadcast %cst_70 : f32 to vector<16x1xf32>
    %199 = arith.divf %197, %198 : vector<16x1xf32>
    %cst_71 = arith.constant 9.99999974E-6 : f32
    %200 = vector.broadcast %cst_71 : f32 to vector<16x1xf32>
    %201 = arith.addf %199, %200 : vector<16x1xf32>
    %202 = math.rsqrt %201 : vector<16x1xf32>
    %203 = vector.broadcast %202 : vector<16x1xf32> to vector<16x32xf32>
    %204 = arith.mulf %194, %203 : vector<16x32xf32>
    %205 = vector.broadcast %186 : vector<1x32xf32> to vector<16x32xf32>
    %206 = arith.mulf %204, %205 : vector<16x32xf32>
    %207 = vector.broadcast %188 : vector<1x32xf32> to vector<16x32xf32>
    %208 = arith.addf %206, %207 : vector<16x32xf32>
    %c0_72 = arith.constant 0 : index
    %c0_73 = arith.constant 0 : index
    %c0_74 = arith.constant 0 : index
    %209 = vector.load %arg12[%c0_72, %c0_73, %c0_74] : memref<1x32x128xf32, #tpu.memory_space<vmem>>, vector<1x32x128xf32>
    %210 = vector.shape_cast %209 : vector<1x32x128xf32> to vector<32x128xf32>
    %cst_75 = arith.constant dense<0.000000e+00> : vector<16x128xf32>
    %211 = tpu.matmul %208, %210, %cst_75 {dimension_numbers = #tpu.dot_dimension_numbers<[1], [0], [0], [1], [0, 0, 1, 1], [], []>} : vector<16x32xf32>, vector<32x128xf32>, vector<16x128xf32> -> vector<16x128xf32>
    %c0_76 = arith.constant 0 : index
    %c0_77 = arith.constant 0 : index
    %c0_78 = arith.constant 0 : index
    %212 = vector.load %arg13[%c0_76, %c0_77, %c0_78] : memref<1x1x128xf32, #tpu.memory_space<vmem>>, vector<1x1x128xf32>
    %213 = vector.shape_cast %212 : vector<1x1x128xf32> to vector<1x128xf32>
    %214 = vector.broadcast %213 : vector<1x128xf32> to vector<16x128xf32>
    %215 = arith.addf %211, %214 : vector<16x128xf32>
    %cst_79 = arith.constant 1.702000e+00 : f32
    %216 = vector.broadcast %cst_79 : f32 to vector<16x128xf32>
    %217 = arith.mulf %216, %215 : vector<16x128xf32>
    %218 = arith.negf %217 : vector<16x128xf32>
    %219 = math.exp %218 : vector<16x128xf32>
    %cst_80 = arith.constant 1.000000e+00 : f32
    %220 = vector.broadcast %cst_80 : f32 to vector<16x128xf32>
    %221 = arith.addf %220, %219 : vector<16x128xf32>
    %222 = arith.divf %220, %221 : vector<16x128xf32>
    %223 = arith.mulf %215, %222 : vector<16x128xf32>
    %c0_81 = arith.constant 0 : index
    %c0_82 = arith.constant 0 : index
    %c0_83 = arith.constant 0 : index
    %224 = vector.load %arg14[%c0_81, %c0_82, %c0_83] : memref<1x128x32xf32, #tpu.memory_space<vmem>>, vector<1x128x32xf32>
    %225 = vector.shape_cast %224 : vector<1x128x32xf32> to vector<128x32xf32>
    %cst_84 = arith.constant dense<0.000000e+00> : vector<16x32xf32>
    %226 = tpu.matmul %223, %225, %cst_84 {dimension_numbers = #tpu.dot_dimension_numbers<[1], [0], [0], [1], [0, 0, 1, 1], [], []>} : vector<16x128xf32>, vector<128x32xf32>, vector<16x32xf32> -> vector<16x32xf32>
    %227 = arith.addf %184, %226 : vector<16x32xf32>
    %c0_85 = arith.constant 0 : index
    %c0_86 = arith.constant 0 : index
    %c0_87 = arith.constant 0 : index
    %228 = vector.load %arg15[%c0_85, %c0_86, %c0_87] : memref<1x1x32xf32, #tpu.memory_space<vmem>>, vector<1x1x32xf32>
    %229 = vector.shape_cast %228 : vector<1x1x32xf32> to vector<1x32xf32>
    %230 = vector.broadcast %229 : vector<1x32xf32> to vector<16x32xf32>
    %231 = arith.addf %227, %230 : vector<16x32xf32>
    %c0_88 = arith.constant 0 : index
    %c0_89 = arith.constant 0 : index
    %232 = vector.load %arg20[%c0_88, %c0_89] : memref<16x32xf32, #tpu.memory_space<vmem>>, vector<16x32xf32>
    tpu.vector_store %arg20[%c0_88, %c0_89], %231 {strides = array<i32>} : memref<16x32xf32, #tpu.memory_space<vmem>>, vector<16x32xf32>,
    %c1_i32 = arith.constant 1 : i32
    %233 = arith.cmpi eq, %arg0, %c1_i32 : i32
    %234 = arith.extui %233 : i1 to i32
    %c0_i32_90 = arith.constant 0 : i32
    %235 = arith.cmpi ne, %234, %c0_i32_90 : i32
    scf.if %235 {
      %c0_91 = arith.constant 0 : index
      %c0_92 = arith.constant 0 : index
      %236 = vector.load %arg16[%c0_91, %c0_92] : memref<1x32xf32, #tpu.memory_space<vmem>>, vector<1x32xf32>
      %c0_93 = arith.constant 0 : index
      %c0_94 = arith.constant 0 : index
      %237 = vector.load %arg17[%c0_93, %c0_94] : memref<1x32xf32, #tpu.memory_space<vmem>>, vector<1x32xf32>
      %cst_95 = arith.constant dense<0.000000e+00> : vector<16xf32>
      %238 = vector.multi_reduction <add>, %231, %cst_95 [1] : vector<16x32xf32> to vector<16xf32>
      %239 = vector.shape_cast %238 : vector<16xf32> to vector<16x1xf32>
      %cst_96 = arith.constant 3.200000e+01 : f32
      %240 = vector.broadcast %cst_96 : f32 to vector<16x1xf32>
      %241 = arith.divf %239, %240 : vector<16x1xf32>
      %242 = vector.broadcast %241 : vector<16x1xf32> to vector<16x32xf32>
      %243 = arith.subf %231, %242 : vector<16x32xf32>
      %244 = arith.mulf %243, %243 : vector<16x32xf32>
      %cst_97 = arith.constant dense<0.000000e+00> : vector<16xf32>
      %245 = vector.multi_reduction <add>, %244, %cst_97 [1] : vector<16x32xf32> to vector<16xf32>
      %246 = vector.shape_cast %245 : vector<16xf32> to vector<16x1xf32>
      %cst_98 = arith.constant 3.200000e+01 : f32
      %247 = vector.broadcast %cst_98 : f32 to vector<16x1xf32>
      %248 = arith.divf %246, %247 : vector<16x1xf32>
      %cst_99 = arith.constant 9.99999974E-6 : f32
      %249 = vector.broadcast %cst_99 : f32 to vector<16x1xf32>
      %250 = arith.addf %248, %249 : vector<16x1xf32>
      %251 = math.rsqrt %250 : vector<16x1xf32>
      %252 = vector.broadcast %251 : vector<16x1xf32> to vector<16x32xf32>
      %253 = arith.mulf %243, %252 : vector<16x32xf32>
      %254 = vector.broadcast %236 : vector<1x32xf32> to vector<16x32xf32>
      %255 = arith.mulf %253, %254 : vector<16x32xf32>
      %256 = vector.broadcast %237 : vector<1x32xf32> to vector<16x32xf32>
      %257 = arith.addf %255, %256 : vector<16x32xf32>
      %c0_100 = arith.constant 0 : index
      %c0_101 = arith.constant 0 : index
      %258 = vector.load %arg3[%c0_100, %c0_101] : memref<2x16xf32, #tpu.memory_space<vmem>>, vector<2x16xf32>
      %cst_102 = arith.constant dense<0.000000e+00> : vector<2x32xf32>
      %259 = tpu.matmul %258, %257, %cst_102 {dimension_numbers = #tpu.dot_dimension_numbers<[1], [0], [0], [1], [0, 0, 1, 1], [], []>} : vector<2x16xf32>, vector<16x32xf32>, vector<2x32xf32> -> vector<2x32xf32>
      %c0_103 = arith.constant 0 : index
      %c0_104 = arith.constant 0 : index
      %260 = vector.load %arg18[%c0_103, %c0_104] : memref<32x32xf32, #tpu.memory_space<vmem>>, vector<32x32xf32>
      %cst_105 = arith.constant dense<0.000000e+00> : vector<2x32xf32>
      %261 = tpu.matmul %259, %260, %cst_105 {dimension_numbers = #tpu.dot_dimension_numbers<[1], [0], [0], [1], [0, 0, 1, 1], [], []>} : vector<2x32xf32>, vector<32x32xf32>, vector<2x32xf32> -> vector<2x32xf32>
      %c0_106 = arith.constant 0 : index
      %c0_107 = arith.constant 0 : index
      %262 = vector.load %arg19[%c0_106, %c0_107] : memref<2x32xf32, #tpu.memory_space<vmem>>, vector<2x32xf32>
      tpu.vector_store %arg19[%c0_106, %c0_107], %261 {strides = array<i32>} : memref<2x32xf32, #tpu.memory_space<vmem>>, vector<2x32xf32>,
    } else {
    }
    return
  }
  func.func @transform_0(%arg0: i32) -> (i32, i32) {
    %c0_i32 = arith.constant 0 : i32
    %c0_i32_0 = arith.constant 0 : i32
    %c0_i32_1 = arith.constant 0 : i32
    return %c0_i32, %c0_i32_0 : i32, i32
  }
  func.func @transform_1(%arg0: i32) -> (i32, i32) {
    %c0_i32 = arith.constant 0 : i32
    %c0_i32_0 = arith.constant 0 : i32
    %c0_i32_1 = arith.constant 0 : i32
    return %c0_i32, %c0_i32_0 : i32, i32
  }
  func.func @transform_2(%arg0: i32) -> (i32, i32) {
    %c0_i32 = arith.constant 0 : i32
    %c0_i32_0 = arith.constant 0 : i32
    %c0_i32_1 = arith.constant 0 : i32
    return %c0_i32, %c0_i32_0 : i32, i32
  }
  func.func @transform_3(%arg0: i32) -> (i32, i32, i32) {
    %c0_i32 = arith.constant 0 : i32
    %c0_i32_0 = arith.constant 0 : i32
    %c0_i32_1 = arith.constant 0 : i32
    return %arg0, %c0_i32, %c0_i32_0 : i32, i32, i32
  }
  func.func @transform_4(%arg0: i32) -> (i32, i32, i32) {
    %c0_i32 = arith.constant 0 : i32
    %c0_i32_0 = arith.constant 0 : i32
    %c0_i32_1 = arith.constant 0 : i32
    return %arg0, %c0_i32, %c0_i32_0 : i32, i32, i32
  }
  func.func @transform_5(%arg0: i32) -> (i32, i32, i32) {
    %c0_i32 = arith.constant 0 : i32
    %c0_i32_0 = arith.constant 0 : i32
    %c0_i32_1 = arith.constant 0 : i32
    return %arg0, %c0_i32, %c0_i32_0 : i32, i32, i32
  }
  func.func @transform_6(%arg0: i32) -> (i32, i32, i32) {
    %c0_i32 = arith.constant 0 : i32
    %c0_i32_0 = arith.constant 0 : i32
    %c0_i32_1 = arith.constant 0 : i32
    return %arg0, %c0_i32, %c0_i32_0 : i32, i32, i32
  }
  func.func @transform_7(%arg0: i32) -> (i32, i32, i32) {
    %c0_i32 = arith.constant 0 : i32
    %c0_i32_0 = arith.constant 0 : i32
    %c0_i32_1 = arith.constant 0 : i32
    return %arg0, %c0_i32, %c0_i32_0 : i32, i32, i32
  }
  func.func @transform_8(%arg0: i32) -> (i32, i32, i32) {
    %c0_i32 = arith.constant 0 : i32
    %c0_i32_0 = arith.constant 0 : i32
    %c0_i32_1 = arith.constant 0 : i32
    return %arg0, %c0_i32, %c0_i32_0 : i32, i32, i32
  }
  func.func @transform_9(%arg0: i32) -> (i32, i32, i32) {
    %c0_i32 = arith.constant 0 : i32
    %c0_i32_0 = arith.constant 0 : i32
    %c0_i32_1 = arith.constant 0 : i32
    return %arg0, %c0_i32, %c0_i32_0 : i32, i32, i32
  }
  func.func @transform_10(%arg0: i32) -> (i32, i32, i32) {
    %c0_i32 = arith.constant 0 : i32
    %c0_i32_0 = arith.constant 0 : i32
    %c0_i32_1 = arith.constant 0 : i32
    return %arg0, %c0_i32, %c0_i32_0 : i32, i32, i32
  }
  func.func @transform_11(%arg0: i32) -> (i32, i32, i32) {
    %c0_i32 = arith.constant 0 : i32
    %c0_i32_0 = arith.constant 0 : i32
    %c0_i32_1 = arith.constant 0 : i32
    return %arg0, %c0_i32, %c0_i32_0 : i32, i32, i32
  }
  func.func @transform_12(%arg0: i32) -> (i32, i32, i32) {
    %c0_i32 = arith.constant 0 : i32
    %c0_i32_0 = arith.constant 0 : i32
    %c0_i32_1 = arith.constant 0 : i32
    return %arg0, %c0_i32, %c0_i32_0 : i32, i32, i32
  }
  func.func @transform_13(%arg0: i32) -> (i32, i32, i32) {
    %c0_i32 = arith.constant 0 : i32
    %c0_i32_0 = arith.constant 0 : i32
    %c0_i32_1 = arith.constant 0 : i32
    return %arg0, %c0_i32, %c0_i32_0 : i32, i32, i32
  }
  func.func @transform_14(%arg0: i32) -> (i32, i32, i32) {
    %c0_i32 = arith.constant 0 : i32
    %c0_i32_0 = arith.constant 0 : i32
    %c0_i32_1 = arith.constant 0 : i32
    return %arg0, %c0_i32, %c0_i32_0 : i32, i32, i32
  }
  func.func @transform_15(%arg0: i32) -> (i32, i32) {
    %c0_i32 = arith.constant 0 : i32
    %c0_i32_0 = arith.constant 0 : i32
    %c0_i32_1 = arith.constant 0 : i32
    return %c0_i32, %c0_i32_0 : i32, i32
  }
  func.func @transform_16(%arg0: i32) -> (i32, i32) {
    %c0_i32 = arith.constant 0 : i32
    %c0_i32_0 = arith.constant 0 : i32
    %c0_i32_1 = arith.constant 0 : i32
    return %c0_i32, %c0_i32_0 : i32, i32
  }
  func.func @transform_17(%arg0: i32) -> (i32, i32) {
    %c0_i32 = arith.constant 0 : i32
    %c0_i32_0 = arith.constant 0 : i32
    %c0_i32_1 = arith.constant 0 : i32
    return %c0_i32, %c0_i32_0 : i32, i32
  }
  func.func @transform_18(%arg0: i32) -> (i32, i32) {
    %c0_i32 = arith.constant 0 : i32
    %c0_i32_0 = arith.constant 0 : i32
    %c0_i32_1 = arith.constant 0 : i32
    return %c0_i32, %c0_i32_0 : i32, i32
  }
}

</mosaic_0001>

<llo_original>
// kernel: tpu_custom_call.1
$region0: #{tpu_custom_call.1}
  #allocation0 [shape = 'u32[]', space=smem, size = 0x4, offset = 0x4, fixed_abs, tag = 'smem constant byte address 0x4 - core index']
  #allocation1 [shape = 'u32[144,128]{1,0:T(1,128)}', space=vmem, size = 0x12000, scoped, tag = 'internal scratch']
  #allocation2 [shape = 'f32[16,32]{1,0:T(8,128)}', space=vmem, size = 0x2000, scoped, tag = 'scratch operand']
  %s0 = inlined_call_operand.vmem [shape: f32[16,32], index: 0, kind: input, shape index: {}]
  %s1 = inlined_call_operand.vmem [shape: f32[16,32], index: 1, kind: input, shape index: {}]
  %s2 = inlined_call_operand.vmem [shape: f32[2,16], index: 2, kind: input, shape index: {}]
  %s3 = inlined_call_operand.vmem [shape: f32[2,1,32], index: 3, kind: input, shape index: {}]
  %s4 = inlined_call_operand.vmem [shape: f32[2,1,32], index: 4, kind: input, shape index: {}]
  %s5 = inlined_call_operand.vmem [shape: f32[2,32,96], index: 5, kind: input, shape index: {}]
  %s6 = inlined_call_operand.vmem [shape: f32[2,1,96], index: 6, kind: input, shape index: {}]
  %s7 = inlined_call_operand.vmem [shape: f32[2,32,32], index: 7, kind: input, shape index: {}]
  %s8 = inlined_call_operand.vmem [shape: f32[2,1,32], index: 8, kind: input, shape index: {}]
  %s9 = inlined_call_operand.vmem [shape: f32[2,1,32], index: 9, kind: input, shape index: {}]
  %s10 = inlined_call_operand.vmem [shape: f32[2,1,32], index: 10, kind: input, shape index: {}]
  %s11 = inlined_call_operand.vmem [shape: f32[2,32,128], index: 11, kind: input, shape index: {}]
  %s12 = inlined_call_operand.vmem [shape: f32[2,1,128], index: 12, kind: input, shape index: {}]
  %s13 = inlined_call_operand.vmem [shape: f32[2,128,32], index: 13, kind: input, shape index: {}]
  %s14 = inlined_call_operand.vmem [shape: f32[2,1,32], index: 14, kind: input, shape index: {}]
  %s15 = inlined_call_operand.vmem [shape: f32[1,32], index: 15, kind: input, shape index: {}]
  %s16 = inlined_call_operand.vmem [shape: f32[1,32], index: 16, kind: input, shape index: {}]
  %s17 = inlined_call_operand.vmem [shape: f32[32,32], index: 17, kind: input, shape index: {}]
  %s18 = inlined_call_operand.hbm [shape: f32[2,32], index: 18, kind: output, shape index: {}]
  %s19 = sld [smem:[#allocation0]]
  $region113: #{tpu_custom_call.1} parent=0
    _
  %s21 = ssub.s32 1, %s19
  %s22 = scalar_select 0, %s21, %s19
  $region1: #{tpu_custom_call.1} parent=0
    #allocation3 [shape = 'u8[1024]{0}', space=vmem, size = 0x400, scoped, tag = 'output window, operand 0, single buffered']
    #allocation4 [shape = 's32[2]{0}', space=sflag, size = 0x8, scoped, tag = 'scoped memory for tpu_custom_call.1']
    %23 = vsyncpa [#allocation4], 0
    loop: start=0, step=1, limit=4
    $region2: #{tpu_custom_call.1} parent=1 // loop_pre_header
      _
    $region3: #{tpu_custom_call.1} parent=1 // loop_header
      %s25 = sphi 0, %s29
      %p26 = scmp.ge.s32.totalorder %s25, 4
      %s33 = sphi 0, %s33
      %s35 = sphi 0, %s33
      %s36 = sphi 0, %s35
      %s50 = sphi 0, %s36
      %s54 = sphi 0, %s54
      %s56 = sphi 0, %s54
      %s57 = sphi 0, %s56
      %s71 = sphi 0, %s57
      %s75 = sphi 0, %s75
      %s77 = sphi 0, %s75
      %s78 = sphi 0, %s77
      %s92 = sphi 0, %s78
      %s98 = sphi 0, %s100
      %s101 = sphi 0, %s98
      %s102 = sphi 0, %s101
      %s118 = sphi 0, %s102
      %s124 = sphi 0, %s126
      %s127 = sphi 0, %s124
      %s128 = sphi 0, %s127
      %s144 = sphi 0, %s128
      %s150 = sphi 0, %s152
      %s153 = sphi 0, %s150
      %s154 = sphi 0, %s153
      %s170 = sphi 0, %s154
      %s176 = sphi 0, %s178
      %s179 = sphi 0, %s176
      %s180 = sphi 0, %s179
      %s196 = sphi 0, %s180
      %s202 = sphi 0, %s204
      %s205 = sphi 0, %s202
      %s206 = sphi 0, %s205
      %s222 = sphi 0, %s206
      %s228 = sphi 0, %s230
      %s231 = sphi 0, %s228
      %s232 = sphi 0, %s231
      %s248 = sphi 0, %s232
      %s254 = sphi 0, %s256
      %s257 = sphi 0, %s254
      %s258 = sphi 0, %s257
      %s274 = sphi 0, %s258
      %s280 = sphi 0, %s282
      %s283 = sphi 0, %s280
      %s284 = sphi 0, %s283
      %s300 = sphi 0, %s284
      %s306 = sphi 0, %s308
      %s309 = sphi 0, %s306
      %s310 = sphi 0, %s309
      %s326 = sphi 0, %s310
      %s332 = sphi 0, %s334
      %s335 = sphi 0, %s332
      %s336 = sphi 0, %s335
      %s352 = sphi 0, %s336
      %s358 = sphi 0, %s360
      %s361 = sphi 0, %s358
      %s362 = sphi 0, %s361
      %s378 = sphi 0, %s362
      %s384 = sphi 0, %s386
      %s387 = sphi 0, %s384
      %s388 = sphi 0, %s387
      %s404 = sphi 0, %s388
      %s408 = sphi 0, %s408
      %s410 = sphi 0, %s408
      %s411 = sphi 0, %s410
      %s425 = sphi 0, %s411
      %s429 = sphi 0, %s429
      %s431 = sphi 0, %s429
      %s432 = sphi 0, %s431
      %s446 = sphi 0, %s432
      %s450 = sphi 0, %s450
      %s452 = sphi 0, %s450
      %s453 = sphi 0, %s452
      %s467 = sphi 0, %s453
      %s471 = sphi 0, %s471
      %s473 = sphi 0, %s471
      %s474 = sphi 0, %s473
      %s488 = sphi 0, %s474
    $region4: #{tpu_custom_call.1} parent=1 // loop_header_branch
      %28 = sbr.rel (%p26) target = $region8
    $region5: #{tpu_custom_call.1} parent=1 // loop_body
      %s30 = ssub.s32 %s25, 1
      %s31 = ssub.s32 %s25, 2
      %s32 = sadd.s32 %s25, 1
      %s34 = sadd.s32 %s33, 1
      %p37 = scmp.eq.s32.totalorder %s25, 1
      %p38 = scmp.ne.s32.totalorder %s33, %s35
      %p39 = scmp.eq.s32.totalorder %s25, 0
      %p40 = por %p38, %p39
      %p41 = scmp.ne.s32.totalorder %s33, %s35
      %p42 = scmp.eq.s32.totalorder %s30, 1
      %p43 = por %p41, %p42
      %p44 = scmp.ne.s32.totalorder %s35, %s36
      %p45 = scmp.eq.s32.totalorder %s30, 0
      %p46 = por %p44, %p45
      %p47 = scmp.ne.s32.totalorder %s35, %s36
      %p48 = scmp.eq.s32.totalorder %s31, 1
      %p49 = por %p47, %p48
      %p51 = scmp.ne.s32.totalorder %s36, %s50
      %p52 = scmp.eq.s32.totalorder %s31, 0
      %p53 = por %p51, %p52
      %s55 = sadd.s32 %s54, 1
      %p58 = scmp.eq.s32.totalorder %s25, 1
      %p59 = scmp.ne.s32.totalorder %s54, %s56
      %p60 = scmp.eq.s32.totalorder %s25, 0
      %p61 = por %p59, %p60
      %p62 = scmp.ne.s32.totalorder %s54, %s56
      %p63 = scmp.eq.s32.totalorder %s30, 1
      %p64 = por %p62, %p63
      %p65 = scmp.ne.s32.totalorder %s56, %s57
      %p66 = scmp.eq.s32.totalorder %s30, 0
      %p67 = por %p65, %p66
      %p68 = scmp.ne.s32.totalorder %s56, %s57
      %p69 = scmp.eq.s32.totalorder %s31, 1
      %p70 = por %p68, %p69
      %p72 = scmp.ne.s32.totalorder %s57, %s71
      %p73 = scmp.eq.s32.totalorder %s31, 0
      %p74 = por %p72, %p73
      %s76 = sadd.s32 %s75, 1
      %p79 = scmp.eq.s32.totalorder %s25, 1
      %p80 = scmp.ne.s32.totalorder %s75, %s77
      %p81 = scmp.eq.s32.totalorder %s25, 0
      %p82 = por %p80, %p81
      %p83 = scmp.ne.s32.totalorder %s75, %s77
      %p84 = scmp.eq.s32.totalorder %s30, 1
      %p85 = por %p83, %p84
      %p86 = scmp.ne.s32.totalorder %s77, %s78
      %p87 = scmp.eq.s32.totalorder %s30, 0
      %p88 = por %p86, %p87
      %p89 = scmp.ne.s32.totalorder %s77, %s78
      %p90 = scmp.eq.s32.totalorder %s31, 1
      %p91 = por %p89, %p90
      %p93 = scmp.ne.s32.totalorder %s78, %s92
      %p94 = scmp.eq.s32.totalorder %s31, 0
      %p95 = por %p93, %p94
      %s96 = ssub.s32 %s25, %s32
      %p97 = scmp.eq.s32.totalorder %s96, 0
      %s99 = sadd.s32 %s98, 1
      %s100 = scalar_select %p97, %s98, %s99
      %p103 = pneg %p97
      %p104 = scmp.eq.s32.totalorder %s25, 1
      %p105 = por %p103, %p104
      %p106 = scmp.ne.s32.totalorder %s98, %s101
      %p107 = scmp.eq.s32.totalorder %s25, 0
      %p108 = por %p106, %p107
      %p109 = scmp.ne.s32.totalorder %s98, %s101
      %p110 = scmp.eq.s32.totalorder %s30, 1
      %p111 = por %p109, %p110
      %p112 = scmp.ne.s32.totalorder %s101, %s102
      %p113 = scmp.eq.s32.totalorder %s30, 0
      %p114 = por %p112, %p113
      %p115 = scmp.ne.s32.totalorder %s101, %s102
      %p116 = scmp.eq.s32.totalorder %s31, 1
      %p117 = por %p115, %p116
      %p119 = scmp.ne.s32.totalorder %s102, %s118
      %p120 = scmp.eq.s32.totalorder %s31, 0
      %p121 = por %p119, %p120
      %s122 = ssub.s32 %s25, %s32
      %p123 = scmp.eq.s32.totalorder %s122, 0
      %s125 = sadd.s32 %s124, 1
      %s126 = scalar_select %p123, %s124, %s125
      %p129 = pneg %p123
      %p130 = scmp.eq.s32.totalorder %s25, 1
      %p131 = por %p129, %p130
      %p132 = scmp.ne.s32.totalorder %s124, %s127
      %p133 = scmp.eq.s32.totalorder %s25, 0
      %p134 = por %p132, %p133
      %p135 = scmp.ne.s32.totalorder %s124, %s127
      %p136 = scmp.eq.s32.totalorder %s30, 1
      %p137 = por %p135, %p136
      %p138 = scmp.ne.s32.totalorder %s127, %s128
      %p139 = scmp.eq.s32.totalorder %s30, 0
      %p140 = por %p138, %p139
      %p141 = scmp.ne.s32.totalorder %s127, %s128
      %p142 = scmp.eq.s32.totalorder %s31, 1
      %p143 = por %p141, %p142
      %p145 = scmp.ne.s32.totalorder %s128, %s144
      %p146 = scmp.eq.s32.totalorder %s31, 0
      %p147 = por %p145, %p146
      %s148 = ssub.s32 %s25, %s32
      %p149 = scmp.eq.s32.totalorder %s148, 0
      %s151 = sadd.s32 %s150, 1
      %s152 = scalar_select %p149, %s150, %s151
      %p155 = pneg %p149
      %p156 = scmp.eq.s32.totalorder %s25, 1
      %p157 = por %p155, %p156
      %p158 = scmp.ne.s32.totalorder %s150, %s153
      %p159 = scmp.eq.s32.totalorder %s25, 0
      %p160 = por %p158, %p159
      %p161 = scmp.ne.s32.totalorder %s150, %s153
      %p162 = scmp.eq.s32.totalorder %s30, 1
      %p163 = por %p161, %p162
      %p164 = scmp.ne.s32.totalorder %s153, %s154
      %p165 = scmp.eq.s32.totalorder %s30, 0
      %p166 = por %p164, %p165
      %p167 = scmp.ne.s32.totalorder %s153, %s154
      %p168 = scmp.eq.s32.totalorder %s31, 1
      %p169 = por %p167, %p168
      %p171 = scmp.ne.s32.totalorder %s154, %s170
      %p172 = scmp.eq.s32.totalorder %s31, 0
      %p173 = por %p171, %p172
      %s174 = ssub.s32 %s25, %s32
      %p175 = scmp.eq.s32.totalorder %s174, 0
      %s177 = sadd.s32 %s176, 1
      %s178 = scalar_select %p175, %s176, %s177
      %p181 = pneg %p175
      %p182 = scmp.eq.s32.totalorder %s25, 1
      %p183 = por %p181, %p182
      %p184 = scmp.ne.s32.totalorder %s176, %s179
      %p185 = scmp.eq.s32.totalorder %s25, 0
      %p186 = por %p184, %p185
      %p187 = scmp.ne.s32.totalorder %s176, %s179
      %p188 = scmp.eq.s32.totalorder %s30, 1
      %p189 = por %p187, %p188
      %p190 = scmp.ne.s32.totalorder %s179, %s180
      %p191 = scmp.eq.s32.totalorder %s30, 0
      %p192 = por %p190, %p191
      %p193 = scmp.ne.s32.totalorder %s179, %s180
      %p194 = scmp.eq.s32.totalorder %s31, 1
      %p195 = por %p193, %p194
      %p197 = scmp.ne.s32.totalorder %s180, %s196
      %p198 = scmp.eq.s32.totalorder %s31, 0
      %p199 = por %p197, %p198
      %s200 = ssub.s32 %s25, %s32
      %p201 = scmp.eq.s32.totalorder %s200, 0
      %s203 = sadd.s32 %s202, 1
      %s204 = scalar_select %p201, %s202, %s203
      %p207 = pneg %p201
      %p208 = scmp.eq.s32.totalorder %s25, 1
      %p209 = por %p207, %p208
      %p210 = scmp.ne.s32.totalorder %s202, %s205
      %p211 = scmp.eq.s32.totalorder %s25, 0
      %p212 = por %p210, %p211
      %p213 = scmp.ne.s32.totalorder %s202, %s205
      %p214 = scmp.eq.s32.totalorder %s30, 1
      %p215 = por %p213, %p214
      %p216 = scmp.ne.s32.totalorder %s205, %s206
      %p217 = scmp.eq.s32.totalorder %s30, 0
      %p218 = por %p216, %p217
      %p219 = scmp.ne.s32.totalorder %s205, %s206
      %p220 = scmp.eq.s32.totalorder %s31, 1
      %p221 = por %p219, %p220
      %p223 = scmp.ne.s32.totalorder %s206, %s222
      %p224 = scmp.eq.s32.totalorder %s31, 0
      %p225 = por %p223, %p224
      %s226 = ssub.s32 %s25, %s32
      %p227 = scmp.eq.s32.totalorder %s226, 0
      %s229 = sadd.s32 %s228, 1
      %s230 = scalar_select %p227, %s228, %s229
      %p233 = pneg %p227
      %p234 = scmp.eq.s32.totalorder %s25, 1
      %p235 = por %p233, %p234
      %p236 = scmp.ne.s32.totalorder %s228, %s231
      %p237 = scmp.eq.s32.totalorder %s25, 0
      %p238 = por %p236, %p237
      %p239 = scmp.ne.s32.totalorder %s228, %s231
      %p240 = scmp.eq.s32.totalorder %s30, 1
      %p241 = por %p239, %p240
      %p242 = scmp.ne.s32.totalorder %s231, %s232
      %p243 = scmp.eq.s32.totalorder %s30, 0
      %p244 = por %p242, %p243
      %p245 = scmp.ne.s32.totalorder %s231, %s232
      %p246 = scmp.eq.s32.totalorder %s31, 1
      %p247 = por %p245, %p246
      %p249 = scmp.ne.s32.totalorder %s232, %s248
      %p250 = scmp.eq.s32.totalorder %s31, 0
      %p251 = por %p249, %p250
      %s252 = ssub.s32 %s25, %s32
      %p253 = scmp.eq.s32.totalorder %s252, 0
      %s255 = sadd.s32 %s254, 1
      %s256 = scalar_select %p253, %s254, %s255
      %p259 = pneg %p253
      %p260 = scmp.eq.s32.totalorder %s25, 1
      %p261 = por %p259, %p260
      %p262 = scmp.ne.s32.totalorder %s254, %s257
      %p263 = scmp.eq.s32.totalorder %s25, 0
      %p264 = por %p262, %p263
      %p265 = scmp.ne.s32.totalorder %s254, %s257
      %p266 = scmp.eq.s32.totalorder %s30, 1
      %p267 = por %p265, %p266
      %p268 = scmp.ne.s32.totalorder %s257, %s258
      %p269 = scmp.eq.s32.totalorder %s30, 0
      %p270 = por %p268, %p269
      %p271 = scmp.ne.s32.totalorder %s257, %s258
      %p272 = scmp.eq.s32.totalorder %s31, 1
      %p273 = por %p271, %p272
      %p275 = scmp.ne.s32.totalorder %s258, %s274
      %p276 = scmp.eq.s32.totalorder %s31, 0
      %p277 = por %p275, %p276
      %s278 = ssub.s32 %s25, %s32
      %p279 = scmp.eq.s32.totalorder %s278, 0
      %s281 = sadd.s32 %s280, 1
      %s282 = scalar_select %p279, %s280, %s281
      %p285 = pneg %p279
      %p286 = scmp.eq.s32.totalorder %s25, 1
      %p287 = por %p285, %p286
      %p288 = scmp.ne.s32.totalorder %s280, %s283
      %p289 = scmp.eq.s32.totalorder %s25, 0
      %p290 = por %p288, %p289
      %p291 = scmp.ne.s32.totalorder %s280, %s283
      %p292 = scmp.eq.s32.totalorder %s30, 1
      %p293 = por %p291, %p292
      %p294 = scmp.ne.s32.totalorder %s283, %s284
      %p295 = scmp.eq.s32.totalorder %s30, 0
      %p296 = por %p294, %p295
      %p297 = scmp.ne.s32.totalorder %s283, %s284
      %p298 = scmp.eq.s32.totalorder %s31, 1
      %p299 = por %p297, %p298
      %p301 = scmp.ne.s32.totalorder %s284, %s300
      %p302 = scmp.eq.s32.totalorder %s31, 0
      %p303 = por %p301, %p302
      %s304 = ssub.s32 %s25, %s32
      %p305 = scmp.eq.s32.totalorder %s304, 0
      %s307 = sadd.s32 %s306, 1
      %s308 = scalar_select %p305, %s306, %s307
      %p311 = pneg %p305
      %p312 = scmp.eq.s32.totalorder %s25, 1
      %p313 = por %p311, %p312
      %p314 = scmp.ne.s32.totalorder %s306, %s309
      %p315 = scmp.eq.s32.totalorder %s25, 0
      %p316 = por %p314, %p315
      %p317 = scmp.ne.s32.totalorder %s306, %s309
      %p318 = scmp.eq.s32.totalorder %s30, 1
      %p319 = por %p317, %p318
      %p320 = scmp.ne.s32.totalorder %s309, %s310
      %p321 = scmp.eq.s32.totalorder %s30, 0
      %p322 = por %p320, %p321
      %p323 = scmp.ne.s32.totalorder %s309, %s310
      %p324 = scmp.eq.s32.totalorder %s31, 1
      %p325 = por %p323, %p324
      %p327 = scmp.ne.s32.totalorder %s310, %s326
      %p328 = scmp.eq.s32.totalorder %s31, 0
      %p329 = por %p327, %p328
      %s330 = ssub.s32 %s25, %s32
      %p331 = scmp.eq.s32.totalorder %s330, 0
      %s333 = sadd.s32 %s332, 1
      %s334 = scalar_select %p331, %s332, %s333
      %p337 = pneg %p331
      %p338 = scmp.eq.s32.totalorder %s25, 1
      %p339 = por %p337, %p338
      %p340 = scmp.ne.s32.totalorder %s332, %s335
      %p341 = scmp.eq.s32.totalorder %s25, 0
      %p342 = por %p340, %p341
      %p343 = scmp.ne.s32.totalorder %s332, %s335
      %p344 = scmp.eq.s32.totalorder %s30, 1
      %p345 = por %p343, %p344
      %p346 = scmp.ne.s32.totalorder %s335, %s336
      %p347 = scmp.eq.s32.totalorder %s30, 0
      %p348 = por %p346, %p347
      %p349 = scmp.ne.s32.totalorder %s335, %s336
      %p350 = scmp.eq.s32.totalorder %s31, 1
      %p351 = por %p349, %p350
      %p353 = scmp.ne.s32.totalorder %s336, %s352
      %p354 = scmp.eq.s32.totalorder %s31, 0
      %p355 = por %p353, %p354
      %s356 = ssub.s32 %s25, %s32
      %p357 = scmp.eq.s32.totalorder %s356, 0
      %s359 = sadd.s32 %s358, 1
      %s360 = scalar_select %p357, %s358, %s359
      %p363 = pneg %p357
      %p364 = scmp.eq.s32.totalorder %s25, 1
      %p365 = por %p363, %p364
      %p366 = scmp.ne.s32.totalorder %s358, %s361
      %p367 = scmp.eq.s32.totalorder %s25, 0
      %p368 = por %p366, %p367
      %p369 = scmp.ne.s32.totalorder %s358, %s361
      %p370 = scmp.eq.s32.totalorder %s30, 1
      %p371 = por %p369, %p370
      %p372 = scmp.ne.s32.totalorder %s361, %s362
      %p373 = scmp.eq.s32.totalorder %s30, 0
      %p374 = por %p372, %p373
      %p375 = scmp.ne.s32.totalorder %s361, %s362
      %p376 = scmp.eq.s32.totalorder %s31, 1
      %p377 = por %p375, %p376
      %p379 = scmp.ne.s32.totalorder %s362, %s378
      %p380 = scmp.eq.s32.totalorder %s31, 0
      %p381 = por %p379, %p380
      %s382 = ssub.s32 %s25, %s32
      %p383 = scmp.eq.s32.totalorder %s382, 0
      %s385 = sadd.s32 %s384, 1
      %s386 = scalar_select %p383, %s384, %s385
      %p389 = pneg %p383
      %p390 = scmp.eq.s32.totalorder %s25, 1
      %p391 = por %p389, %p390
      %p392 = scmp.ne.s32.totalorder %s384, %s387
      %p393 = scmp.eq.s32.totalorder %s25, 0
      %p394 = por %p392, %p393
      %p395 = scmp.ne.s32.totalorder %s384, %s387
      %p396 = scmp.eq.s32.totalorder %s30, 1
      %p397 = por %p395, %p396
      %p398 = scmp.ne.s32.totalorder %s387, %s388
      %p399 = scmp.eq.s32.totalorder %s30, 0
      %p400 = por %p398, %p399
      %p401 = scmp.ne.s32.totalorder %s387, %s388
      %p402 = scmp.eq.s32.totalorder %s31, 1
      %p403 = por %p401, %p402
      %p405 = scmp.ne.s32.totalorder %s388, %s404
      %p406 = scmp.eq.s32.totalorder %s31, 0
      %p407 = por %p405, %p406
      %s409 = sadd.s32 %s408, 1
      %p412 = scmp.eq.s32.totalorder %s25, 1
      %p413 = scmp.ne.s32.totalorder %s408, %s410
      %p414 = scmp.eq.s32.totalorder %s25, 0
      %p415 = por %p413, %p414
      %p416 = scmp.ne.s32.totalorder %s408, %s410
      %p417 = scmp.eq.s32.totalorder %s30, 1
      %p418 = por %p416, %p417
      %p419 = scmp.ne.s32.totalorder %s410, %s411
      %p420 = scmp.eq.s32.totalorder %s30, 0
      %p421 = por %p419, %p420
      %p422 = scmp.ne.s32.totalorder %s410, %s411
      %p423 = scmp.eq.s32.totalorder %s31, 1
      %p424 = por %p422, %p423
      %p426 = scmp.ne.s32.totalorder %s411, %s425
      %p427 = scmp.eq.s32.totalorder %s31, 0
      %p428 = por %p426, %p427
      %s430 = sadd.s32 %s429, 1
      %p433 = scmp.eq.s32.totalorder %s25, 1
      %p434 = scmp.ne.s32.totalorder %s429, %s431
      %p435 = scmp.eq.s32.totalorder %s25, 0
      %p436 = por %p434, %p435
      %p437 = scmp.ne.s32.totalorder %s429, %s431
      %p438 = scmp.eq.s32.totalorder %s30, 1
      %p439 = por %p437, %p438
      %p440 = scmp.ne.s32.totalorder %s431, %s432
      %p441 = scmp.eq.s32.totalorder %s30, 0
      %p442 = por %p440, %p441
      %p443 = scmp.ne.s32.totalorder %s431, %s432
      %p444 = scmp.eq.s32.totalorder %s31, 1
      %p445 = por %p443, %p444
      %p447 = scmp.ne.s32.totalorder %s432, %s446
      %p448 = scmp.eq.s32.totalorder %s31, 0
      %p449 = por %p447, %p448
      %s451 = sadd.s32 %s450, 1
      %p454 = scmp.eq.s32.totalorder %s25, 1
      %p455 = scmp.ne.s32.totalorder %s450, %s452
      %p456 = scmp.eq.s32.totalorder %s25, 0
      %p457 = por %p455, %p456
      %p458 = scmp.ne.s32.totalorder %s450, %s452
      %p459 = scmp.eq.s32.totalorder %s30, 1
      %p460 = por %p458, %p459
      %p461 = scmp.ne.s32.totalorder %s452, %s453
      %p462 = scmp.eq.s32.totalorder %s30, 0
      %p463 = por %p461, %p462
      %p464 = scmp.ne.s32.totalorder %s452, %s453
      %p465 = scmp.eq.s32.totalorder %s31, 1
      %p466 = por %p464, %p465
      %p468 = scmp.ne.s32.totalorder %s453, %s467
      %p469 = scmp.eq.s32.totalorder %s31, 0
      %p470 = por %p468, %p469
      %s472 = sadd.s32 %s471, 1
      %p475 = scmp.eq.s32.totalorder %s25, 1
      %p476 = scmp.ne.s32.totalorder %s471, %s473
      %p477 = scmp.eq.s32.totalorder %s25, 0
      %p478 = por %p476, %p477
      %p479 = scmp.ne.s32.totalorder %s471, %s473
      %p480 = scmp.eq.s32.totalorder %s30, 1
      %p481 = por %p479, %p480
      %p482 = scmp.ne.s32.totalorder %s473, %s474
      %p483 = scmp.eq.s32.totalorder %s30, 0
      %p484 = por %p482, %p483
      %p485 = scmp.ne.s32.totalorder %s473, %s474
      %p486 = scmp.eq.s32.totalorder %s31, 1
      %p487 = por %p485, %p486
      %p489 = scmp.ne.s32.totalorder %s474, %s488
      %p490 = scmp.eq.s32.totalorder %s31, 0
      %p491 = por %p489, %p490
      %p492 = scmp.le.s32.totalorder 1, %s25
      %p493 = scmp.lt.s32.totalorder %s25, 3
      %p494 = pnand %p492, %p493
      %p495 = pneg %p494
      // Predicated region
      $region9: #{tpu_custom_call.1} parent=5 // pred_check
        _
      $region10: #{tpu_custom_call.1} parent=5 // pred_check_branch
        %497 = sbr.rel (%p494) target = $region12
      $region11: #{tpu_custom_call.1} parent=5 // pred_region
        %s498 = ssub.s32 %s25, 1
        // Predicated region
        $region13: #{tpu_custom_call.1} parent=11 // pred_check
          %p499 = pneg %p46
        $region14: #{tpu_custom_call.1} parent=11 // pred_check_branch
          %501 = sbr.rel (%p499) target = $region16
        $region15: #{tpu_custom_call.1} parent=11 // pred_region
          _
        $region16: #{tpu_custom_call.1} parent=11 // pred_fallthru
          _
        // Predicated region
        $region17: #{tpu_custom_call.1} parent=11 // pred_check
          %p502 = pneg %p67
        $region18: #{tpu_custom_call.1} parent=11 // pred_check_branch
          %504 = sbr.rel (%p502) target = $region20
        $region19: #{tpu_custom_call.1} parent=11 // pred_region
          _
        $region20: #{tpu_custom_call.1} parent=11 // pred_fallthru
          _
        // Predicated region
        $region21: #{tpu_custom_call.1} parent=11 // pred_check
          %p505 = pneg %p88
        $region22: #{tpu_custom_call.1} parent=11 // pred_check_branch
          %507 = sbr.rel (%p505) target = $region24
        $region23: #{tpu_custom_call.1} parent=11 // pred_region
          _
        $region24: #{tpu_custom_call.1} parent=11 // pred_fallthru
          _
        // Predicated region
        $region25: #{tpu_custom_call.1} parent=11 // pred_check
          %p508 = pneg %p421
        $region26: #{tpu_custom_call.1} parent=11 // pred_check_branch
          %510 = sbr.rel (%p508) target = $region28
        $region27: #{tpu_custom_call.1} parent=11 // pred_region
          _
        $region28: #{tpu_custom_call.1} parent=11 // pred_fallthru
          _
        // Predicated region
        $region29: #{tpu_custom_call.1} parent=11 // pred_check
          %p511 = pneg %p442
        $region30: #{tpu_custom_call.1} parent=11 // pred_check_branch
          %513 = sbr.rel (%p511) target = $region32
        $region31: #{tpu_custom_call.1} parent=11 // pred_region
          _
        $region32: #{tpu_custom_call.1} parent=11 // pred_fallthru
          _
        // Predicated region
        $region33: #{tpu_custom_call.1} parent=11 // pred_check
          %p514 = pneg %p463
        $region34: #{tpu_custom_call.1} parent=11 // pred_check_branch
          %516 = sbr.rel (%p514) target = $region36
        $region35: #{tpu_custom_call.1} parent=11 // pred_region
          _
        $region36: #{tpu_custom_call.1} parent=11 // pred_fallthru
          _
      $region12: #{tpu_custom_call.1} parent=5 // pred_fallthru
        _
      %p517 = scmp.lt.s32.totalorder %s25, 2
      // Predicated region
      $region37: #{tpu_custom_call.1} parent=5 // pred_check
        %p518 = pneg %p517
      $region38: #{tpu_custom_call.1} parent=5 // pred_check_branch
        %520 = sbr.rel (%p518) target = $region40
      $region39: #{tpu_custom_call.1} parent=5 // pred_region
        // Predicated region
        $region41: #{tpu_custom_call.1} parent=39 // pred_check
          %p521 = pneg %p108
        $region42: #{tpu_custom_call.1} parent=39 // pred_check_branch
          %523 = sbr.rel (%p521) target = $region44
        $region43: #{tpu_custom_call.1} parent=39 // pred_region
          %p524 = scmp.lt.s32.totalorder %s25, 1
          %s525 = scalar_select %p524, %s25, 1
          %s526 = scalar_lea.vmem %s3, %s525
        $region44: #{tpu_custom_call.1} parent=39 // pred_fallthru
          _
        // Predicated region
        $region45: #{tpu_custom_call.1} parent=39 // pred_check
          %p527 = pneg %p134
        $region46: #{tpu_custom_call.1} parent=39 // pred_check_branch
          %529 = sbr.rel (%p527) target = $region48
        $region47: #{tpu_custom_call.1} parent=39 // pred_region
          %p530 = scmp.lt.s32.totalorder %s25, 1
          %s531 = scalar_select %p530, %s25, 1
          %s532 = scalar_lea.vmem %s4, %s531
        $region48: #{tpu_custom_call.1} parent=39 // pred_fallthru
          _
        // Predicated region
        $region49: #{tpu_custom_call.1} parent=39 // pred_check
          %p533 = pneg %p160
        $region50: #{tpu_custom_call.1} parent=39 // pred_check_branch
          %535 = sbr.rel (%p533) target = $region52
        $region51: #{tpu_custom_call.1} parent=39 // pred_region
          %p536 = scmp.lt.s32.totalorder %s25, 1
          %s537 = scalar_select %p536, %s25, 1
          %s538 = smul.addr %s537, 4
          %s539 = smul.addr %s538, 8
          %s540 = scalar_lea.vmem %s5, %s539
        $region52: #{tpu_custom_call.1} parent=39 // pred_fallthru
          _
        // Predicated region
        $region53: #{tpu_custom_call.1} parent=39 // pred_check
          %p541 = pneg %p186
        $region54: #{tpu_custom_call.1} parent=39 // pred_check_branch
          %543 = sbr.rel (%p541) target = $region56
        $region55: #{tpu_custom_call.1} parent=39 // pred_region
          %p544 = scmp.lt.s32.totalorder %s25, 1
          %s545 = scalar_select %p544, %s25, 1
          %s546 = scalar_lea.vmem %s6, %s545
        $region56: #{tpu_custom_call.1} parent=39 // pred_fallthru
          _
        // Predicated region
        $region57: #{tpu_custom_call.1} parent=39 // pred_check
          %p547 = pneg %p212
        $region58: #{tpu_custom_call.1} parent=39 // pred_check_branch
          %549 = sbr.rel (%p547) target = $region60
        $region59: #{tpu_custom_call.1} parent=39 // pred_region
          %p550 = scmp.lt.s32.totalorder %s25, 1
          %s551 = scalar_select %p550, %s25, 1
          %s552 = smul.addr %s551, 4
          %s553 = smul.addr %s552, 8
          %s554 = scalar_lea.vmem %s7, %s553
        $region60: #{tpu_custom_call.1} parent=39 // pred_fallthru
          _
        // Predicated region
        $region61: #{tpu_custom_call.1} parent=39 // pred_check
          %p555 = pneg %p238
        $region62: #{tpu_custom_call.1} parent=39 // pred_check_branch
          %557 = sbr.rel (%p555) target = $region64
        $region63: #{tpu_custom_call.1} parent=39 // pred_region
          %p558 = scmp.lt.s32.totalorder %s25, 1
          %s559 = scalar_select %p558, %s25, 1
          %s560 = scalar_lea.vmem %s8, %s559
        $region64: #{tpu_custom_call.1} parent=39 // pred_fallthru
          _
        // Predicated region
        $region65: #{tpu_custom_call.1} parent=39 // pred_check
          %p561 = pneg %p264
        $region66: #{tpu_custom_call.1} parent=39 // pred_check_branch
          %563 = sbr.rel (%p561) target = $region68
        $region67: #{tpu_custom_call.1} parent=39 // pred_region
          %p564 = scmp.lt.s32.totalorder %s25, 1
          %s565 = scalar_select %p564, %s25, 1
          %s566 = scalar_lea.vmem %s9, %s565
        $region68: #{tpu_custom_call.1} parent=39 // pred_fallthru
          _
        // Predicated region
        $region69: #{tpu_custom_call.1} parent=39 // pred_check
          %p567 = pneg %p290
        $region70: #{tpu_custom_call.1} parent=39 // pred_check_branch
          %569 = sbr.rel (%p567) target = $region72
        $region71: #{tpu_custom_call.1} parent=39 // pred_region
          %p570 = scmp.lt.s32.totalorder %s25, 1
          %s571 = scalar_select %p570, %s25, 1
          %s572 = scalar_lea.vmem %s10, %s571
        $region72: #{tpu_custom_call.1} parent=39 // pred_fallthru
          _
        // Predicated region
        $region73: #{tpu_custom_call.1} parent=39 // pred_check
          %p573 = pneg %p316
        $region74: #{tpu_custom_call.1} parent=39 // pred_check_branch
          %575 = sbr.rel (%p573) target = $region76
        $region75: #{tpu_custom_call.1} parent=39 // pred_region
          %p576 = scmp.lt.s32.totalorder %s25, 1
          %s577 = scalar_select %p576, %s25, 1
          %s578 = smul.addr %s577, 4
          %s579 = smul.addr %s578, 8
          %s580 = scalar_lea.vmem %s11, %s579
        $region76: #{tpu_custom_call.1} parent=39 // pred_fallthru
          _
        // Predicated region
        $region77: #{tpu_custom_call.1} parent=39 // pred_check
          %p581 = pneg %p342
        $region78: #{tpu_custom_call.1} parent=39 // pred_check_branch
          %583 = sbr.rel (%p581) target = $region80
        $region79: #{tpu_custom_call.1} parent=39 // pred_region
          %p584 = scmp.lt.s32.totalorder %s25, 1
          %s585 = scalar_select %p584, %s25, 1
          %s586 = scalar_lea.vmem %s12, %s585
        $region80: #{tpu_custom_call.1} parent=39 // pred_fallthru
          _
        // Predicated region
        $region81: #{tpu_custom_call.1} parent=39 // pred_check
          %p587 = pneg %p368
        $region82: #{tpu_custom_call.1} parent=39 // pred_check_branch
          %589 = sbr.rel (%p587) target = $region84
        $region83: #{tpu_custom_call.1} parent=39 // pred_region
          %p590 = scmp.lt.s32.totalorder %s25, 1
          %s591 = scalar_select %p590, %s25, 1
          %s592 = smul.addr %s591, 16
          %s593 = smul.addr %s592, 8
          %s594 = scalar_lea.vmem %s13, %s593
        $region84: #{tpu_custom_call.1} parent=39 // pred_fallthru
          _
        // Predicated region
        $region85: #{tpu_custom_call.1} parent=39 // pred_check
          %p595 = pneg %p394
        $region86: #{tpu_custom_call.1} parent=39 // pred_check_branch
          %597 = sbr.rel (%p595) target = $region88
        $region87: #{tpu_custom_call.1} parent=39 // pred_region
          %p598 = scmp.lt.s32.totalorder %s25, 1
          %s599 = scalar_select %p598, %s25, 1
          %s600 = scalar_lea.vmem %s14, %s599
        $region88: #{tpu_custom_call.1} parent=39 // pred_fallthru
          _
      $region40: #{tpu_custom_call.1} parent=5 // pred_fallthru
        _
      %p601 = scmp.le.s32.totalorder 1, %s25
      %p602 = scmp.lt.s32.totalorder %s25, 3
      %p603 = pnand %p601, %p602
      %p604 = pneg %p603
      // Predicated region
      $region89: #{tpu_custom_call.1} parent=5 // pred_check
        _
      $region90: #{tpu_custom_call.1} parent=5 // pred_check_branch
        %606 = sbr.rel (%p603) target = $region92
      $region91: #{tpu_custom_call.1} parent=5 // pred_region
        %s607 = ssub.s32 %s25, 1
        %p608 = pneg %p46
        %p609 = pneg %p43
        %p610 = pneg %p67
        %p611 = pneg %p64
        %p612 = pneg %p88
        %p613 = pneg %p85
        %p614 = scmp.lt.s32.totalorder %s30, 1
        %s615 = scalar_select %p614, %s30, 1
        %s616 = scalar_lea.vmem %s3, %s615
        %p617 = pneg %p114
        %p618 = pneg %p111
        %p619 = scmp.lt.s32.totalorder %s30, 1
        %s620 = scalar_select %p619, %s30, 1
        %s621 = scalar_lea.vmem %s4, %s620
        %p622 = pneg %p140
        %p623 = pneg %p137
        %p624 = scmp.lt.s32.totalorder %s30, 1
        %s625 = scalar_select %p624, %s30, 1
        %s626 = smul.addr %s625, 4
        %s627 = smul.addr %s626, 8
        %s628 = scalar_lea.vmem %s5, %s627
        %p629 = pneg %p166
        %p630 = pneg %p163
        %p631 = scmp.lt.s32.totalorder %s30, 1
        %s632 = scalar_select %p631, %s30, 1
        %s633 = scalar_lea.vmem %s6, %s632
        %p634 = pneg %p192
        %p635 = pneg %p189
        %p636 = scmp.lt.s32.totalorder %s30, 1
        %s637 = scalar_select %p636, %s30, 1
        %s638 = smul.addr %s637, 4
        %s639 = smul.addr %s638, 8
        %s640 = scalar_lea.vmem %s7, %s639
        %p641 = pneg %p218
        %p642 = pneg %p215
        %p643 = scmp.lt.s32.totalorder %s30, 1
        %s644 = scalar_select %p643, %s30, 1
        %s645 = scalar_lea.vmem %s8, %s644
        %p646 = pneg %p244
        %p647 = pneg %p241
        %p648 = scmp.lt.s32.totalorder %s30, 1
        %s649 = scalar_select %p648, %s30, 1
        %s650 = scalar_lea.vmem %s9, %s649
        %p651 = pneg %p270
        %p652 = pneg %p267
        %p653 = scmp.lt.s32.totalorder %s30, 1
        %s654 = scalar_select %p653, %s30, 1
        %s655 = scalar_lea.vmem %s10, %s654
        %p656 = pneg %p296
        %p657 = pneg %p293
        %p658 = scmp.lt.s32.totalorder %s30, 1
        %s659 = scalar_select %p658, %s30, 1
        %s660 = smul.addr %s659, 4
        %s661 = smul.addr %s660, 8
        %s662 = scalar_lea.vmem %s11, %s661
        %p663 = pneg %p322
        %p664 = pneg %p319
        %p665 = scmp.lt.s32.totalorder %s30, 1
        %s666 = scalar_select %p665, %s30, 1
        %s667 = scalar_lea.vmem %s12, %s666
        %p668 = pneg %p348
        %p669 = pneg %p345
        %p670 = scmp.lt.s32.totalorder %s30, 1
        %s671 = scalar_select %p670, %s30, 1
        %s672 = smul.addr %s671, 16
        %s673 = smul.addr %s672, 8
        %s674 = scalar_lea.vmem %s13, %s673
        %p675 = pneg %p374
        %p676 = pneg %p371
        %p677 = scmp.lt.s32.totalorder %s30, 1
        %s678 = scalar_select %p677, %s30, 1
        %s679 = scalar_lea.vmem %s14, %s678
        %p680 = pneg %p400
        %p681 = pneg %p397
        %p682 = pneg %p421
        %p683 = pneg %p418
        %p684 = pneg %p442
        %p685 = pneg %p439
        %p686 = pneg %p463
        %p687 = pneg %p460
        %p688 = pneg %p484
        %p689 = pneg %p481
        %p690 = scmp.lt.s32.totalorder %s30, 1
        %s691 = scalar_select %p690, %s30, 1
        %s692 = scalar_lea.vmem %s3, %s691
        %p693 = scmp.lt.s32.totalorder %s30, 1
        %s694 = scalar_select %p693, %s30, 1
        %s695 = scalar_lea.vmem %s4, %s694
        %p696 = scmp.lt.s32.totalorder %s30, 1
        %s697 = scalar_select %p696, %s30, 1
        %s698 = smul.addr %s697, 4
        %s699 = smul.addr %s698, 8
        %s700 = scalar_lea.vmem %s5, %s699
        %p701 = scmp.lt.s32.totalorder %s30, 1
        %s702 = scalar_select %p701, %s30, 1
        %s703 = scalar_lea.vmem %s6, %s702
        %p704 = scmp.lt.s32.totalorder %s30, 1
        %s705 = scalar_select %p704, %s30, 1
        %s706 = smul.addr %s705, 4
        %s707 = smul.addr %s706, 8
        %s708 = scalar_lea.vmem %s7, %s707
        %p709 = scmp.lt.s32.totalorder %s30, 1
        %s710 = scalar_select %p709, %s30, 1
        %s711 = scalar_lea.vmem %s8, %s710
        %p712 = scmp.lt.s32.totalorder %s30, 1
        %s713 = scalar_select %p712, %s30, 1
        %s714 = scalar_lea.vmem %s9, %s713
        %p715 = scmp.lt.s32.totalorder %s30, 1
        %s716 = scalar_select %p715, %s30, 1
        %s717 = scalar_lea.vmem %s10, %s716
        %p718 = scmp.lt.s32.totalorder %s30, 1
        %s719 = scalar_select %p718, %s30, 1
        %s720 = smul.addr %s719, 4
        %s721 = smul.addr %s720, 8
        %s722 = scalar_lea.vmem %s11, %s721
        %p723 = scmp.lt.s32.totalorder %s30, 1
        %s724 = scalar_select %p723, %s30, 1
        %s725 = scalar_lea.vmem %s12, %s724
        %p726 = scmp.lt.s32.totalorder %s30, 1
        %s727 = scalar_select %p726, %s30, 1
        %s728 = smul.addr %s727, 16
        %s729 = smul.addr %s728, 8
        %s730 = scalar_lea.vmem %s13, %s729
        %p731 = scmp.lt.s32.totalorder %s30, 1
        %s732 = scalar_select %p731, %s30, 1
        %s733 = scalar_lea.vmem %s14, %s732
        %p734 = scmp.eq.s32.totalorder %s30, 0
        // Predicated region
        $region93: #{tpu_custom_call.1} parent=91 // pred_check
          %p735 = pneg %p734
        $region94: #{tpu_custom_call.1} parent=91 // pred_check_branch
          %737 = sbr.rel (%p735) target = $region96
        $region95: #{tpu_custom_call.1} parent=91 // pred_region
          %v738 = vld [vmem:[%s0] sm:$0xff]
          %v739 = vld [vmem:[%s0 + $0x8] sm:$0xff]
          %v740 = vld [vmem:[%s1] sm:$0xff]
          %v741 = vld [vmem:[%s1 + $0x8] sm:$0xff]
          %v742 = vadd.f32 %v738, %v740
          %v743 = vadd.f32 %v739, %v741
          %vm744 = vcmask 261120
          %745 = vst.msk [vmem:[#allocation2] sm:$0xff] %vm744, %v742
          %746 = vst.msk [vmem:[#allocation2 + $0x8] sm:$0xff] %vm744, %v743
        $region96: #{tpu_custom_call.1} parent=91 // pred_fallthru
          _
        %v747 = vld [vmem:[#allocation2] sm:$0xff]
        %v748 = vld [vmem:[#allocation2 + $0x8] sm:$0xff]
        %v749 = vld [vmem:[%s692] sm:$0x1]
        %v750 = vld [vmem:[%s695] sm:$0x1]
        %vm751 = vcmask 261120
        %v752 = vsel %vm751, %v747, 0.0
        %753 = vadd.xlane.f32.xlu0 %v752
        %v754 = vpop.xlane.xlu0 %753
        %v755 = vsel %vm751, %v748, 0.0
        %756 = vadd.xlane.f32.xlu0 %v755
        %v757 = vpop.xlane.xlu0 %756
        %v758 = vrcp.pop 32.0
        %v759 = vmul.f32 %v754, %v758
        %v760 = vmul.f32 %v757, %v758
        %v761 = vsub.f32 %v747, %v759
        %v762 = vsub.f32 %v748, %v760
        %v763 = vmul.f32 %v761, %v761
        %v764 = vmul.f32 %v762, %v762
        %v765 = vsel %vm751, %v763, 0.0
        %766 = vadd.xlane.f32.xlu0 %v765
        %v767 = vpop.xlane.xlu0 %766
        %v768 = vsel %vm751, %v764, 0.0
        %769 = vadd.xlane.f32.xlu0 %v768
        %v770 = vpop.xlane.xlu0 %769
        %v771 = vmul.f32 %v767, %v758
        %v772 = vmul.f32 %v770, %v758
        %v773 = vadd.f32 %v771, 1e-05
        %v774 = vadd.f32 %v772, 1e-05
        %v775 = vrsqrt.pop %v773
        %v776 = vrsqrt.pop %v774
        %v777 = vmul.f32 %v761, %v775
        %v778 = vmul.f32 %v762, %v776
        %v780 = vlaneseq
        %v781 = vshrl.u32 %v780, 7
        %v782 = vsub.s32 0, %v781
        %v783 = vrot.slane %v749, %v782
        %v785 = vmul.f32 %v777, %v783
        %v786 = vmul.f32 %v778, %v783
        %v788 = vlaneseq
        %v789 = vshrl.u32 %v788, 7
        %v790 = vsub.s32 0, %v789
        %v791 = vrot.slane %v750, %v790
        %v793 = vadd.f32 %v785, %v791
        %v794 = vadd.f32 %v786, %v791
        %v795 = vld [vmem:[%s700] sm:$0xff]
        %v796 = vld [vmem:[%s700 + $0x8] sm:$0xff]
        %v797 = vld [vmem:[%s700 + $0x10] sm:$0xff]
        %v798 = vld [vmem:[%s700 + $0x18] sm:$0xff]
        %v799 = vld [vmem:[%s703] sm:$0x1]
        %v801 = vlaneseq
        %v802 = vshrl.u32 %v801, 7
        %v803 = vsub.s32 0, %v802
        %v804 = vrot.slane %v799, %v803
        %v807 = vsel %vm751, %v793, 0
        %v810 = vsel %vm751, %v794, 0
        %812 = vmatprep.subr.mxu0 0.0
        %813 = vmatpush1.msra.mxu0 0.0
        %814 = vmatprep.subr.mxu0 0.0
        %815 = vmatpush1.msra.mxu0 0.0
        %816 = vmatprep.subr.mxu0 0.0
        %817 = vmatpush1.msra.mxu0 0.0
        %818 = vmatprep.subr.mxu0 0.0
        %819 = vmatpush1.msra.mxu0 0.0
        %820 = vmatprep.subr.mxu0 0.0
        %821 = vmatpush1.msra.mxu0 0.0
        %822 = vmatprep.subr.mxu0 0.0
        %823 = vmatpush1.msra.mxu0 0.0
        %824 = vmatprep.subr.mxu0 0.0
        %825 = vmatpush1.msra.mxu0 0.0
        %826 = vmatprep.subr.mxu0 0.0
        %827 = vmatpush1.msra.mxu0 0.0
        %828 = vmatprep.subr.mxu0 0.0
        %829 = vmatpush1.msra.mxu0 0.0
        %830 = vmatprep.subr.mxu0 0.0
        %831 = vmatpush1.msra.mxu0 0.0
        %832 = vmatprep.subr.mxu0 0.0
        %833 = vmatpush1.msra.mxu0 0.0
        %834 = vmatprep.subr.mxu0 0.0
        %835 = vmatpush1.msra.mxu0 0.0
        %836 = vmatprep.subr.mxu0 0.0
        %837 = vmatpush1.msra.mxu0 %v798
        %838 = vmatprep.subr.mxu0 0.0
        %839 = vmatpush1.msra.mxu0 %v797
        %840 = vmatprep.subr.mxu0 0.0
        %841 = vmatpush1.msra.mxu0 %v796
        %842 = vmatprep.subr.mxu0 0.0
        %843 = vmatpush1.msra.mxu0 %v795
        %844 = vmatprep.subr.mxu0 0.0
        %845 = vmatpush2.msra.mxu0 0.0
        %846 = vmatprep.subr.mxu0 0.0
        %847 = vmatpush2.msra.mxu0 0.0
        %848 = vmatprep.subr.mxu0 0.0
        %849 = vmatpush2.msra.mxu0 0.0
        %850 = vmatprep.subr.mxu0 0.0
        %851 = vmatpush2.msra.mxu0 0.0
        %852 = vmatprep.subr.mxu0 0.0
        %853 = vmatpush2.msra.mxu0 0.0
        %854 = vmatprep.subr.mxu0 0.0
        %855 = vmatpush2.msra.mxu0 0.0
        %856 = vmatprep.subr.mxu0 0.0
        %857 = vmatpush2.msra.mxu0 0.0
        %858 = vmatprep.subr.mxu0 0.0
        %859 = vmatpush2.msra.mxu0 0.0
        %860 = vmatprep.subr.mxu0 0.0
        %861 = vmatpush2.msra.mxu0 0.0
        %862 = vmatprep.subr.mxu0 0.0
        %863 = vmatpush2.msra.mxu0 0.0
        %864 = vmatprep.subr.mxu0 0.0
        %865 = vmatpush2.msra.mxu0 0.0
        %866 = vmatprep.subr.mxu0 0.0
        %867 = vmatpush2.msra.mxu0 0.0
        %868 = vmatprep.subr.mxu0 0.0
        %869 = vmatpush2.msra.mxu0 0.0
        %870 = vmatprep.subr.mxu0 0.0
        %871 = vmatpush2.msra.mxu0 0.0
        %872 = vmatprep.subr.mxu0 0.0
        %873 = vmatpush2.msra.mxu0 0.0
        %874 = vmatprep.subr.mxu0 0.0
        %875 = vmatpush2.msra.mxu0 0.0
        %876 = vmatprep.mubr.f32.mxu0 0.0
        %877 = vmatmul.mubr.f32.gmra.mxu0 %v807
        %v878 = vpop.f32.mrf.mxu0
        %v879 = vadd.f32 %v804, %v878
        %v880 = vpop.f32.mrf.mxu0
        %881 = vmatprep.mubr.f32.mxu0 0.0
        %882 = vmatmul.mubr.f32.gmra.mxu0 %v810
        %v883 = vpop.f32.mrf.mxu0
        %v884 = vadd.f32 %v804, %v883
        %v885 = vpop.f32.mrf.mxu0
        %886 = vdwg.mxu0
        %v887 = vmul.f32 %v879, 0.35355338
        %v888 = vmul.f32 %v884, 0.35355338
        %v889 = vlaneseq
        %v890 = vshrl.u32 %v889, 7
        %v891 = vlaneseq
        %v892 = vand.u32 %v891, 127
        %vm893 = vcmp.gt.s32.totalorder %v892, %v890
        %v894 = vsel %vm893, -1e+30, 0.0
        %896 = vrot.lane.b32.xlu0 %v879, 96
        %v897 = vpop.permute.xlu0 %896
        %vm898 = vcmask 64512
        %v900 = vsel %vm898, %v887, 0
        %v902 = vsel %vm898, %v897, 0
        %904 = vmatprep.subr.mxu0 0.0
        %905 = vmatpush1.xpose.msra.mxu0 0.0
        %906 = vmatprep.subr.mxu0 0.0
        %907 = vmatpush1.xpose.msra.mxu0 0.0
        %908 = vmatprep.subr.mxu0 0.0
        %909 = vmatpush1.xpose.msra.mxu0 0.0
        %910 = vmatprep.subr.mxu0 0.0
        %911 = vmatpush1.xpose.msra.mxu0 0.0
        %912 = vmatprep.subr.mxu0 0.0
        %913 = vmatpush1.xpose.msra.mxu0 0.0
        %914 = vmatprep.subr.mxu0 0.0
        %915 = vmatpush1.xpose.msra.mxu0 0.0
        %916 = vmatprep.subr.mxu0 0.0
        %917 = vmatpush1.xpose.msra.mxu0 0.0
        %918 = vmatprep.subr.mxu0 0.0
        %919 = vmatpush1.xpose.msra.mxu0 0.0
        %920 = vmatprep.subr.mxu0 0.0
        %921 = vmatpush1.xpose.msra.mxu0 0.0
        %922 = vmatprep.subr.mxu0 0.0
        %923 = vmatpush1.xpose.msra.mxu0 0.0
        %924 = vmatprep.subr.mxu0 0.0
        %925 = vmatpush1.xpose.msra.mxu0 0.0
        %926 = vmatprep.subr.mxu0 0.0
        %927 = vmatpush1.xpose.msra.mxu0 0.0
        %928 = vmatprep.subr.mxu0 0.0
        %929 = vmatpush1.xpose.msra.mxu0 0.0
        %930 = vmatprep.subr.mxu0 0.0
        %931 = vmatpush1.xpose.msra.mxu0 0.0
        %932 = vmatprep.subr.mxu0 0.0
        %933 = vmatpush1.xpose.msra.mxu0 0.0
        %934 = vmatprep.subr.mxu0 0.0
        %935 = vmatpush1.xpose.msra.mxu0 %v902
        %936 = vmatprep.subr.mxu0 0.0
        %937 = vmatpush2.xpose.msra.mxu0 0.0
        %938 = vmatprep.subr.mxu0 0.0
        %939 = vmatpush2.xpose.msra.mxu0 0.0
        %940 = vmatprep.subr.mxu0 0.0
        %941 = vmatpush2.xpose.msra.mxu0 0.0
        %942 = vmatprep.subr.mxu0 0.0
        %943 = vmatpush2.xpose.msra.mxu0 0.0
        %944 = vmatprep.subr.mxu0 0.0
        %945 = vmatpush2.xpose.msra.mxu0 0.0
        %946 = vmatprep.subr.mxu0 0.0
        %947 = vmatpush2.xpose.msra.mxu0 0.0
        %948 = vmatprep.subr.mxu0 0.0
        %949 = vmatpush2.xpose.msra.mxu0 0.0
        %950 = vmatprep.subr.mxu0 0.0
        %951 = vmatpush2.xpose.msra.mxu0 0.0
        %952 = vmatprep.subr.mxu0 0.0
        %953 = vmatpush2.xpose.msra.mxu0 0.0
        %954 = vmatprep.subr.mxu0 0.0
        %955 = vmatpush2.xpose.msra.mxu0 0.0
        %956 = vmatprep.subr.mxu0 0.0
        %957 = vmatpush2.xpose.msra.mxu0 0.0
        %958 = vmatprep.subr.mxu0 0.0
        %959 = vmatpush2.xpose.msra.mxu0 0.0
        %960 = vmatprep.subr.mxu0 0.0
        %961 = vmatpush2.xpose.msra.mxu0 0.0
        %962 = vmatprep.subr.mxu0 0.0
        %963 = vmatpush2.xpose.msra.mxu0 0.0
        %964 = vmatprep.subr.mxu0 0.0
        %965 = vmatpush2.xpose.msra.mxu0 0.0
        %966 = vmatprep.subr.mxu0 0.0
        %967 = vmatpush2.xpose.msra.mxu0 0.0
        %968 = vmatprep.mubr.f32.mxu0 0.0
        %969 = vmatmul.mubr.f32.gmra.mxu0 %v900
        %v970 = vpop.f32.mrf.mxu0
        %v971 = vadd.f32 %v894, %v970
        %v972 = vpop.f32.mrf.mxu0
        %973 = vdwg.mxu0
        %v974 = vsel %vm898, %v971, -inf
        %975 = vmax.xlane.f32.xlu0 %v974
        %v976 = vpop.xlane.xlu0 %975
        %v977 = vsub.f32 %v971, %v976
        %v978 = vmul.f32 %v977, 1.442695
        %v979 = vpow.pop %v978
        %v980 = vsel %vm898, %v979, 0.0
        %981 = vadd.xlane.f32.xlu0 %v980
        %v982 = vpop.xlane.xlu0 %981
        %v983 = vrcp.pop %v982
        %v984 = vmul.f32 %v979, %v983
        %985 = vrot.lane.b32.xlu0 %v879, 64
        %v986 = vpop.permute.xlu0 %985
        %v989 = vsel %vm898, %v984, 0
        %991 = vmatprep.subr.mxu0 0.0
        %992 = vmatpush1.msra.mxu0 0.0
        %993 = vmatprep.subr.mxu0 0.0
        %994 = vmatpush1.msra.mxu0 0.0
        %995 = vmatprep.subr.mxu0 0.0
        %996 = vmatpush1.msra.mxu0 0.0
        %997 = vmatprep.subr.mxu0 0.0
        %998 = vmatpush1.msra.mxu0 0.0
        %999 = vmatprep.subr.mxu0 0.0
        %1000 = vmatpush1.msra.mxu0 0.0
        %1001 = vmatprep.subr.mxu0 0.0
        %1002 = vmatpush1.msra.mxu0 0.0
        %1003 = vmatprep.subr.mxu0 0.0
        %1004 = vmatpush1.msra.mxu0 0.0
        %1005 = vmatprep.subr.mxu0 0.0
        %1006 = vmatpush1.msra.mxu0 0.0
        %1007 = vmatprep.subr.mxu0 0.0
        %1008 = vmatpush1.msra.mxu0 0.0
        %1009 = vmatprep.subr.mxu0 0.0
        %1010 = vmatpush1.msra.mxu0 0.0
        %1011 = vmatprep.subr.mxu0 0.0
        %1012 = vmatpush1.msra.mxu0 0.0
        %1013 = vmatprep.subr.mxu0 0.0
        %1014 = vmatpush1.msra.mxu0 0.0
        %1015 = vmatprep.subr.mxu0 0.0
        %1016 = vmatpush1.msra.mxu0 0.0
        %1017 = vmatprep.subr.mxu0 0.0
        %1018 = vmatpush1.msra.mxu0 0.0
        %1019 = vmatprep.subr.mxu0 0.0
        %1020 = vmatpush1.msra.mxu0 0.0
        %1021 = vmatprep.subr.mxu0 0.0
        %1022 = vmatpush1.msra.mxu0 %v986
        %1023 = vmatprep.subr.mxu0 0.0
        %1024 = vmatpush2.msra.mxu0 0.0
        %1025 = vmatprep.subr.mxu0 0.0
        %1026 = vmatpush2.msra.mxu0 0.0
        %1027 = vmatprep.subr.mxu0 0.0
        %1028 = vmatpush2.msra.mxu0 0.0
        %1029 = vmatprep.subr.mxu0 0.0
        %1030 = vmatpush2.msra.mxu0 0.0
        %1031 = vmatprep.subr.mxu0 0.0
        %1032 = vmatpush2.msra.mxu0 0.0
        %1033 = vmatprep.subr.mxu0 0.0
        %1034 = vmatpush2.msra.mxu0 0.0
        %1035 = vmatprep.subr.mxu0 0.0
        %1036 = vmatpush2.msra.mxu0 0.0
        %1037 = vmatprep.subr.mxu0 0.0
        %1038 = vmatpush2.msra.mxu0 0.0
        %1039 = vmatprep.subr.mxu0 0.0
        %1040 = vmatpush2.msra.mxu0 0.0
        %1041 = vmatprep.subr.mxu0 0.0
        %1042 = vmatpush2.msra.mxu0 0.0
        %1043 = vmatprep.subr.mxu0 0.0
        %1044 = vmatpush2.msra.mxu0 0.0
        %1045 = vmatprep.subr.mxu0 0.0
        %1046 = vmatpush2.msra.mxu0 0.0
        %1047 = vmatprep.subr.mxu0 0.0
        %1048 = vmatpush2.msra.mxu0 0.0
        %1049 = vmatprep.subr.mxu0 0.0
        %1050 = vmatpush2.msra.mxu0 0.0
        %1051 = vmatprep.subr.mxu0 0.0
        %1052 = vmatpush2.msra.mxu0 0.0
        %1053 = vmatprep.subr.mxu0 0.0
        %1054 = vmatpush2.msra.mxu0 0.0
        %1055 = vmatprep.mubr.f32.mxu0 0.0
        %1056 = vmatmul.mubr.f32.gmra.mxu0 %v989
        %v1057 = vpop.f32.mrf.mxu0
        %v1058 = vadd.f32 0.0, %v1057
        %v1059 = vpop.f32.mrf.mxu0
        %1060 = vdwg.mxu0
        %1061 = vrot.lane.b32.xlu0 %v887, 120
        %v1062 = vpop.permute.xlu0 %1061
        %1063 = vrot.lane.b32.xlu0 %v879, 88
        %v1064 = vpop.permute.xlu0 %1063
        %v1065 = vsel %vm898, %v1062, 0
        %v1067 = vsel %vm898, %v1064, 0
        %1069 = vmatprep.subr.mxu0 0.0
        %1070 = vmatpush1.xpose.msra.mxu0 0.0
        %1071 = vmatprep.subr.mxu0 0.0
        %1072 = vmatpush1.xpose.msra.mxu0 0.0
        %1073 = vmatprep.subr.mxu0 0.0
        %1074 = vmatpush1.xpose.msra.mxu0 0.0
        %1075 = vmatprep.subr.mxu0 0.0
        %1076 = vmatpush1.xpose.msra.mxu0 0.0
        %1077 = vmatprep.subr.mxu0 0.0
        %1078 = vmatpush1.xpose.msra.mxu0 0.0
        %1079 = vmatprep.subr.mxu0 0.0
        %1080 = vmatpush1.xpose.msra.mxu0 0.0
        %1081 = vmatprep.subr.mxu0 0.0
        %1082 = vmatpush1.xpose.msra.mxu0 0.0
        %1083 = vmatprep.subr.mxu0 0.0
        %1084 = vmatpush1.xpose.msra.mxu0 0.0
        %1085 = vmatprep.subr.mxu0 0.0
        %1086 = vmatpush1.xpose.msra.mxu0 0.0
        %1087 = vmatprep.subr.mxu0 0.0
        %1088 = vmatpush1.xpose.msra.mxu0 0.0
        %1089 = vmatprep.subr.mxu0 0.0
        %1090 = vmatpush1.xpose.msra.mxu0 0.0
        %1091 = vmatprep.subr.mxu0 0.0
        %1092 = vmatpush1.xpose.msra.mxu0 0.0
        %1093 = vmatprep.subr.mxu0 0.0
        %1094 = vmatpush1.xpose.msra.mxu0 0.0
        %1095 = vmatprep.subr.mxu0 0.0
        %1096 = vmatpush1.xpose.msra.mxu0 0.0
        %1097 = vmatprep.subr.mxu0 0.0
        %1098 = vmatpush1.xpose.msra.mxu0 0.0
        %1099 = vmatprep.subr.mxu0 0.0
        %1100 = vmatpush1.xpose.msra.mxu0 %v1067
        %1101 = vmatprep.subr.mxu0 0.0
        %1102 = vmatpush2.xpose.msra.mxu0 0.0
        %1103 = vmatprep.subr.mxu0 0.0
        %1104 = vmatpush2.xpose.msra.mxu0 0.0
        %1105 = vmatprep.subr.mxu0 0.0
        %1106 = vmatpush2.xpose.msra.mxu0 0.0
        %1107 = vmatprep.subr.mxu0 0.0
        %1108 = vmatpush2.xpose.msra.mxu0 0.0
        %1109 = vmatprep.subr.mxu0 0.0
        %1110 = vmatpush2.xpose.msra.mxu0 0.0
        %1111 = vmatprep.subr.mxu0 0.0
        %1112 = vmatpush2.xpose.msra.mxu0 0.0
        %1113 = vmatprep.subr.mxu0 0.0
        %1114 = vmatpush2.xpose.msra.mxu0 0.0
        %1115 = vmatprep.subr.mxu0 0.0
        %1116 = vmatpush2.xpose.msra.mxu0 0.0
        %1117 = vmatprep.subr.mxu0 0.0
        %1118 = vmatpush2.xpose.msra.mxu0 0.0
        %1119 = vmatprep.subr.mxu0 0.0
        %1120 = vmatpush2.xpose.msra.mxu0 0.0
        %1121 = vmatprep.subr.mxu0 0.0
        %1122 = vmatpush2.xpose.msra.mxu0 0.0
        %1123 = vmatprep.subr.mxu0 0.0
        %1124 = vmatpush2.xpose.msra.mxu0 0.0
        %1125 = vmatprep.subr.mxu0 0.0
        %1126 = vmatpush2.xpose.msra.mxu0 0.0
        %1127 = vmatprep.subr.mxu0 0.0
        %1128 = vmatpush2.xpose.msra.mxu0 0.0
        %1129 = vmatprep.subr.mxu0 0.0
        %1130 = vmatpush2.xpose.msra.mxu0 0.0
        %1131 = vmatprep.subr.mxu0 0.0
        %1132 = vmatpush2.xpose.msra.mxu0 0.0
        %1133 = vmatprep.mubr.f32.mxu0 0.0
        %1134 = vmatmul.mubr.f32.gmra.mxu0 %v1065
        %v1135 = vpop.f32.mrf.mxu0
        %v1136 = vadd.f32 %v894, %v1135
        %v1137 = vpop.f32.mrf.mxu0
        %1138 = vdwg.mxu0
        %v1139 = vsel %vm898, %v1136, -inf
        %1140 = vmax.xlane.f32.xlu0 %v1139
        %v1141 = vpop.xlane.xlu0 %1140
        %v1142 = vsub.f32 %v1136, %v1141
        %v1143 = vmul.f32 %v1142, 1.442695
        %v1144 = vpow.pop %v1143
        %v1145 = vsel %vm898, %v1144, 0.0
        %1146 = vadd.xlane.f32.xlu0 %v1145
        %v1147 = vpop.xlane.xlu0 %1146
        %v1148 = vrcp.pop %v1147
        %v1149 = vmul.f32 %v1144, %v1148
        %1150 = vrot.lane.b32.xlu0 %v879, 56
        %v1151 = vpop.permute.xlu0 %1150
        %v1154 = vsel %vm898, %v1149, 0
        %1156 = vmatprep.subr.mxu0 0.0
        %1157 = vmatpush1.msra.mxu0 0.0
        %1158 = vmatprep.subr.mxu0 0.0
        %1159 = vmatpush1.msra.mxu0 0.0
        %1160 = vmatprep.subr.mxu0 0.0
        %1161 = vmatpush1.msra.mxu0 0.0
        %1162 = vmatprep.subr.mxu0 0.0
        %1163 = vmatpush1.msra.mxu0 0.0
        %1164 = vmatprep.subr.mxu0 0.0
        %1165 = vmatpush1.msra.mxu0 0.0
        %1166 = vmatprep.subr.mxu0 0.0
        %1167 = vmatpush1.msra.mxu0 0.0
        %1168 = vmatprep.subr.mxu0 0.0
        %1169 = vmatpush1.msra.mxu0 0.0
        %1170 = vmatprep.subr.mxu0 0.0
        %1171 = vmatpush1.msra.mxu0 0.0
        %1172 = vmatprep.subr.mxu0 0.0
        %1173 = vmatpush1.msra.mxu0 0.0
        %1174 = vmatprep.subr.mxu0 0.0
        %1175 = vmatpush1.msra.mxu0 0.0
        %1176 = vmatprep.subr.mxu0 0.0
        %1177 = vmatpush1.msra.mxu0 0.0
        %1178 = vmatprep.subr.mxu0 0.0
        %1179 = vmatpush1.msra.mxu0 0.0
        %1180 = vmatprep.subr.mxu0 0.0
        %1181 = vmatpush1.msra.mxu0 0.0
        %1182 = vmatprep.subr.mxu0 0.0
        %1183 = vmatpush1.msra.mxu0 0.0
        %1184 = vmatprep.subr.mxu0 0.0
        %1185 = vmatpush1.msra.mxu0 0.0
        %1186 = vmatprep.subr.mxu0 0.0
        %1187 = vmatpush1.msra.mxu0 %v1151
        %1188 = vmatprep.subr.mxu0 0.0
        %1189 = vmatpush2.msra.mxu0 0.0
        %1190 = vmatprep.subr.mxu0 0.0
        %1191 = vmatpush2.msra.mxu0 0.0
        %1192 = vmatprep.subr.mxu0 0.0
        %1193 = vmatpush2.msra.mxu0 0.0
        %1194 = vmatprep.subr.mxu0 0.0
        %1195 = vmatpush2.msra.mxu0 0.0
        %1196 = vmatprep.subr.mxu0 0.0
        %1197 = vmatpush2.msra.mxu0 0.0
        %1198 = vmatprep.subr.mxu0 0.0
        %1199 = vmatpush2.msra.mxu0 0.0
        %1200 = vmatprep.subr.mxu0 0.0
        %1201 = vmatpush2.msra.mxu0 0.0
        %1202 = vmatprep.subr.mxu0 0.0
        %1203 = vmatpush2.msra.mxu0 0.0
        %1204 = vmatprep.subr.mxu0 0.0
        %1205 = vmatpush2.msra.mxu0 0.0
        %1206 = vmatprep.subr.mxu0 0.0
        %1207 = vmatpush2.msra.mxu0 0.0
        %1208 = vmatprep.subr.mxu0 0.0
        %1209 = vmatpush2.msra.mxu0 0.0
        %1210 = vmatprep.subr.mxu0 0.0
        %1211 = vmatpush2.msra.mxu0 0.0
        %1212 = vmatprep.subr.mxu0 0.0
        %1213 = vmatpush2.msra.mxu0 0.0
        %1214 = vmatprep.subr.mxu0 0.0
        %1215 = vmatpush2.msra.mxu0 0.0
        %1216 = vmatprep.subr.mxu0 0.0
        %1217 = vmatpush2.msra.mxu0 0.0
        %1218 = vmatprep.subr.mxu0 0.0
        %1219 = vmatpush2.msra.mxu0 0.0
        %1220 = vmatprep.mubr.f32.mxu0 0.0
        %1221 = vmatmul.mubr.f32.gmra.mxu0 %v1154
        %v1222 = vpop.f32.mrf.mxu0
        %v1223 = vadd.f32 0.0, %v1222
        %v1224 = vpop.f32.mrf.mxu0
        %1225 = vdwg.mxu0
        %1226 = vrot.lane.b32.xlu0 %v887, 112
        %v1227 = vpop.permute.xlu0 %1226
        %1228 = vrot.lane.b32.xlu0 %v879, 80
        %v1229 = vpop.permute.xlu0 %1228
        %v1230 = vsel %vm898, %v1227, 0
        %v1232 = vsel %vm898, %v1229, 0
        %1234 = vmatprep.subr.mxu0 0.0
        %1235 = vmatpush1.xpose.msra.mxu0 0.0
        %1236 = vmatprep.subr.mxu0 0.0
        %1237 = vmatpush1.xpose.msra.mxu0 0.0
        %1238 = vmatprep.subr.mxu0 0.0
        %1239 = vmatpush1.xpose.msra.mxu0 0.0
        %1240 = vmatprep.subr.mxu0 0.0
        %1241 = vmatpush1.xpose.msra.mxu0 0.0
        %1242 = vmatprep.subr.mxu0 0.0
        %1243 = vmatpush1.xpose.msra.mxu0 0.0
        %1244 = vmatprep.subr.mxu0 0.0
        %1245 = vmatpush1.xpose.msra.mxu0 0.0
        %1246 = vmatprep.subr.mxu0 0.0
        %1247 = vmatpush1.xpose.msra.mxu0 0.0
        %1248 = vmatprep.subr.mxu0 0.0
        %1249 = vmatpush1.xpose.msra.mxu0 0.0
        %1250 = vmatprep.subr.mxu0 0.0
        %1251 = vmatpush1.xpose.msra.mxu0 0.0
        %1252 = vmatprep.subr.mxu0 0.0
        %1253 = vmatpush1.xpose.msra.mxu0 0.0
        %1254 = vmatprep.subr.mxu0 0.0
        %1255 = vmatpush1.xpose.msra.mxu0 0.0
        %1256 = vmatprep.subr.mxu0 0.0
        %1257 = vmatpush1.xpose.msra.mxu0 0.0
        %1258 = vmatprep.subr.mxu0 0.0
        %1259 = vmatpush1.xpose.msra.mxu0 0.0
        %1260 = vmatprep.subr.mxu0 0.0
        %1261 = vmatpush1.xpose.msra.mxu0 0.0
        %1262 = vmatprep.subr.mxu0 0.0
        %1263 = vmatpush1.xpose.msra.mxu0 0.0
        %1264 = vmatprep.subr.mxu0 0.0
        %1265 = vmatpush1.xpose.msra.mxu0 %v1232
        %1266 = vmatprep.subr.mxu0 0.0
        %1267 = vmatpush2.xpose.msra.mxu0 0.0
        %1268 = vmatprep.subr.mxu0 0.0
        %1269 = vmatpush2.xpose.msra.mxu0 0.0
        %1270 = vmatprep.subr.mxu0 0.0
        %1271 = vmatpush2.xpose.msra.mxu0 0.0
        %1272 = vmatprep.subr.mxu0 0.0
        %1273 = vmatpush2.xpose.msra.mxu0 0.0
        %1274 = vmatprep.subr.mxu0 0.0
        %1275 = vmatpush2.xpose.msra.mxu0 0.0
        %1276 = vmatprep.subr.mxu0 0.0
        %1277 = vmatpush2.xpose.msra.mxu0 0.0
        %1278 = vmatprep.subr.mxu0 0.0
        %1279 = vmatpush2.xpose.msra.mxu0 0.0
        %1280 = vmatprep.subr.mxu0 0.0
        %1281 = vmatpush2.xpose.msra.mxu0 0.0
        %1282 = vmatprep.subr.mxu0 0.0
        %1283 = vmatpush2.xpose.msra.mxu0 0.0
        %1284 = vmatprep.subr.mxu0 0.0
        %1285 = vmatpush2.xpose.msra.mxu0 0.0
        %1286 = vmatprep.subr.mxu0 0.0
        %1287 = vmatpush2.xpose.msra.mxu0 0.0
        %1288 = vmatprep.subr.mxu0 0.0
        %1289 = vmatpush2.xpose.msra.mxu0 0.0
        %1290 = vmatprep.subr.mxu0 0.0
        %1291 = vmatpush2.xpose.msra.mxu0 0.0
        %1292 = vmatprep.subr.mxu0 0.0
        %1293 = vmatpush2.xpose.msra.mxu0 0.0
        %1294 = vmatprep.subr.mxu0 0.0
        %1295 = vmatpush2.xpose.msra.mxu0 0.0
        %1296 = vmatprep.subr.mxu0 0.0
        %1297 = vmatpush2.xpose.msra.mxu0 0.0
        %1298 = vmatprep.mubr.f32.mxu0 0.0
        %1299 = vmatmul.mubr.f32.gmra.mxu0 %v1230
        %v1300 = vpop.f32.mrf.mxu0
        %v1301 = vadd.f32 %v894, %v1300
        %v1302 = vpop.f32.mrf.mxu0
        %1303 = vdwg.mxu0
        %v1304 = vsel %vm898, %v1301, -inf
        %1305 = vmax.xlane.f32.xlu0 %v1304
        %v1306 = vpop.xlane.xlu0 %1305
        %v1307 = vsub.f32 %v1301, %v1306
        %v1308 = vmul.f32 %v1307, 1.442695
        %v1309 = vpow.pop %v1308
        %v1310 = vsel %vm898, %v1309, 0.0
        %1311 = vadd.xlane.f32.xlu0 %v1310
        %v1312 = vpop.xlane.xlu0 %1311
        %v1313 = vrcp.pop %v1312
        %v1314 = vmul.f32 %v1309, %v1313
        %1315 = vrot.lane.b32.xlu0 %v879, 48
        %v1316 = vpop.permute.xlu0 %1315
        %v1319 = vsel %vm898, %v1314, 0
        %1321 = vmatprep.subr.mxu0 0.0
        %1322 = vmatpush1.msra.mxu0 0.0
        %1323 = vmatprep.subr.mxu0 0.0
        %1324 = vmatpush1.msra.mxu0 0.0
        %1325 = vmatprep.subr.mxu0 0.0
        %1326 = vmatpush1.msra.mxu0 0.0
        %1327 = vmatprep.subr.mxu0 0.0
        %1328 = vmatpush1.msra.mxu0 0.0
        %1329 = vmatprep.subr.mxu0 0.0
        %1330 = vmatpush1.msra.mxu0 0.0
        %1331 = vmatprep.subr.mxu0 0.0
        %1332 = vmatpush1.msra.mxu0 0.0
        %1333 = vmatprep.subr.mxu0 0.0
        %1334 = vmatpush1.msra.mxu0 0.0
        %1335 = vmatprep.subr.mxu0 0.0
        %1336 = vmatpush1.msra.mxu0 0.0
        %1337 = vmatprep.subr.mxu0 0.0
        %1338 = vmatpush1.msra.mxu0 0.0
        %1339 = vmatprep.subr.mxu0 0.0
        %1340 = vmatpush1.msra.mxu0 0.0
        %1341 = vmatprep.subr.mxu0 0.0
        %1342 = vmatpush1.msra.mxu0 0.0
        %1343 = vmatprep.subr.mxu0 0.0
        %1344 = vmatpush1.msra.mxu0 0.0
        %1345 = vmatprep.subr.mxu0 0.0
        %1346 = vmatpush1.msra.mxu0 0.0
        %1347 = vmatprep.subr.mxu0 0.0
        %1348 = vmatpush1.msra.mxu0 0.0
        %1349 = vmatprep.subr.mxu0 0.0
        %1350 = vmatpush1.msra.mxu0 0.0
        %1351 = vmatprep.subr.mxu0 0.0
        %1352 = vmatpush1.msra.mxu0 %v1316
        %1353 = vmatprep.subr.mxu0 0.0
        %1354 = vmatpush2.msra.mxu0 0.0
        %1355 = vmatprep.subr.mxu0 0.0
        %1356 = vmatpush2.msra.mxu0 0.0
        %1357 = vmatprep.subr.mxu0 0.0
        %1358 = vmatpush2.msra.mxu0 0.0
        %1359 = vmatprep.subr.mxu0 0.0
        %1360 = vmatpush2.msra.mxu0 0.0
        %1361 = vmatprep.subr.mxu0 0.0
        %1362 = vmatpush2.msra.mxu0 0.0
        %1363 = vmatprep.subr.mxu0 0.0
        %1364 = vmatpush2.msra.mxu0 0.0
        %1365 = vmatprep.subr.mxu0 0.0
        %1366 = vmatpush2.msra.mxu0 0.0
        %1367 = vmatprep.subr.mxu0 0.0
        %1368 = vmatpush2.msra.mxu0 0.0
        %1369 = vmatprep.subr.mxu0 0.0
        %1370 = vmatpush2.msra.mxu0 0.0
        %1371 = vmatprep.subr.mxu0 0.0
        %1372 = vmatpush2.msra.mxu0 0.0
        %1373 = vmatprep.subr.mxu0 0.0
        %1374 = vmatpush2.msra.mxu0 0.0
        %1375 = vmatprep.subr.mxu0 0.0
        %1376 = vmatpush2.msra.mxu0 0.0
        %1377 = vmatprep.subr.mxu0 0.0
        %1378 = vmatpush2.msra.mxu0 0.0
        %1379 = vmatprep.subr.mxu0 0.0
        %1380 = vmatpush2.msra.mxu0 0.0
        %1381 = vmatprep.subr.mxu0 0.0
        %1382 = vmatpush2.msra.mxu0 0.0
        %1383 = vmatprep.subr.mxu0 0.0
        %1384 = vmatpush2.msra.mxu0 0.0
        %1385 = vmatprep.mubr.f32.mxu0 0.0
        %1386 = vmatmul.mubr.f32.gmra.mxu0 %v1319
        %v1387 = vpop.f32.mrf.mxu0
        %v1388 = vadd.f32 0.0, %v1387
        %v1389 = vpop.f32.mrf.mxu0
        %1390 = vdwg.mxu0
        %1391 = vrot.lane.b32.xlu0 %v887, 104
        %v1392 = vpop.permute.xlu0 %1391
        %1393 = vrot.lane.b32.xlu0 %v879, 72
        %v1394 = vpop.permute.xlu0 %1393
        %v1395 = vsel %vm898, %v1392, 0
        %v1397 = vsel %vm898, %v1394, 0
        %1399 = vmatprep.subr.mxu0 0.0
        %1400 = vmatpush1.xpose.msra.mxu0 0.0
        %1401 = vmatprep.subr.mxu0 0.0
        %1402 = vmatpush1.xpose.msra.mxu0 0.0
        %1403 = vmatprep.subr.mxu0 0.0
        %1404 = vmatpush1.xpose.msra.mxu0 0.0
        %1405 = vmatprep.subr.mxu0 0.0
        %1406 = vmatpush1.xpose.msra.mxu0 0.0
        %1407 = vmatprep.subr.mxu0 0.0
        %1408 = vmatpush1.xpose.msra.mxu0 0.0
        %1409 = vmatprep.subr.mxu0 0.0
        %1410 = vmatpush1.xpose.msra.mxu0 0.0
        %1411 = vmatprep.subr.mxu0 0.0
        %1412 = vmatpush1.xpose.msra.mxu0 0.0
        %1413 = vmatprep.subr.mxu0 0.0
        %1414 = vmatpush1.xpose.msra.mxu0 0.0
        %1415 = vmatprep.subr.mxu0 0.0
        %1416 = vmatpush1.xpose.msra.mxu0 0.0
        %1417 = vmatprep.subr.mxu0 0.0
        %1418 = vmatpush1.xpose.msra.mxu0 0.0
        %1419 = vmatprep.subr.mxu0 0.0
        %1420 = vmatpush1.xpose.msra.mxu0 0.0
        %1421 = vmatprep.subr.mxu0 0.0
        %1422 = vmatpush1.xpose.msra.mxu0 0.0
        %1423 = vmatprep.subr.mxu0 0.0
        %1424 = vmatpush1.xpose.msra.mxu0 0.0
        %1425 = vmatprep.subr.mxu0 0.0
        %1426 = vmatpush1.xpose.msra.mxu0 0.0
        %1427 = vmatprep.subr.mxu0 0.0
        %1428 = vmatpush1.xpose.msra.mxu0 0.0
        %1429 = vmatprep.subr.mxu0 0.0
        %1430 = vmatpush1.xpose.msra.mxu0 %v1397
        %1431 = vmatprep.subr.mxu0 0.0
        %1432 = vmatpush2.xpose.msra.mxu0 0.0
        %1433 = vmatprep.subr.mxu0 0.0
        %1434 = vmatpush2.xpose.msra.mxu0 0.0
        %1435 = vmatprep.subr.mxu0 0.0
        %1436 = vmatpush2.xpose.msra.mxu0 0.0
        %1437 = vmatprep.subr.mxu0 0.0
        %1438 = vmatpush2.xpose.msra.mxu0 0.0
        %1439 = vmatprep.subr.mxu0 0.0
        %1440 = vmatpush2.xpose.msra.mxu0 0.0
        %1441 = vmatprep.subr.mxu0 0.0
        %1442 = vmatpush2.xpose.msra.mxu0 0.0
        %1443 = vmatprep.subr.mxu0 0.0
        %1444 = vmatpush2.xpose.msra.mxu0 0.0
        %1445 = vmatprep.subr.mxu0 0.0
        %1446 = vmatpush2.xpose.msra.mxu0 0.0
        %1447 = vmatprep.subr.mxu0 0.0
        %1448 = vmatpush2.xpose.msra.mxu0 0.0
        %1449 = vmatprep.subr.mxu0 0.0
        %1450 = vmatpush2.xpose.msra.mxu0 0.0
        %1451 = vmatprep.subr.mxu0 0.0
        %1452 = vmatpush2.xpose.msra.mxu0 0.0
        %1453 = vmatprep.subr.mxu0 0.0
        %1454 = vmatpush2.xpose.msra.mxu0 0.0
        %1455 = vmatprep.subr.mxu0 0.0
        %1456 = vmatpush2.xpose.msra.mxu0 0.0
        %1457 = vmatprep.subr.mxu0 0.0
        %1458 = vmatpush2.xpose.msra.mxu0 0.0
        %1459 = vmatprep.subr.mxu0 0.0
        %1460 = vmatpush2.xpose.msra.mxu0 0.0
        %1461 = vmatprep.subr.mxu0 0.0
        %1462 = vmatpush2.xpose.msra.mxu0 0.0
        %1463 = vmatprep.mubr.f32.mxu0 0.0
        %1464 = vmatmul.mubr.f32.gmra.mxu0 %v1395
        %v1465 = vpop.f32.mrf.mxu0
        %v1466 = vadd.f32 %v894, %v1465
        %v1467 = vpop.f32.mrf.mxu0
        %1468 = vdwg.mxu0
        %v1469 = vsel %vm898, %v1466, -inf
        %1470 = vmax.xlane.f32.xlu0 %v1469
        %v1471 = vpop.xlane.xlu0 %1470
        %v1472 = vsub.f32 %v1466, %v1471
        %v1473 = vmul.f32 %v1472, 1.442695
        %v1474 = vpow.pop %v1473
        %v1475 = vsel %vm898, %v1474, 0.0
        %1476 = vadd.xlane.f32.xlu0 %v1475
        %v1477 = vpop.xlane.xlu0 %1476
        %v1478 = vrcp.pop %v1477
        %v1479 = vmul.f32 %v1474, %v1478
        %1480 = vrot.lane.b32.xlu0 %v879, 40
        %v1481 = vpop.permute.xlu0 %1480
        %v1484 = vsel %vm898, %v1479, 0
        %1486 = vmatprep.subr.mxu0 0.0
        %1487 = vmatpush1.msra.mxu0 0.0
        %1488 = vmatprep.subr.mxu0 0.0
        %1489 = vmatpush1.msra.mxu0 0.0
        %1490 = vmatprep.subr.mxu0 0.0
        %1491 = vmatpush1.msra.mxu0 0.0
        %1492 = vmatprep.subr.mxu0 0.0
        %1493 = vmatpush1.msra.mxu0 0.0
        %1494 = vmatprep.subr.mxu0 0.0
        %1495 = vmatpush1.msra.mxu0 0.0
        %1496 = vmatprep.subr.mxu0 0.0
        %1497 = vmatpush1.msra.mxu0 0.0
        %1498 = vmatprep.subr.mxu0 0.0
        %1499 = vmatpush1.msra.mxu0 0.0
        %1500 = vmatprep.subr.mxu0 0.0
        %1501 = vmatpush1.msra.mxu0 0.0
        %1502 = vmatprep.subr.mxu0 0.0
        %1503 = vmatpush1.msra.mxu0 0.0
        %1504 = vmatprep.subr.mxu0 0.0
        %1505 = vmatpush1.msra.mxu0 0.0
        %1506 = vmatprep.subr.mxu0 0.0
        %1507 = vmatpush1.msra.mxu0 0.0
        %1508 = vmatprep.subr.mxu0 0.0
        %1509 = vmatpush1.msra.mxu0 0.0
        %1510 = vmatprep.subr.mxu0 0.0
        %1511 = vmatpush1.msra.mxu0 0.0
        %1512 = vmatprep.subr.mxu0 0.0
        %1513 = vmatpush1.msra.mxu0 0.0
        %1514 = vmatprep.subr.mxu0 0.0
        %1515 = vmatpush1.msra.mxu0 0.0
        %1516 = vmatprep.subr.mxu0 0.0
        %1517 = vmatpush1.msra.mxu0 %v1481
        %1518 = vmatprep.subr.mxu0 0.0
        %1519 = vmatpush2.msra.mxu0 0.0
        %1520 = vmatprep.subr.mxu0 0.0
        %1521 = vmatpush2.msra.mxu0 0.0
        %1522 = vmatprep.subr.mxu0 0.0
        %1523 = vmatpush2.msra.mxu0 0.0
        %1524 = vmatprep.subr.mxu0 0.0
        %1525 = vmatpush2.msra.mxu0 0.0
        %1526 = vmatprep.subr.mxu0 0.0
        %1527 = vmatpush2.msra.mxu0 0.0
        %1528 = vmatprep.subr.mxu0 0.0
        %1529 = vmatpush2.msra.mxu0 0.0
        %1530 = vmatprep.subr.mxu0 0.0
        %1531 = vmatpush2.msra.mxu0 0.0
        %1532 = vmatprep.subr.mxu0 0.0
        %1533 = vmatpush2.msra.mxu0 0.0
        %1534 = vmatprep.subr.mxu0 0.0
        %1535 = vmatpush2.msra.mxu0 0.0
        %1536 = vmatprep.subr.mxu0 0.0
        %1537 = vmatpush2.msra.mxu0 0.0
        %1538 = vmatprep.subr.mxu0 0.0
        %1539 = vmatpush2.msra.mxu0 0.0
        %1540 = vmatprep.subr.mxu0 0.0
        %1541 = vmatpush2.msra.mxu0 0.0
        %1542 = vmatprep.subr.mxu0 0.0
        %1543 = vmatpush2.msra.mxu0 0.0
        %1544 = vmatprep.subr.mxu0 0.0
        %1545 = vmatpush2.msra.mxu0 0.0
        %1546 = vmatprep.subr.mxu0 0.0
        %1547 = vmatpush2.msra.mxu0 0.0
        %1548 = vmatprep.subr.mxu0 0.0
        %1549 = vmatpush2.msra.mxu0 0.0
        %1550 = vmatprep.mubr.f32.mxu0 0.0
        %1551 = vmatmul.mubr.f32.gmra.mxu0 %v1484
        %v1552 = vpop.f32.mrf.mxu0
        %v1553 = vadd.f32 0.0, %v1552
        %v1554 = vpop.f32.mrf.mxu0
        %1555 = vdwg.mxu0
        %1557 = vrot.lane.b32.xlu0 %v1223, 8
        %v1558 = vpop.permute.xlu0 %1557
        %1561 = vrot.lane.b32.xlu0 %v1388, 16
        %v1562 = vpop.permute.xlu0 %1561
        %1565 = vrot.lane.b32.xlu0 %v1553, 24
        %v1566 = vpop.permute.xlu0 %1565
        %v1568 = vsel %vm898, %v1058, %v1558
        %vm1569 = vcmask 130048
        %v1570 = vsel %vm1569, %v1568, %v1562
        %vm1571 = vcmask 195584
        %v1572 = vsel %vm1571, %v1570, %v1566
        %1574 = vrot.lane.b32.xlu0 %v884, 96
        %v1575 = vpop.permute.xlu0 %1574
        %v1577 = vsel %vm898, %v888, 0
        %v1579 = vsel %vm898, %v1575, 0
        %1581 = vmatprep.subr.mxu0 0.0
        %1582 = vmatpush1.xpose.msra.mxu0 0.0
        %1583 = vmatprep.subr.mxu0 0.0
        %1584 = vmatpush1.xpose.msra.mxu0 0.0
        %1585 = vmatprep.subr.mxu0 0.0
        %1586 = vmatpush1.xpose.msra.mxu0 0.0
        %1587 = vmatprep.subr.mxu0 0.0
        %1588 = vmatpush1.xpose.msra.mxu0 0.0
        %1589 = vmatprep.subr.mxu0 0.0
        %1590 = vmatpush1.xpose.msra.mxu0 0.0
        %1591 = vmatprep.subr.mxu0 0.0
        %1592 = vmatpush1.xpose.msra.mxu0 0.0
        %1593 = vmatprep.subr.mxu0 0.0
        %1594 = vmatpush1.xpose.msra.mxu0 0.0
        %1595 = vmatprep.subr.mxu0 0.0
        %1596 = vmatpush1.xpose.msra.mxu0 0.0
        %1597 = vmatprep.subr.mxu0 0.0
        %1598 = vmatpush1.xpose.msra.mxu0 0.0
        %1599 = vmatprep.subr.mxu0 0.0
        %1600 = vmatpush1.xpose.msra.mxu0 0.0
        %1601 = vmatprep.subr.mxu0 0.0
        %1602 = vmatpush1.xpose.msra.mxu0 0.0
        %1603 = vmatprep.subr.mxu0 0.0
        %1604 = vmatpush1.xpose.msra.mxu0 0.0
        %1605 = vmatprep.subr.mxu0 0.0
        %1606 = vmatpush1.xpose.msra.mxu0 0.0
        %1607 = vmatprep.subr.mxu0 0.0
        %1608 = vmatpush1.xpose.msra.mxu0 0.0
        %1609 = vmatprep.subr.mxu0 0.0
        %1610 = vmatpush1.xpose.msra.mxu0 0.0
        %1611 = vmatprep.subr.mxu0 0.0
        %1612 = vmatpush1.xpose.msra.mxu0 %v1579
        %1613 = vmatprep.subr.mxu0 0.0
        %1614 = vmatpush2.xpose.msra.mxu0 0.0
        %1615 = vmatprep.subr.mxu0 0.0
        %1616 = vmatpush2.xpose.msra.mxu0 0.0
        %1617 = vmatprep.subr.mxu0 0.0
        %1618 = vmatpush2.xpose.msra.mxu0 0.0
        %1619 = vmatprep.subr.mxu0 0.0
        %1620 = vmatpush2.xpose.msra.mxu0 0.0
        %1621 = vmatprep.subr.mxu0 0.0
        %1622 = vmatpush2.xpose.msra.mxu0 0.0
        %1623 = vmatprep.subr.mxu0 0.0
        %1624 = vmatpush2.xpose.msra.mxu0 0.0
        %1625 = vmatprep.subr.mxu0 0.0
        %1626 = vmatpush2.xpose.msra.mxu0 0.0
        %1627 = vmatprep.subr.mxu0 0.0
        %1628 = vmatpush2.xpose.msra.mxu0 0.0
        %1629 = vmatprep.subr.mxu0 0.0
        %1630 = vmatpush2.xpose.msra.mxu0 0.0
        %1631 = vmatprep.subr.mxu0 0.0
        %1632 = vmatpush2.xpose.msra.mxu0 0.0
        %1633 = vmatprep.subr.mxu0 0.0
        %1634 = vmatpush2.xpose.msra.mxu0 0.0
        %1635 = vmatprep.subr.mxu0 0.0
        %1636 = vmatpush2.xpose.msra.mxu0 0.0
        %1637 = vmatprep.subr.mxu0 0.0
        %1638 = vmatpush2.xpose.msra.mxu0 0.0
        %1639 = vmatprep.subr.mxu0 0.0
        %1640 = vmatpush2.xpose.msra.mxu0 0.0
        %1641 = vmatprep.subr.mxu0 0.0
        %1642 = vmatpush2.xpose.msra.mxu0 0.0
        %1643 = vmatprep.subr.mxu0 0.0
        %1644 = vmatpush2.xpose.msra.mxu0 0.0
        %1645 = vmatprep.mubr.f32.mxu0 0.0
        %1646 = vmatmul.mubr.f32.gmra.mxu0 %v1577
        %v1647 = vpop.f32.mrf.mxu0
        %v1648 = vadd.f32 %v894, %v1647
        %v1649 = vpop.f32.mrf.mxu0
        %1650 = vdwg.mxu0
        %v1651 = vsel %vm898, %v1648, -inf
        %1652 = vmax.xlane.f32.xlu0 %v1651
        %v1653 = vpop.xlane.xlu0 %1652
        %v1654 = vsub.f32 %v1648, %v1653
        %v1655 = vmul.f32 %v1654, 1.442695
        %v1656 = vpow.pop %v1655
        %v1657 = vsel %vm898, %v1656, 0.0
        %1658 = vadd.xlane.f32.xlu0 %v1657
        %v1659 = vpop.xlane.xlu0 %1658
        %v1660 = vrcp.pop %v1659
        %v1661 = vmul.f32 %v1656, %v1660
        %1662 = vrot.lane.b32.xlu0 %v884, 64
        %v1663 = vpop.permute.xlu0 %1662
        %v1666 = vsel %vm898, %v1661, 0
        %1668 = vmatprep.subr.mxu0 0.0
        %1669 = vmatpush1.msra.mxu0 0.0
        %1670 = vmatprep.subr.mxu0 0.0
        %1671 = vmatpush1.msra.mxu0 0.0
        %1672 = vmatprep.subr.mxu0 0.0
        %1673 = vmatpush1.msra.mxu0 0.0
        %1674 = vmatprep.subr.mxu0 0.0
        %1675 = vmatpush1.msra.mxu0 0.0
        %1676 = vmatprep.subr.mxu0 0.0
        %1677 = vmatpush1.msra.mxu0 0.0
        %1678 = vmatprep.subr.mxu0 0.0
        %1679 = vmatpush1.msra.mxu0 0.0
        %1680 = vmatprep.subr.mxu0 0.0
        %1681 = vmatpush1.msra.mxu0 0.0
        %1682 = vmatprep.subr.mxu0 0.0
        %1683 = vmatpush1.msra.mxu0 0.0
        %1684 = vmatprep.subr.mxu0 0.0
        %1685 = vmatpush1.msra.mxu0 0.0
        %1686 = vmatprep.subr.mxu0 0.0
        %1687 = vmatpush1.msra.mxu0 0.0
        %1688 = vmatprep.subr.mxu0 0.0
        %1689 = vmatpush1.msra.mxu0 0.0
        %1690 = vmatprep.subr.mxu0 0.0
        %1691 = vmatpush1.msra.mxu0 0.0
        %1692 = vmatprep.subr.mxu0 0.0
        %1693 = vmatpush1.msra.mxu0 0.0
        %1694 = vmatprep.subr.mxu0 0.0
        %1695 = vmatpush1.msra.mxu0 0.0
        %1696 = vmatprep.subr.mxu0 0.0
        %1697 = vmatpush1.msra.mxu0 0.0
        %1698 = vmatprep.subr.mxu0 0.0
        %1699 = vmatpush1.msra.mxu0 %v1663
        %1700 = vmatprep.subr.mxu0 0.0
        %1701 = vmatpush2.msra.mxu0 0.0
        %1702 = vmatprep.subr.mxu0 0.0
        %1703 = vmatpush2.msra.mxu0 0.0
        %1704 = vmatprep.subr.mxu0 0.0
        %1705 = vmatpush2.msra.mxu0 0.0
        %1706 = vmatprep.subr.mxu0 0.0
        %1707 = vmatpush2.msra.mxu0 0.0
        %1708 = vmatprep.subr.mxu0 0.0
        %1709 = vmatpush2.msra.mxu0 0.0
        %1710 = vmatprep.subr.mxu0 0.0
        %1711 = vmatpush2.msra.mxu0 0.0
        %1712 = vmatprep.subr.mxu0 0.0
        %1713 = vmatpush2.msra.mxu0 0.0
        %1714 = vmatprep.subr.mxu0 0.0
        %1715 = vmatpush2.msra.mxu0 0.0
        %1716 = vmatprep.subr.mxu0 0.0
        %1717 = vmatpush2.msra.mxu0 0.0
        %1718 = vmatprep.subr.mxu0 0.0
        %1719 = vmatpush2.msra.mxu0 0.0
        %1720 = vmatprep.subr.mxu0 0.0
        %1721 = vmatpush2.msra.mxu0 0.0
        %1722 = vmatprep.subr.mxu0 0.0
        %1723 = vmatpush2.msra.mxu0 0.0
        %1724 = vmatprep.subr.mxu0 0.0
        %1725 = vmatpush2.msra.mxu0 0.0
        %1726 = vmatprep.subr.mxu0 0.0
        %1727 = vmatpush2.msra.mxu0 0.0
        %1728 = vmatprep.subr.mxu0 0.0
        %1729 = vmatpush2.msra.mxu0 0.0
        %1730 = vmatprep.subr.mxu0 0.0
        %1731 = vmatpush2.msra.mxu0 0.0
        %1732 = vmatprep.mubr.f32.mxu0 0.0
        %1733 = vmatmul.mubr.f32.gmra.mxu0 %v1666
        %v1734 = vpop.f32.mrf.mxu0
        %v1735 = vadd.f32 0.0, %v1734
        %v1736 = vpop.f32.mrf.mxu0
        %1737 = vdwg.mxu0
        %1738 = vrot.lane.b32.xlu0 %v888, 120
        %v1739 = vpop.permute.xlu0 %1738
        %1740 = vrot.lane.b32.xlu0 %v884, 88
        %v1741 = vpop.permute.xlu0 %1740
        %v1742 = vsel %vm898, %v1739, 0
        %v1744 = vsel %vm898, %v1741, 0
        %1746 = vmatprep.subr.mxu0 0.0
        %1747 = vmatpush1.xpose.msra.mxu0 0.0
        %1748 = vmatprep.subr.mxu0 0.0
        %1749 = vmatpush1.xpose.msra.mxu0 0.0
        %1750 = vmatprep.subr.mxu0 0.0
        %1751 = vmatpush1.xpose.msra.mxu0 0.0
        %1752 = vmatprep.subr.mxu0 0.0
        %1753 = vmatpush1.xpose.msra.mxu0 0.0
        %1754 = vmatprep.subr.mxu0 0.0
        %1755 = vmatpush1.xpose.msra.mxu0 0.0
        %1756 = vmatprep.subr.mxu0 0.0
        %1757 = vmatpush1.xpose.msra.mxu0 0.0
        %1758 = vmatprep.subr.mxu0 0.0
        %1759 = vmatpush1.xpose.msra.mxu0 0.0
        %1760 = vmatprep.subr.mxu0 0.0
        %1761 = vmatpush1.xpose.msra.mxu0 0.0
        %1762 = vmatprep.subr.mxu0 0.0
        %1763 = vmatpush1.xpose.msra.mxu0 0.0
        %1764 = vmatprep.subr.mxu0 0.0
        %1765 = vmatpush1.xpose.msra.mxu0 0.0
        %1766 = vmatprep.subr.mxu0 0.0
        %1767 = vmatpush1.xpose.msra.mxu0 0.0
        %1768 = vmatprep.subr.mxu0 0.0
        %1769 = vmatpush1.xpose.msra.mxu0 0.0
        %1770 = vmatprep.subr.mxu0 0.0
        %1771 = vmatpush1.xpose.msra.mxu0 0.0
        %1772 = vmatprep.subr.mxu0 0.0
        %1773 = vmatpush1.xpose.msra.mxu0 0.0
        %1774 = vmatprep.subr.mxu0 0.0
        %1775 = vmatpush1.xpose.msra.mxu0 0.0
        %1776 = vmatprep.subr.mxu0 0.0
        %1777 = vmatpush1.xpose.msra.mxu0 %v1744
        %1778 = vmatprep.subr.mxu0 0.0
        %1779 = vmatpush2.xpose.msra.mxu0 0.0
        %1780 = vmatprep.subr.mxu0 0.0
        %1781 = vmatpush2.xpose.msra.mxu0 0.0
        %1782 = vmatprep.subr.mxu0 0.0
        %1783 = vmatpush2.xpose.msra.mxu0 0.0
        %1784 = vmatprep.subr.mxu0 0.0
        %1785 = vmatpush2.xpose.msra.mxu0 0.0
        %1786 = vmatprep.subr.mxu0 0.0
        %1787 = vmatpush2.xpose.msra.mxu0 0.0
        %1788 = vmatprep.subr.mxu0 0.0
        %1789 = vmatpush2.xpose.msra.mxu0 0.0
        %1790 = vmatprep.subr.mxu0 0.0
        %1791 = vmatpush2.xpose.msra.mxu0 0.0
        %1792 = vmatprep.subr.mxu0 0.0
        %1793 = vmatpush2.xpose.msra.mxu0 0.0
        %1794 = vmatprep.subr.mxu0 0.0
        %1795 = vmatpush2.xpose.msra.mxu0 0.0
        %1796 = vmatprep.subr.mxu0 0.0
        %1797 = vmatpush2.xpose.msra.mxu0 0.0
        %1798 = vmatprep.subr.mxu0 0.0
        %1799 = vmatpush2.xpose.msra.mxu0 0.0
        %1800 = vmatprep.subr.mxu0 0.0
        %1801 = vmatpush2.xpose.msra.mxu0 0.0
        %1802 = vmatprep.subr.mxu0 0.0
        %1803 = vmatpush2.xpose.msra.mxu0 0.0
        %1804 = vmatprep.subr.mxu0 0.0
        %1805 = vmatpush2.xpose.msra.mxu0 0.0
        %1806 = vmatprep.subr.mxu0 0.0
        %1807 = vmatpush2.xpose.msra.mxu0 0.0
        %1808 = vmatprep.subr.mxu0 0.0
        %1809 = vmatpush2.xpose.msra.mxu0 0.0
        %1810 = vmatprep.mubr.f32.mxu0 0.0
        %1811 = vmatmul.mubr.f32.gmra.mxu0 %v1742
        %v1812 = vpop.f32.mrf.mxu0
        %v1813 = vadd.f32 %v894, %v1812
        %v1814 = vpop.f32.mrf.mxu0
        %1815 = vdwg.mxu0
        %v1816 = vsel %vm898, %v1813, -inf
        %1817 = vmax.xlane.f32.xlu0 %v1816
        %v1818 = vpop.xlane.xlu0 %1817
        %v1819 = vsub.f32 %v1813, %v1818
        %v1820 = vmul.f32 %v1819, 1.442695
        %v1821 = vpow.pop %v1820
        %v1822 = vsel %vm898, %v1821, 0.0
        %1823 = vadd.xlane.f32.xlu0 %v1822
        %v1824 = vpop.xlane.xlu0 %1823
        %v1825 = vrcp.pop %v1824
        %v1826 = vmul.f32 %v1821, %v1825
        %1827 = vrot.lane.b32.xlu0 %v884, 56
        %v1828 = vpop.permute.xlu0 %1827
        %v1831 = vsel %vm898, %v1826, 0
        %1833 = vmatprep.subr.mxu0 0.0
        %1834 = vmatpush1.msra.mxu0 0.0
        %1835 = vmatprep.subr.mxu0 0.0
        %1836 = vmatpush1.msra.mxu0 0.0
        %1837 = vmatprep.subr.mxu0 0.0
        %1838 = vmatpush1.msra.mxu0 0.0
        %1839 = vmatprep.subr.mxu0 0.0
        %1840 = vmatpush1.msra.mxu0 0.0
        %1841 = vmatprep.subr.mxu0 0.0
        %1842 = vmatpush1.msra.mxu0 0.0
        %1843 = vmatprep.subr.mxu0 0.0
        %1844 = vmatpush1.msra.mxu0 0.0
        %1845 = vmatprep.subr.mxu0 0.0
        %1846 = vmatpush1.msra.mxu0 0.0
        %1847 = vmatprep.subr.mxu0 0.0
        %1848 = vmatpush1.msra.mxu0 0.0
        %1849 = vmatprep.subr.mxu0 0.0
        %1850 = vmatpush1.msra.mxu0 0.0
        %1851 = vmatprep.subr.mxu0 0.0
        %1852 = vmatpush1.msra.mxu0 0.0
        %1853 = vmatprep.subr.mxu0 0.0
        %1854 = vmatpush1.msra.mxu0 0.0
        %1855 = vmatprep.subr.mxu0 0.0
        %1856 = vmatpush1.msra.mxu0 0.0
        %1857 = vmatprep.subr.mxu0 0.0
        %1858 = vmatpush1.msra.mxu0 0.0
        %1859 = vmatprep.subr.mxu0 0.0
        %1860 = vmatpush1.msra.mxu0 0.0
        %1861 = vmatprep.subr.mxu0 0.0
        %1862 = vmatpush1.msra.mxu0 0.0
        %1863 = vmatprep.subr.mxu0 0.0
        %1864 = vmatpush1.msra.mxu0 %v1828
        %1865 = vmatprep.subr.mxu0 0.0
        %1866 = vmatpush2.msra.mxu0 0.0
        %1867 = vmatprep.subr.mxu0 0.0
        %1868 = vmatpush2.msra.mxu0 0.0
        %1869 = vmatprep.subr.mxu0 0.0
        %1870 = vmatpush2.msra.mxu0 0.0
        %1871 = vmatprep.subr.mxu0 0.0
        %1872 = vmatpush2.msra.mxu0 0.0
        %1873 = vmatprep.subr.mxu0 0.0
        %1874 = vmatpush2.msra.mxu0 0.0
        %1875 = vmatprep.subr.mxu0 0.0
        %1876 = vmatpush2.msra.mxu0 0.0
        %1877 = vmatprep.subr.mxu0 0.0
        %1878 = vmatpush2.msra.mxu0 0.0
        %1879 = vmatprep.subr.mxu0 0.0
        %1880 = vmatpush2.msra.mxu0 0.0
        %1881 = vmatprep.subr.mxu0 0.0
        %1882 = vmatpush2.msra.mxu0 0.0
        %1883 = vmatprep.subr.mxu0 0.0
        %1884 = vmatpush2.msra.mxu0 0.0
        %1885 = vmatprep.subr.mxu0 0.0
        %1886 = vmatpush2.msra.mxu0 0.0
        %1887 = vmatprep.subr.mxu0 0.0
        %1888 = vmatpush2.msra.mxu0 0.0
        %1889 = vmatprep.subr.mxu0 0.0
        %1890 = vmatpush2.msra.mxu0 0.0
        %1891 = vmatprep.subr.mxu0 0.0
        %1892 = vmatpush2.msra.mxu0 0.0
        %1893 = vmatprep.subr.mxu0 0.0
        %1894 = vmatpush2.msra.mxu0 0.0
        %1895 = vmatprep.subr.mxu0 0.0
        %1896 = vmatpush2.msra.mxu0 0.0
        %1897 = vmatprep.mubr.f32.mxu0 0.0
        %1898 = vmatmul.mubr.f32.gmra.mxu0 %v1831
        %v1899 = vpop.f32.mrf.mxu0
        %v1900 = vadd.f32 0.0, %v1899
        %v1901 = vpop.f32.mrf.mxu0
        %1902 = vdwg.mxu0
        %1903 = vrot.lane.b32.xlu0 %v888, 112
        %v1904 = vpop.permute.xlu0 %1903
        %1905 = vrot.lane.b32.xlu0 %v884, 80
        %v1906 = vpop.permute.xlu0 %1905
        %v1907 = vsel %vm898, %v1904, 0
        %v1909 = vsel %vm898, %v1906, 0
        %1911 = vmatprep.subr.mxu0 0.0
        %1912 = vmatpush1.xpose.msra.mxu0 0.0
        %1913 = vmatprep.subr.mxu0 0.0
        %1914 = vmatpush1.xpose.msra.mxu0 0.0
        %1915 = vmatprep.subr.mxu0 0.0
        %1916 = vmatpush1.xpose.msra.mxu0 0.0
        %1917 = vmatprep.subr.mxu0 0.0
        %1918 = vmatpush1.xpose.msra.mxu0 0.0
        %1919 = vmatprep.subr.mxu0 0.0
        %1920 = vmatpush1.xpose.msra.mxu0 0.0
        %1921 = vmatprep.subr.mxu0 0.0
        %1922 = vmatpush1.xpose.msra.mxu0 0.0
        %1923 = vmatprep.subr.mxu0 0.0
        %1924 = vmatpush1.xpose.msra.mxu0 0.0
        %1925 = vmatprep.subr.mxu0 0.0
        %1926 = vmatpush1.xpose.msra.mxu0 0.0
        %1927 = vmatprep.subr.mxu0 0.0
        %1928 = vmatpush1.xpose.msra.mxu0 0.0
        %1929 = vmatprep.subr.mxu0 0.0
        %1930 = vmatpush1.xpose.msra.mxu0 0.0
        %1931 = vmatprep.subr.mxu0 0.0
        %1932 = vmatpush1.xpose.msra.mxu0 0.0
        %1933 = vmatprep.subr.mxu0 0.0
        %1934 = vmatpush1.xpose.msra.mxu0 0.0
        %1935 = vmatprep.subr.mxu0 0.0
        %1936 = vmatpush1.xpose.msra.mxu0 0.0
        %1937 = vmatprep.subr.mxu0 0.0
        %1938 = vmatpush1.xpose.msra.mxu0 0.0
        %1939 = vmatprep.subr.mxu0 0.0
        %1940 = vmatpush1.xpose.msra.mxu0 0.0
        %1941 = vmatprep.subr.mxu0 0.0
        %1942 = vmatpush1.xpose.msra.mxu0 %v1909
        %1943 = vmatprep.subr.mxu0 0.0
        %1944 = vmatpush2.xpose.msra.mxu0 0.0
        %1945 = vmatprep.subr.mxu0 0.0
        %1946 = vmatpush2.xpose.msra.mxu0 0.0
        %1947 = vmatprep.subr.mxu0 0.0
        %1948 = vmatpush2.xpose.msra.mxu0 0.0
        %1949 = vmatprep.subr.mxu0 0.0
        %1950 = vmatpush2.xpose.msra.mxu0 0.0
        %1951 = vmatprep.subr.mxu0 0.0
        %1952 = vmatpush2.xpose.msra.mxu0 0.0
        %1953 = vmatprep.subr.mxu0 0.0
        %1954 = vmatpush2.xpose.msra.mxu0 0.0
        %1955 = vmatprep.subr.mxu0 0.0
        %1956 = vmatpush2.xpose.msra.mxu0 0.0
        %1957 = vmatprep.subr.mxu0 0.0
        %1958 = vmatpush2.xpose.msra.mxu0 0.0
        %1959 = vmatprep.subr.mxu0 0.0
        %1960 = vmatpush2.xpose.msra.mxu0 0.0
        %1961 = vmatprep.subr.mxu0 0.0
        %1962 = vmatpush2.xpose.msra.mxu0 0.0
        %1963 = vmatprep.subr.mxu0 0.0
        %1964 = vmatpush2.xpose.msra.mxu0 0.0
        %1965 = vmatprep.subr.mxu0 0.0
        %1966 = vmatpush2.xpose.msra.mxu0 0.0
        %1967 = vmatprep.subr.mxu0 0.0
        %1968 = vmatpush2.xpose.msra.mxu0 0.0
        %1969 = vmatprep.subr.mxu0 0.0
        %1970 = vmatpush2.xpose.msra.mxu0 0.0
        %1971 = vmatprep.subr.mxu0 0.0
        %1972 = vmatpush2.xpose.msra.mxu0 0.0
        %1973 = vmatprep.subr.mxu0 0.0
        %1974 = vmatpush2.xpose.msra.mxu0 0.0
        %1975 = vmatprep.mubr.f32.mxu0 0.0
        %1976 = vmatmul.mubr.f32.gmra.mxu0 %v1907
        %v1977 = vpop.f32.mrf.mxu0
        %v1978 = vadd.f32 %v894, %v1977
        %v1979 = vpop.f32.mrf.mxu0
        %1980 = vdwg.mxu0
        %v1981 = vsel %vm898, %v1978, -inf
        %1982 = vmax.xlane.f32.xlu0 %v1981
        %v1983 = vpop.xlane.xlu0 %1982
        %v1984 = vsub.f32 %v1978, %v1983
        %v1985 = vmul.f32 %v1984, 1.442695
        %v1986 = vpow.pop %v1985
        %v1987 = vsel %vm898, %v1986, 0.0
        %1988 = vadd.xlane.f32.xlu0 %v1987
        %v1989 = vpop.xlane.xlu0 %1988
        %v1990 = vrcp.pop %v1989
        %v1991 = vmul.f32 %v1986, %v1990
        %1992 = vrot.lane.b32.xlu0 %v884, 48
        %v1993 = vpop.permute.xlu0 %1992
        %v1996 = vsel %vm898, %v1991, 0
        %1998 = vmatprep.subr.mxu0 0.0
        %1999 = vmatpush1.msra.mxu0 0.0
        %2000 = vmatprep.subr.mxu0 0.0
        %2001 = vmatpush1.msra.mxu0 0.0
        %2002 = vmatprep.subr.mxu0 0.0
        %2003 = vmatpush1.msra.mxu0 0.0
        %2004 = vmatprep.subr.mxu0 0.0
        %2005 = vmatpush1.msra.mxu0 0.0
        %2006 = vmatprep.subr.mxu0 0.0
        %2007 = vmatpush1.msra.mxu0 0.0
        %2008 = vmatprep.subr.mxu0 0.0
        %2009 = vmatpush1.msra.mxu0 0.0
        %2010 = vmatprep.subr.mxu0 0.0
        %2011 = vmatpush1.msra.mxu0 0.0
        %2012 = vmatprep.subr.mxu0 0.0
        %2013 = vmatpush1.msra.mxu0 0.0
        %2014 = vmatprep.subr.mxu0 0.0
        %2015 = vmatpush1.msra.mxu0 0.0
        %2016 = vmatprep.subr.mxu0 0.0
        %2017 = vmatpush1.msra.mxu0 0.0
        %2018 = vmatprep.subr.mxu0 0.0
        %2019 = vmatpush1.msra.mxu0 0.0
        %2020 = vmatprep.subr.mxu0 0.0
        %2021 = vmatpush1.msra.mxu0 0.0
        %2022 = vmatprep.subr.mxu0 0.0
        %2023 = vmatpush1.msra.mxu0 0.0
        %2024 = vmatprep.subr.mxu0 0.0
        %2025 = vmatpush1.msra.mxu0 0.0
        %2026 = vmatprep.subr.mxu0 0.0
        %2027 = vmatpush1.msra.mxu0 0.0
        %2028 = vmatprep.subr.mxu0 0.0
        %2029 = vmatpush1.msra.mxu0 %v1993
        %2030 = vmatprep.subr.mxu0 0.0
        %2031 = vmatpush2.msra.mxu0 0.0
        %2032 = vmatprep.subr.mxu0 0.0
        %2033 = vmatpush2.msra.mxu0 0.0
        %2034 = vmatprep.subr.mxu0 0.0
        %2035 = vmatpush2.msra.mxu0 0.0
        %2036 = vmatprep.subr.mxu0 0.0
        %2037 = vmatpush2.msra.mxu0 0.0
        %2038 = vmatprep.subr.mxu0 0.0
        %2039 = vmatpush2.msra.mxu0 0.0
        %2040 = vmatprep.subr.mxu0 0.0
        %2041 = vmatpush2.msra.mxu0 0.0
        %2042 = vmatprep.subr.mxu0 0.0
        %2043 = vmatpush2.msra.mxu0 0.0
        %2044 = vmatprep.subr.mxu0 0.0
        %2045 = vmatpush2.msra.mxu0 0.0
        %2046 = vmatprep.subr.mxu0 0.0
        %2047 = vmatpush2.msra.mxu0 0.0
        %2048 = vmatprep.subr.mxu0 0.0
        %2049 = vmatpush2.msra.mxu0 0.0
        %2050 = vmatprep.subr.mxu0 0.0
        %2051 = vmatpush2.msra.mxu0 0.0
        %2052 = vmatprep.subr.mxu0 0.0
        %2053 = vmatpush2.msra.mxu0 0.0
        %2054 = vmatprep.subr.mxu0 0.0
        %2055 = vmatpush2.msra.mxu0 0.0
        %2056 = vmatprep.subr.mxu0 0.0
        %2057 = vmatpush2.msra.mxu0 0.0
        %2058 = vmatprep.subr.mxu0 0.0
        %2059 = vmatpush2.msra.mxu0 0.0
        %2060 = vmatprep.subr.mxu0 0.0
        %2061 = vmatpush2.msra.mxu0 0.0
        %2062 = vmatprep.mubr.f32.mxu0 0.0
        %2063 = vmatmul.mubr.f32.gmra.mxu0 %v1996
        %v2064 = vpop.f32.mrf.mxu0
        %v2065 = vadd.f32 0.0, %v2064
        %v2066 = vpop.f32.mrf.mxu0
        %2067 = vdwg.mxu0
        %2068 = vrot.lane.b32.xlu0 %v888, 104
        %v2069 = vpop.permute.xlu0 %2068
        %2070 = vrot.lane.b32.xlu0 %v884, 72
        %v2071 = vpop.permute.xlu0 %2070
        %v2072 = vsel %vm898, %v2069, 0
        %v2074 = vsel %vm898, %v2071, 0
        %2076 = vmatprep.subr.mxu0 0.0
        %2077 = vmatpush1.xpose.msra.mxu0 0.0
        %2078 = vmatprep.subr.mxu0 0.0
        %2079 = vmatpush1.xpose.msra.mxu0 0.0
        %2080 = vmatprep.subr.mxu0 0.0
        %2081 = vmatpush1.xpose.msra.mxu0 0.0
        %2082 = vmatprep.subr.mxu0 0.0
        %2083 = vmatpush1.xpose.msra.mxu0 0.0
        %2084 = vmatprep.subr.mxu0 0.0
        %2085 = vmatpush1.xpose.msra.mxu0 0.0
        %2086 = vmatprep.subr.mxu0 0.0
        %2087 = vmatpush1.xpose.msra.mxu0 0.0
        %2088 = vmatprep.subr.mxu0 0.0
        %2089 = vmatpush1.xpose.msra.mxu0 0.0
        %2090 = vmatprep.subr.mxu0 0.0
        %2091 = vmatpush1.xpose.msra.mxu0 0.0
        %2092 = vmatprep.subr.mxu0 0.0
        %2093 = vmatpush1.xpose.msra.mxu0 0.0
        %2094 = vmatprep.subr.mxu0 0.0
        %2095 = vmatpush1.xpose.msra.mxu0 0.0
        %2096 = vmatprep.subr.mxu0 0.0
        %2097 = vmatpush1.xpose.msra.mxu0 0.0
        %2098 = vmatprep.subr.mxu0 0.0
        %2099 = vmatpush1.xpose.msra.mxu0 0.0
        %2100 = vmatprep.subr.mxu0 0.0
        %2101 = vmatpush1.xpose.msra.mxu0 0.0
        %2102 = vmatprep.subr.mxu0 0.0
        %2103 = vmatpush1.xpose.msra.mxu0 0.0
        %2104 = vmatprep.subr.mxu0 0.0
        %2105 = vmatpush1.xpose.msra.mxu0 0.0
        %2106 = vmatprep.subr.mxu0 0.0
        %2107 = vmatpush1.xpose.msra.mxu0 %v2074
        %2108 = vmatprep.subr.mxu0 0.0
        %2109 = vmatpush2.xpose.msra.mxu0 0.0
        %2110 = vmatprep.subr.mxu0 0.0
        %2111 = vmatpush2.xpose.msra.mxu0 0.0
        %2112 = vmatprep.subr.mxu0 0.0
        %2113 = vmatpush2.xpose.msra.mxu0 0.0
        %2114 = vmatprep.subr.mxu0 0.0
        %2115 = vmatpush2.xpose.msra.mxu0 0.0
        %2116 = vmatprep.subr.mxu0 0.0
        %2117 = vmatpush2.xpose.msra.mxu0 0.0
        %2118 = vmatprep.subr.mxu0 0.0
        %2119 = vmatpush2.xpose.msra.mxu0 0.0
        %2120 = vmatprep.subr.mxu0 0.0
        %2121 = vmatpush2.xpose.msra.mxu0 0.0
        %2122 = vmatprep.subr.mxu0 0.0
        %2123 = vmatpush2.xpose.msra.mxu0 0.0
        %2124 = vmatprep.subr.mxu0 0.0
        %2125 = vmatpush2.xpose.msra.mxu0 0.0
        %2126 = vmatprep.subr.mxu0 0.0
        %2127 = vmatpush2.xpose.msra.mxu0 0.0
        %2128 = vmatprep.subr.mxu0 0.0
        %2129 = vmatpush2.xpose.msra.mxu0 0.0
        %2130 = vmatprep.subr.mxu0 0.0
        %2131 = vmatpush2.xpose.msra.mxu0 0.0
        %2132 = vmatprep.subr.mxu0 0.0
        %2133 = vmatpush2.xpose.msra.mxu0 0.0
        %2134 = vmatprep.subr.mxu0 0.0
        %2135 = vmatpush2.xpose.msra.mxu0 0.0
        %2136 = vmatprep.subr.mxu0 0.0
        %2137 = vmatpush2.xpose.msra.mxu0 0.0
        %2138 = vmatprep.subr.mxu0 0.0
        %2139 = vmatpush2.xpose.msra.mxu0 0.0
        %2140 = vmatprep.mubr.f32.mxu0 0.0
        %2141 = vmatmul.mubr.f32.gmra.mxu0 %v2072
        %v2142 = vpop.f32.mrf.mxu0
        %v2143 = vadd.f32 %v894, %v2142
        %v2144 = vpop.f32.mrf.mxu0
        %2145 = vdwg.mxu0
        %v2146 = vsel %vm898, %v2143, -inf
        %2147 = vmax.xlane.f32.xlu0 %v2146
        %v2148 = vpop.xlane.xlu0 %2147
        %v2149 = vsub.f32 %v2143, %v2148
        %v2150 = vmul.f32 %v2149, 1.442695
        %v2151 = vpow.pop %v2150
        %v2152 = vsel %vm898, %v2151, 0.0
        %2153 = vadd.xlane.f32.xlu0 %v2152
        %v2154 = vpop.xlane.xlu0 %2153
        %v2155 = vrcp.pop %v2154
        %v2156 = vmul.f32 %v2151, %v2155
        %2157 = vrot.lane.b32.xlu0 %v884, 40
        %v2158 = vpop.permute.xlu0 %2157
        %v2161 = vsel %vm898, %v2156, 0
        %2163 = vmatprep.subr.mxu0 0.0
        %2164 = vmatpush1.msra.mxu0 0.0
        %2165 = vmatprep.subr.mxu0 0.0
        %2166 = vmatpush1.msra.mxu0 0.0
        %2167 = vmatprep.subr.mxu0 0.0
        %2168 = vmatpush1.msra.mxu0 0.0
        %2169 = vmatprep.subr.mxu0 0.0
        %2170 = vmatpush1.msra.mxu0 0.0
        %2171 = vmatprep.subr.mxu0 0.0
        %2172 = vmatpush1.msra.mxu0 0.0
        %2173 = vmatprep.subr.mxu0 0.0
        %2174 = vmatpush1.msra.mxu0 0.0
        %2175 = vmatprep.subr.mxu0 0.0
        %2176 = vmatpush1.msra.mxu0 0.0
        %2177 = vmatprep.subr.mxu0 0.0
        %2178 = vmatpush1.msra.mxu0 0.0
        %2179 = vmatprep.subr.mxu0 0.0
        %2180 = vmatpush1.msra.mxu0 0.0
        %2181 = vmatprep.subr.mxu0 0.0
        %2182 = vmatpush1.msra.mxu0 0.0
        %2183 = vmatprep.subr.mxu0 0.0
        %2184 = vmatpush1.msra.mxu0 0.0
        %2185 = vmatprep.subr.mxu0 0.0
        %2186 = vmatpush1.msra.mxu0 0.0
        %2187 = vmatprep.subr.mxu0 0.0
        %2188 = vmatpush1.msra.mxu0 0.0
        %2189 = vmatprep.subr.mxu0 0.0
        %2190 = vmatpush1.msra.mxu0 0.0
        %2191 = vmatprep.subr.mxu0 0.0
        %2192 = vmatpush1.msra.mxu0 0.0
        %2193 = vmatprep.subr.mxu0 0.0
        %2194 = vmatpush1.msra.mxu0 %v2158
        %2195 = vmatprep.subr.mxu0 0.0
        %2196 = vmatpush2.msra.mxu0 0.0
        %2197 = vmatprep.subr.mxu0 0.0
        %2198 = vmatpush2.msra.mxu0 0.0
        %2199 = vmatprep.subr.mxu0 0.0
        %2200 = vmatpush2.msra.mxu0 0.0
        %2201 = vmatprep.subr.mxu0 0.0
        %2202 = vmatpush2.msra.mxu0 0.0
        %2203 = vmatprep.subr.mxu0 0.0
        %2204 = vmatpush2.msra.mxu0 0.0
        %2205 = vmatprep.subr.mxu0 0.0
        %2206 = vmatpush2.msra.mxu0 0.0
        %2207 = vmatprep.subr.mxu0 0.0
        %2208 = vmatpush2.msra.mxu0 0.0
        %2209 = vmatprep.subr.mxu0 0.0
        %2210 = vmatpush2.msra.mxu0 0.0
        %2211 = vmatprep.subr.mxu0 0.0
        %2212 = vmatpush2.msra.mxu0 0.0
        %2213 = vmatprep.subr.mxu0 0.0
        %2214 = vmatpush2.msra.mxu0 0.0
        %2215 = vmatprep.subr.mxu0 0.0
        %2216 = vmatpush2.msra.mxu0 0.0
        %2217 = vmatprep.subr.mxu0 0.0
        %2218 = vmatpush2.msra.mxu0 0.0
        %2219 = vmatprep.subr.mxu0 0.0
        %2220 = vmatpush2.msra.mxu0 0.0
        %2221 = vmatprep.subr.mxu0 0.0
        %2222 = vmatpush2.msra.mxu0 0.0
        %2223 = vmatprep.subr.mxu0 0.0
        %2224 = vmatpush2.msra.mxu0 0.0
        %2225 = vmatprep.subr.mxu0 0.0
        %2226 = vmatpush2.msra.mxu0 0.0
        %2227 = vmatprep.mubr.f32.mxu0 0.0
        %2228 = vmatmul.mubr.f32.gmra.mxu0 %v2161
        %v2229 = vpop.f32.mrf.mxu0
        %v2230 = vadd.f32 0.0, %v2229
        %v2231 = vpop.f32.mrf.mxu0
        %2232 = vdwg.mxu0
        %2234 = vrot.lane.b32.xlu0 %v1900, 8
        %v2235 = vpop.permute.xlu0 %2234
        %2238 = vrot.lane.b32.xlu0 %v2065, 16
        %v2239 = vpop.permute.xlu0 %2238
        %2242 = vrot.lane.b32.xlu0 %v2230, 24
        %v2243 = vpop.permute.xlu0 %2242
        %v2245 = vsel %vm898, %v1735, %v2235
        %v2246 = vsel %vm1569, %v2245, %v2239
        %v2247 = vsel %vm1571, %v2246, %v2243
        %v2248 = vld [vmem:[%s708] sm:$0xff]
        %v2249 = vld [vmem:[%s708 + $0x8] sm:$0xff]
        %v2250 = vld [vmem:[%s708 + $0x10] sm:$0xff]
        %v2251 = vld [vmem:[%s708 + $0x18] sm:$0xff]
        %v2253 = vsel %vm751, %v1572, 0
        %v2256 = vsel %vm751, %v2247, 0
        %2258 = vmatprep.subr.mxu0 0.0
        %2259 = vmatpush1.msra.mxu0 0.0
        %2260 = vmatprep.subr.mxu0 0.0
        %2261 = vmatpush1.msra.mxu0 0.0
        %2262 = vmatprep.subr.mxu0 0.0
        %2263 = vmatpush1.msra.mxu0 0.0
        %2264 = vmatprep.subr.mxu0 0.0
        %2265 = vmatpush1.msra.mxu0 0.0
        %2266 = vmatprep.subr.mxu0 0.0
        %2267 = vmatpush1.msra.mxu0 0.0
        %2268 = vmatprep.subr.mxu0 0.0
        %2269 = vmatpush1.msra.mxu0 0.0
        %2270 = vmatprep.subr.mxu0 0.0
        %2271 = vmatpush1.msra.mxu0 0.0
        %2272 = vmatprep.subr.mxu0 0.0
        %2273 = vmatpush1.msra.mxu0 0.0
        %2274 = vmatprep.subr.mxu0 0.0
        %2275 = vmatpush1.msra.mxu0 0.0
        %2276 = vmatprep.subr.mxu0 0.0
        %2277 = vmatpush1.msra.mxu0 0.0
        %2278 = vmatprep.subr.mxu0 0.0
        %2279 = vmatpush1.msra.mxu0 0.0
        %2280 = vmatprep.subr.mxu0 0.0
        %2281 = vmatpush1.msra.mxu0 0.0
        %2282 = vmatprep.subr.mxu0 0.0
        %2283 = vmatpush1.msra.mxu0 %v2251
        %2284 = vmatprep.subr.mxu0 0.0
        %2285 = vmatpush1.msra.mxu0 %v2250
        %2286 = vmatprep.subr.mxu0 0.0
        %2287 = vmatpush1.msra.mxu0 %v2249
        %2288 = vmatprep.subr.mxu0 0.0
        %2289 = vmatpush1.msra.mxu0 %v2248
        %2290 = vmatprep.subr.mxu0 0.0
        %2291 = vmatpush2.msra.mxu0 0.0
        %2292 = vmatprep.subr.mxu0 0.0
        %2293 = vmatpush2.msra.mxu0 0.0
        %2294 = vmatprep.subr.mxu0 0.0
        %2295 = vmatpush2.msra.mxu0 0.0
        %2296 = vmatprep.subr.mxu0 0.0
        %2297 = vmatpush2.msra.mxu0 0.0
        %2298 = vmatprep.subr.mxu0 0.0
        %2299 = vmatpush2.msra.mxu0 0.0
        %2300 = vmatprep.subr.mxu0 0.0
        %2301 = vmatpush2.msra.mxu0 0.0
        %2302 = vmatprep.subr.mxu0 0.0
        %2303 = vmatpush2.msra.mxu0 0.0
        %2304 = vmatprep.subr.mxu0 0.0
        %2305 = vmatpush2.msra.mxu0 0.0
        %2306 = vmatprep.subr.mxu0 0.0
        %2307 = vmatpush2.msra.mxu0 0.0
        %2308 = vmatprep.subr.mxu0 0.0
        %2309 = vmatpush2.msra.mxu0 0.0
        %2310 = vmatprep.subr.mxu0 0.0
        %2311 = vmatpush2.msra.mxu0 0.0
        %2312 = vmatprep.subr.mxu0 0.0
        %2313 = vmatpush2.msra.mxu0 0.0
        %2314 = vmatprep.subr.mxu0 0.0
        %2315 = vmatpush2.msra.mxu0 0.0
        %2316 = vmatprep.subr.mxu0 0.0
        %2317 = vmatpush2.msra.mxu0 0.0
        %2318 = vmatprep.subr.mxu0 0.0
        %2319 = vmatpush2.msra.mxu0 0.0
        %2320 = vmatprep.subr.mxu0 0.0
        %2321 = vmatpush2.msra.mxu0 0.0
        %2322 = vmatprep.mubr.f32.mxu0 0.0
        %2323 = vmatmul.mubr.f32.gmra.mxu0 %v2253
        %v2324 = vpop.f32.mrf.mxu0
        %v2325 = vadd.f32 0.0, %v2324
        %v2326 = vpop.f32.mrf.mxu0
        %2327 = vmatprep.mubr.f32.mxu0 0.0
        %2328 = vmatmul.mubr.f32.gmra.mxu0 %v2256
        %v2329 = vpop.f32.mrf.mxu0
        %v2330 = vadd.f32 0.0, %v2329
        %v2331 = vpop.f32.mrf.mxu0
        %2332 = vdwg.mxu0
        %v2333 = vadd.f32 %v747, %v2325
        %v2334 = vadd.f32 %v748, %v2330
        %v2335 = vld [vmem:[%s711] sm:$0x1]
        %v2337 = vlaneseq
        %v2338 = vshrl.u32 %v2337, 7
        %v2339 = vsub.s32 0, %v2338
        %v2340 = vrot.slane %v2335, %v2339
        %v2342 = vadd.f32 %v2333, %v2340
        %v2343 = vadd.f32 %v2334, %v2340
        %v2344 = vld [vmem:[%s714] sm:$0x1]
        %v2345 = vld [vmem:[%s717] sm:$0x1]
        %v2346 = vsel %vm751, %v2342, 0.0
        %2347 = vadd.xlane.f32.xlu0 %v2346
        %v2348 = vpop.xlane.xlu0 %2347
        %v2349 = vsel %vm751, %v2343, 0.0
        %2350 = vadd.xlane.f32.xlu0 %v2349
        %v2351 = vpop.xlane.xlu0 %2350
        %v2352 = vmul.f32 %v2348, %v758
        %v2353 = vmul.f32 %v2351, %v758
        %v2354 = vsub.f32 %v2342, %v2352
        %v2355 = vsub.f32 %v2343, %v2353
        %v2356 = vmul.f32 %v2354, %v2354
        %v2357 = vmul.f32 %v2355, %v2355
        %v2358 = vsel %vm751, %v2356, 0.0
        %2359 = vadd.xlane.f32.xlu0 %v2358
        %v2360 = vpop.xlane.xlu0 %2359
        %v2361 = vsel %vm751, %v2357, 0.0
        %2362 = vadd.xlane.f32.xlu0 %v2361
        %v2363 = vpop.xlane.xlu0 %2362
        %v2364 = vmul.f32 %v2360, %v758
        %v2365 = vmul.f32 %v2363, %v758
        %v2366 = vadd.f32 %v2364, 1e-05
        %v2367 = vadd.f32 %v2365, 1e-05
        %v2368 = vrsqrt.pop %v2366
        %v2369 = vrsqrt.pop %v2367
        %v2370 = vmul.f32 %v2354, %v2368
        %v2371 = vmul.f32 %v2355, %v2369
        %v2373 = vlaneseq
        %v2374 = vshrl.u32 %v2373, 7
        %v2375 = vsub.s32 0, %v2374
        %v2376 = vrot.slane %v2344, %v2375
        %v2378 = vmul.f32 %v2370, %v2376
        %v2379 = vmul.f32 %v2371, %v2376
        %v2381 = vlaneseq
        %v2382 = vshrl.u32 %v2381, 7
        %v2383 = vsub.s32 0, %v2382
        %v2384 = vrot.slane %v2345, %v2383
        %v2386 = vadd.f32 %v2378, %v2384
        %v2387 = vadd.f32 %v2379, %v2384
        %v2388 = vld [vmem:[%s722] sm:$0xff]
        %v2389 = vld [vmem:[%s722 + $0x8] sm:$0xff]
        %v2390 = vld [vmem:[%s722 + $0x10] sm:$0xff]
        %v2391 = vld [vmem:[%s722 + $0x18] sm:$0xff]
        %v2392 = vld [vmem:[%s725] sm:$0x1]
        %v2394 = vlaneseq
        %v2395 = vshrl.u32 %v2394, 7
        %v2396 = vsub.s32 0, %v2395
        %v2397 = vrot.slane %v2392, %v2396
        %v2400 = vsel %vm751, %v2386, 0
        %v2403 = vsel %vm751, %v2387, 0
        %2405 = vmatprep.subr.mxu0 0.0
        %2406 = vmatpush1.msra.mxu0 0.0
        %2407 = vmatprep.subr.mxu0 0.0
        %2408 = vmatpush1.msra.mxu0 0.0
        %2409 = vmatprep.subr.mxu0 0.0
        %2410 = vmatpush1.msra.mxu0 0.0
        %2411 = vmatprep.subr.mxu0 0.0
        %2412 = vmatpush1.msra.mxu0 0.0
        %2413 = vmatprep.subr.mxu0 0.0
        %2414 = vmatpush1.msra.mxu0 0.0
        %2415 = vmatprep.subr.mxu0 0.0
        %2416 = vmatpush1.msra.mxu0 0.0
        %2417 = vmatprep.subr.mxu0 0.0
        %2418 = vmatpush1.msra.mxu0 0.0
        %2419 = vmatprep.subr.mxu0 0.0
        %2420 = vmatpush1.msra.mxu0 0.0
        %2421 = vmatprep.subr.mxu0 0.0
        %2422 = vmatpush1.msra.mxu0 0.0
        %2423 = vmatprep.subr.mxu0 0.0
        %2424 = vmatpush1.msra.mxu0 0.0
        %2425 = vmatprep.subr.mxu0 0.0
        %2426 = vmatpush1.msra.mxu0 0.0
        %2427 = vmatprep.subr.mxu0 0.0
        %2428 = vmatpush1.msra.mxu0 0.0
        %2429 = vmatprep.subr.mxu0 0.0
        %2430 = vmatpush1.msra.mxu0 %v2391
        %2431 = vmatprep.subr.mxu0 0.0
        %2432 = vmatpush1.msra.mxu0 %v2390
        %2433 = vmatprep.subr.mxu0 0.0
        %2434 = vmatpush1.msra.mxu0 %v2389
        %2435 = vmatprep.subr.mxu0 0.0
        %2436 = vmatpush1.msra.mxu0 %v2388
        %2437 = vmatprep.subr.mxu0 0.0
        %2438 = vmatpush2.msra.mxu0 0.0
        %2439 = vmatprep.subr.mxu0 0.0
        %2440 = vmatpush2.msra.mxu0 0.0
        %2441 = vmatprep.subr.mxu0 0.0
        %2442 = vmatpush2.msra.mxu0 0.0
        %2443 = vmatprep.subr.mxu0 0.0
        %2444 = vmatpush2.msra.mxu0 0.0
        %2445 = vmatprep.subr.mxu0 0.0
        %2446 = vmatpush2.msra.mxu0 0.0
        %2447 = vmatprep.subr.mxu0 0.0
        %2448 = vmatpush2.msra.mxu0 0.0
        %2449 = vmatprep.subr.mxu0 0.0
        %2450 = vmatpush2.msra.mxu0 0.0
        %2451 = vmatprep.subr.mxu0 0.0
        %2452 = vmatpush2.msra.mxu0 0.0
        %2453 = vmatprep.subr.mxu0 0.0
        %2454 = vmatpush2.msra.mxu0 0.0
        %2455 = vmatprep.subr.mxu0 0.0
        %2456 = vmatpush2.msra.mxu0 0.0
        %2457 = vmatprep.subr.mxu0 0.0
        %2458 = vmatpush2.msra.mxu0 0.0
        %2459 = vmatprep.subr.mxu0 0.0
        %2460 = vmatpush2.msra.mxu0 0.0
        %2461 = vmatprep.subr.mxu0 0.0
        %2462 = vmatpush2.msra.mxu0 0.0
        %2463 = vmatprep.subr.mxu0 0.0
        %2464 = vmatpush2.msra.mxu0 0.0
        %2465 = vmatprep.subr.mxu0 0.0
        %2466 = vmatpush2.msra.mxu0 0.0
        %2467 = vmatprep.subr.mxu0 0.0
        %2468 = vmatpush2.msra.mxu0 0.0
        %2469 = vmatprep.mubr.f32.mxu0 0.0
        %2470 = vmatmul.mubr.f32.gmra.mxu0 %v2400
        %v2471 = vpop.f32.mrf.mxu0
        %v2472 = vadd.f32 %v2397, %v2471
        %v2473 = vpop.f32.mrf.mxu0
        %2474 = vmatprep.mubr.f32.mxu0 0.0
        %2475 = vmatmul.mubr.f32.gmra.mxu0 %v2403
        %v2476 = vpop.f32.mrf.mxu0
        %v2477 = vadd.f32 %v2397, %v2476
        %v2478 = vpop.f32.mrf.mxu0
        %2479 = vdwg.mxu0
        %v2480 = vmul.f32 %v2472, 1.702
        %v2481 = vmul.f32 %v2477, 1.702
        %v2482 = vxor.u32 %v2480, 2147483648
        %v2483 = vxor.u32 %v2481, 2147483648
        %v2484 = vmul.f32 %v2482, 1.442695
        %v2485 = vpow.pop %v2484
        %v2486 = vmul.f32 %v2483, 1.442695
        %v2487 = vpow.pop %v2486
        %v2488 = vadd.f32 %v2485, 1.0
        %v2489 = vadd.f32 %v2487, 1.0
        %v2490 = vrcp.pop %v2488
        %v2491 = vmul.f32 1.0, %v2490
        %v2492 = vrcp.pop %v2489
        %v2493 = vmul.f32 1.0, %v2492
        %v2494 = vmul.f32 %v2472, %v2491
        %v2495 = vmul.f32 %v2477, %v2493
        %v2496 = vld [vmem:[%s730] sm:$0xff]
        %v2497 = vld [vmem:[%s730 + $0x8] sm:$0xff]
        %v2498 = vld [vmem:[%s730 + $0x10] sm:$0xff]
        %v2499 = vld [vmem:[%s730 + $0x18] sm:$0xff]
        %v2500 = vld [vmem:[%s730 + $0x20] sm:$0xff]
        %v2501 = vld [vmem:[%s730 + $0x28] sm:$0xff]
        %v2502 = vld [vmem:[%s730 + $0x30] sm:$0xff]
        %v2503 = vld [vmem:[%s730 + $0x38] sm:$0xff]
        %v2504 = vld [vmem:[%s730 + $0x40] sm:$0xff]
        %v2505 = vld [vmem:[%s730 + $0x48] sm:$0xff]
        %v2506 = vld [vmem:[%s730 + $0x50] sm:$0xff]
        %v2507 = vld [vmem:[%s730 + $0x58] sm:$0xff]
        %v2508 = vld [vmem:[%s730 + $0x60] sm:$0xff]
        %v2509 = vld [vmem:[%s730 + $0x68] sm:$0xff]
        %v2510 = vld [vmem:[%s730 + $0x70] sm:$0xff]
        %v2511 = vld [vmem:[%s730 + $0x78] sm:$0xff]
        %2512 = vmatprep.subr.mxu0 0.0
        %2513 = vmatpush1.msra.mxu0 %v2511
        %2514 = vmatprep.subr.mxu0 0.0
        %2515 = vmatpush1.msra.mxu0 %v2510
        %2516 = vmatprep.subr.mxu0 0.0
        %2517 = vmatpush1.msra.mxu0 %v2509
        %2518 = vmatprep.subr.mxu0 0.0
        %2519 = vmatpush1.msra.mxu0 %v2508
        %2520 = vmatprep.subr.mxu0 0.0
        %2521 = vmatpush1.msra.mxu0 %v2507
        %2522 = vmatprep.subr.mxu0 0.0
        %2523 = vmatpush1.msra.mxu0 %v2506
        %2524 = vmatprep.subr.mxu0 0.0
        %2525 = vmatpush1.msra.mxu0 %v2505
        %2526 = vmatprep.subr.mxu0 0.0
        %2527 = vmatpush1.msra.mxu0 %v2504
        %2528 = vmatprep.subr.mxu0 0.0
        %2529 = vmatpush1.msra.mxu0 %v2503
        %2530 = vmatprep.subr.mxu0 0.0
        %2531 = vmatpush1.msra.mxu0 %v2502
        %2532 = vmatprep.subr.mxu0 0.0
        %2533 = vmatpush1.msra.mxu0 %v2501
        %2534 = vmatprep.subr.mxu0 0.0
        %2535 = vmatpush1.msra.mxu0 %v2500
        %2536 = vmatprep.subr.mxu0 0.0
        %2537 = vmatpush1.msra.mxu0 %v2499
        %2538 = vmatprep.subr.mxu0 0.0
        %2539 = vmatpush1.msra.mxu0 %v2498
        %2540 = vmatprep.subr.mxu0 0.0
        %2541 = vmatpush1.msra.mxu0 %v2497
        %2542 = vmatprep.subr.mxu0 0.0
        %2543 = vmatpush1.msra.mxu0 %v2496
        %2544 = vmatprep.subr.mxu0 0.0
        %2545 = vmatpush2.msra.mxu0 0.0
        %2546 = vmatprep.subr.mxu0 0.0
        %2547 = vmatpush2.msra.mxu0 0.0
        %2548 = vmatprep.subr.mxu0 0.0
        %2549 = vmatpush2.msra.mxu0 0.0
        %2550 = vmatprep.subr.mxu0 0.0
        %2551 = vmatpush2.msra.mxu0 0.0
        %2552 = vmatprep.subr.mxu0 0.0
        %2553 = vmatpush2.msra.mxu0 0.0
        %2554 = vmatprep.subr.mxu0 0.0
        %2555 = vmatpush2.msra.mxu0 0.0
        %2556 = vmatprep.subr.mxu0 0.0
        %2557 = vmatpush2.msra.mxu0 0.0
        %2558 = vmatprep.subr.mxu0 0.0
        %2559 = vmatpush2.msra.mxu0 0.0
        %2560 = vmatprep.subr.mxu0 0.0
        %2561 = vmatpush2.msra.mxu0 0.0
        %2562 = vmatprep.subr.mxu0 0.0
        %2563 = vmatpush2.msra.mxu0 0.0
        %2564 = vmatprep.subr.mxu0 0.0
        %2565 = vmatpush2.msra.mxu0 0.0
        %2566 = vmatprep.subr.mxu0 0.0
        %2567 = vmatpush2.msra.mxu0 0.0
        %2568 = vmatprep.subr.mxu0 0.0
        %2569 = vmatpush2.msra.mxu0 0.0
        %2570 = vmatprep.subr.mxu0 0.0
        %2571 = vmatpush2.msra.mxu0 0.0
        %2572 = vmatprep.subr.mxu0 0.0
        %2573 = vmatpush2.msra.mxu0 0.0
        %2574 = vmatprep.subr.mxu0 0.0
        %2575 = vmatpush2.msra.mxu0 0.0
        %2576 = vmatprep.mubr.f32.mxu0 0.0
        %2577 = vmatmul.mubr.f32.gmra.mxu0 %v2494
        %v2578 = vpop.f32.mrf.mxu0
        %v2579 = vadd.f32 0.0, %v2578
        %v2580 = vpop.f32.mrf.mxu0
        %2581 = vmatprep.mubr.f32.mxu0 0.0
        %2582 = vmatmul.mubr.f32.gmra.mxu0 %v2495
        %v2583 = vpop.f32.mrf.mxu0
        %v2584 = vadd.f32 0.0, %v2583
        %v2585 = vpop.f32.mrf.mxu0
        %2586 = vdwg.mxu0
        %v2587 = vadd.f32 %v2342, %v2579
        %v2588 = vadd.f32 %v2343, %v2584
        %v2589 = vld [vmem:[%s733] sm:$0x1]
        %v2591 = vlaneseq
        %v2592 = vshrl.u32 %v2591, 7
        %v2593 = vsub.s32 0, %v2592
        %v2594 = vrot.slane %v2589, %v2593
        %v2596 = vadd.f32 %v2587, %v2594
        %v2597 = vadd.f32 %v2588, %v2594
        %2598 = vst.msk [vmem:[#allocation2] sm:$0xff] %vm751, %v2596
        %2599 = vst.msk [vmem:[#allocation2 + $0x8] sm:$0xff] %vm751, %v2597
        %p2600 = scmp.eq.s32.totalorder %s30, 1
        // Predicated region
        $region97: #{tpu_custom_call.1} parent=91 // pred_check
          %p2601 = pneg %p2600
        $region98: #{tpu_custom_call.1} parent=91 // pred_check_branch
          %2603 = sbr.rel (%p2601) target = $region100
        $region99: #{tpu_custom_call.1} parent=91 // pred_region
          %v2604 = vld [vmem:[%s15] sm:$0x1]
          %v2605 = vld [vmem:[%s16] sm:$0x1]
          %v2606 = vsel %vm751, %v2596, 0.0
          %2607 = vadd.xlane.f32.xlu0 %v2606
          %v2608 = vpop.xlane.xlu0 %2607
          %v2609 = vsel %vm751, %v2597, 0.0
          %2610 = vadd.xlane.f32.xlu0 %v2609
          %v2611 = vpop.xlane.xlu0 %2610
          %v2612 = vmul.f32 %v2608, %v758
          %v2613 = vmul.f32 %v2611, %v758
          %v2614 = vsub.f32 %v2596, %v2612
          %v2615 = vsub.f32 %v2597, %v2613
          %v2616 = vmul.f32 %v2614, %v2614
          %v2617 = vmul.f32 %v2615, %v2615
          %v2618 = vsel %vm751, %v2616, 0.0
          %2619 = vadd.xlane.f32.xlu0 %v2618
          %v2620 = vpop.xlane.xlu0 %2619
          %v2621 = vsel %vm751, %v2617, 0.0
          %2622 = vadd.xlane.f32.xlu0 %v2621
          %v2623 = vpop.xlane.xlu0 %2622
          %v2624 = vmul.f32 %v2620, %v758
          %v2625 = vmul.f32 %v2623, %v758
          %v2626 = vadd.f32 %v2624, 1e-05
          %v2627 = vadd.f32 %v2625, 1e-05
          %v2628 = vrsqrt.pop %v2626
          %v2629 = vrsqrt.pop %v2627
          %v2630 = vmul.f32 %v2614, %v2628
          %v2631 = vmul.f32 %v2615, %v2629
          %v2633 = vlaneseq
          %v2634 = vshrl.u32 %v2633, 7
          %v2635 = vsub.s32 0, %v2634
          %v2636 = vrot.slane %v2604, %v2635
          %v2638 = vmul.f32 %v2630, %v2636
          %v2639 = vmul.f32 %v2631, %v2636
          %v2641 = vlaneseq
          %v2642 = vshrl.u32 %v2641, 7
          %v2643 = vsub.s32 0, %v2642
          %v2644 = vrot.slane %v2605, %v2643
          %v2646 = vadd.f32 %v2638, %v2644
          %v2647 = vadd.f32 %v2639, %v2644
          %v2648 = vld [vmem:[%s2] sm:$0x3]
          %v2650 = vsel %vm1569, %v2648, 0
          %2652 = vmatprep.subr.mxu0 0.0
          %2653 = vmatpush1.msra.mxu0 0.0
          %2654 = vmatprep.subr.mxu0 0.0
          %2655 = vmatpush1.msra.mxu0 0.0
          %2656 = vmatprep.subr.mxu0 0.0
          %2657 = vmatpush1.msra.mxu0 0.0
          %2658 = vmatprep.subr.mxu0 0.0
          %2659 = vmatpush1.msra.mxu0 0.0
          %2660 = vmatprep.subr.mxu0 0.0
          %2661 = vmatpush1.msra.mxu0 0.0
          %2662 = vmatprep.subr.mxu0 0.0
          %2663 = vmatpush1.msra.mxu0 0.0
          %2664 = vmatprep.subr.mxu0 0.0
          %2665 = vmatpush1.msra.mxu0 0.0
          %2666 = vmatprep.subr.mxu0 0.0
          %2667 = vmatpush1.msra.mxu0 0.0
          %2668 = vmatprep.subr.mxu0 0.0
          %2669 = vmatpush1.msra.mxu0 0.0
          %2670 = vmatprep.subr.mxu0 0.0
          %2671 = vmatpush1.msra.mxu0 0.0
          %2672 = vmatprep.subr.mxu0 0.0
          %2673 = vmatpush1.msra.mxu0 0.0
          %2674 = vmatprep.subr.mxu0 0.0
          %2675 = vmatpush1.msra.mxu0 0.0
          %2676 = vmatprep.subr.mxu0 0.0
          %2677 = vmatpush1.msra.mxu0 0.0
          %2678 = vmatprep.subr.mxu0 0.0
          %2679 = vmatpush1.msra.mxu0 0.0
          %2680 = vmatprep.subr.mxu0 0.0
          %2681 = vmatpush1.msra.mxu0 %v2647
          %2682 = vmatprep.subr.mxu0 0.0
          %2683 = vmatpush1.msra.mxu0 %v2646
          %2684 = vmatprep.subr.mxu0 0.0
          %2685 = vmatpush2.msra.mxu0 0.0
          %2686 = vmatprep.subr.mxu0 0.0
          %2687 = vmatpush2.msra.mxu0 0.0
          %2688 = vmatprep.subr.mxu0 0.0
          %2689 = vmatpush2.msra.mxu0 0.0
          %2690 = vmatprep.subr.mxu0 0.0
          %2691 = vmatpush2.msra.mxu0 0.0
          %2692 = vmatprep.subr.mxu0 0.0
          %2693 = vmatpush2.msra.mxu0 0.0
          %2694 = vmatprep.subr.mxu0 0.0
          %2695 = vmatpush2.msra.mxu0 0.0
          %2696 = vmatprep.subr.mxu0 0.0
          %2697 = vmatpush2.msra.mxu0 0.0
          %2698 = vmatprep.subr.mxu0 0.0
          %2699 = vmatpush2.msra.mxu0 0.0
          %2700 = vmatprep.subr.mxu0 0.0
          %2701 = vmatpush2.msra.mxu0 0.0
          %2702 = vmatprep.subr.mxu0 0.0
          %2703 = vmatpush2.msra.mxu0 0.0
          %2704 = vmatprep.subr.mxu0 0.0
          %2705 = vmatpush2.msra.mxu0 0.0
          %2706 = vmatprep.subr.mxu0 0.0
          %2707 = vmatpush2.msra.mxu0 0.0
          %2708 = vmatprep.subr.mxu0 0.0
          %2709 = vmatpush2.msra.mxu0 0.0
          %2710 = vmatprep.subr.mxu0 0.0
          %2711 = vmatpush2.msra.mxu0 0.0
          %2712 = vmatprep.subr.mxu0 0.0
          %2713 = vmatpush2.msra.mxu0 0.0
          %2714 = vmatprep.subr.mxu0 0.0
          %2715 = vmatpush2.msra.mxu0 0.0
          %2716 = vmatprep.mubr.f32.mxu0 0.0
          %2717 = vmatmul.mubr.f32.gmra.mxu0 %v2650
          %v2718 = vpop.f32.mrf.mxu0
          %v2719 = vadd.f32 0.0, %v2718
          %v2720 = vpop.f32.mrf.mxu0
          %2721 = vdwg.mxu0
          %v2722 = vld [vmem:[%s17] sm:$0xff]
          %v2723 = vld [vmem:[%s17 + $0x8] sm:$0xff]
          %v2724 = vld [vmem:[%s17 + $0x10] sm:$0xff]
          %v2725 = vld [vmem:[%s17 + $0x18] sm:$0xff]
          %v2727 = vsel %vm751, %v2719, 0
          %2729 = vmatprep.subr.mxu0 0.0
          %2730 = vmatpush1.msra.mxu0 0.0
          %2731 = vmatprep.subr.mxu0 0.0
          %2732 = vmatpush1.msra.mxu0 0.0
          %2733 = vmatprep.subr.mxu0 0.0
          %2734 = vmatpush1.msra.mxu0 0.0
          %2735 = vmatprep.subr.mxu0 0.0
          %2736 = vmatpush1.msra.mxu0 0.0
          %2737 = vmatprep.subr.mxu0 0.0
          %2738 = vmatpush1.msra.mxu0 0.0
          %2739 = vmatprep.subr.mxu0 0.0
          %2740 = vmatpush1.msra.mxu0 0.0
          %2741 = vmatprep.subr.mxu0 0.0
          %2742 = vmatpush1.msra.mxu0 0.0
          %2743 = vmatprep.subr.mxu0 0.0
          %2744 = vmatpush1.msra.mxu0 0.0
          %2745 = vmatprep.subr.mxu0 0.0
          %2746 = vmatpush1.msra.mxu0 0.0
          %2747 = vmatprep.subr.mxu0 0.0
          %2748 = vmatpush1.msra.mxu0 0.0
          %2749 = vmatprep.subr.mxu0 0.0
          %2750 = vmatpush1.msra.mxu0 0.0
          %2751 = vmatprep.subr.mxu0 0.0
          %2752 = vmatpush1.msra.mxu0 0.0
          %2753 = vmatprep.subr.mxu0 0.0
          %2754 = vmatpush1.msra.mxu0 %v2725
          %2755 = vmatprep.subr.mxu0 0.0
          %2756 = vmatpush1.msra.mxu0 %v2724
          %2757 = vmatprep.subr.mxu0 0.0
          %2758 = vmatpush1.msra.mxu0 %v2723
          %2759 = vmatprep.subr.mxu0 0.0
          %2760 = vmatpush1.msra.mxu0 %v2722
          %2761 = vmatprep.subr.mxu0 0.0
          %2762 = vmatpush2.msra.mxu0 0.0
          %2763 = vmatprep.subr.mxu0 0.0
          %2764 = vmatpush2.msra.mxu0 0.0
          %2765 = vmatprep.subr.mxu0 0.0
          %2766 = vmatpush2.msra.mxu0 0.0
          %2767 = vmatprep.subr.mxu0 0.0
          %2768 = vmatpush2.msra.mxu0 0.0
          %2769 = vmatprep.subr.mxu0 0.0
          %2770 = vmatpush2.msra.mxu0 0.0
          %2771 = vmatprep.subr.mxu0 0.0
          %2772 = vmatpush2.msra.mxu0 0.0
          %2773 = vmatprep.subr.mxu0 0.0
          %2774 = vmatpush2.msra.mxu0 0.0
          %2775 = vmatprep.subr.mxu0 0.0
          %2776 = vmatpush2.msra.mxu0 0.0
          %2777 = vmatprep.subr.mxu0 0.0
          %2778 = vmatpush2.msra.mxu0 0.0
          %2779 = vmatprep.subr.mxu0 0.0
          %2780 = vmatpush2.msra.mxu0 0.0
          %2781 = vmatprep.subr.mxu0 0.0
          %2782 = vmatpush2.msra.mxu0 0.0
          %2783 = vmatprep.subr.mxu0 0.0
          %2784 = vmatpush2.msra.mxu0 0.0
          %2785 = vmatprep.subr.mxu0 0.0
          %2786 = vmatpush2.msra.mxu0 0.0
          %2787 = vmatprep.subr.mxu0 0.0
          %2788 = vmatpush2.msra.mxu0 0.0
          %2789 = vmatprep.subr.mxu0 0.0
          %2790 = vmatpush2.msra.mxu0 0.0
          %2791 = vmatprep.subr.mxu0 0.0
          %2792 = vmatpush2.msra.mxu0 0.0
          %2793 = vmatprep.mubr.f32.mxu0 0.0
          %2794 = vmatmul.mubr.f32.gmra.mxu0 %v2727
          %v2795 = vpop.f32.mrf.mxu0
          %v2796 = vadd.f32 0.0, %v2795
          %v2797 = vpop.f32.mrf.mxu0
          %2798 = vdwg.mxu0
          %vm2799 = vcmask 254976
          %2800 = vst.msk [vmem:[#allocation3] sm:$0x3] %vm2799, %v2796
        $region100: #{tpu_custom_call.1} parent=91 // pred_fallthru
          _
        // Predicated region
        $region101: #{tpu_custom_call.1} parent=91 // pred_check
          %p2801 = pneg %p481
        $region102: #{tpu_custom_call.1} parent=91 // pred_check_branch
          %2803 = sbr.rel (%p2801) target = $region104
        $region103: #{tpu_custom_call.1} parent=91 // pred_region
          %s2805 = ssub.s32 32, 32
          %2806 = vsyncadd [#allocation4], %s2805
          %s2808 = sshll.u32 [#allocation3], 4
          %s2809 = int_to_ptr.vmem [resolvable:$true] %s2808
          %2811 = dma.vmem_to_hbm [thread:$0]  %s2809, 32, %s18, [#allocation4]
        $region104: #{tpu_custom_call.1} parent=91 // pred_fallthru
          _
        // Predicated region
        $region105: #{tpu_custom_call.1} parent=91 // pred_check
          %p2812 = pneg %p481
        $region106: #{tpu_custom_call.1} parent=91 // pred_check_branch
          %2814 = sbr.rel (%p2812) target = $region108
        $region107: #{tpu_custom_call.1} parent=91 // pred_region
          %2815 = dma.done [#allocation4], 32
        $region108: #{tpu_custom_call.1} parent=91 // pred_fallthru
          _
      $region92: #{tpu_custom_call.1} parent=5 // pred_fallthru
        _
      %p2816 = scmp.le.s32.totalorder 2, %s25
      // Predicated region
      $region109: #{tpu_custom_call.1} parent=5 // pred_check
        %p2817 = pneg %p2816
      $region110: #{tpu_custom_call.1} parent=5 // pred_check_branch
        %2819 = sbr.rel (%p2817) target = $region112
      $region111: #{tpu_custom_call.1} parent=5 // pred_region
        %s2820 = ssub.s32 %s25, 2
      $region112: #{tpu_custom_call.1} parent=5 // pred_fallthru
        _
    $region6: #{tpu_custom_call.1} parent=1 // loop_footer
      %s29 = sadd.s32 1, %s25
    $region7: #{tpu_custom_call.1} parent=1 // loop_footer_branch
      %24 = sbr.rel target = $region3
    $region8: #{tpu_custom_call.1} parent=1 // loop_exit
      _
    %2821 = vsyncpa [#allocation4], 1
    %s2822 = scalar_lea.sflag [#allocation4], 1
    %2823 = vsyncpa %s2822, 1

</llo_original>
